<compile_context>
chip_gen: v6e
topology: v6e:2x2x1
jax: 0.10.0
libtpu: 0.0.40
codegen_flags: <defaults>
</compile_context>

<pallas_src>
import functools

import numpy as np
import jax
import jax.numpy as jnp
from jax import lax
from jax.experimental import pallas as pl
from jax.experimental.pallas import tpu as pltpu

DEPTH = 3
IN_CH = 1
N_FEATS = IN_CH * 4 ** DEPTH      # 64 channels after pixel-unshuffle by 8
REDUCTION = 16                    # CALayer reduction (64 -> 4 -> 64)
N_RESGROUPS = 5                   # Interpolation_pred(5, 12, 64)
N_RESBLOCKS = 12
NEG_SLOPE = 0.2                   # LeakyReLU(0.2)


# ------------------------------ in-kernel conv ------------------------------

def _conv3x3(x_pc, masks, w, b, hh, ww):
    """3x3 conv (stride 1, zero pad 1) on a flat (P, Cin) f32 tile via im2col.

    x_pc : (P, Cin) f32 value, rows in row-major (i*ww + j) spatial order.
    masks: (P, 9) f32 value of precomputed boundary masks, tap t = 3*dy + dx.
    w    : (9*Cin, Cout) bf16 value; row t*Cin + ci = PyTorch weight[co, ci, dy, dx].
    b    : (1, Cout) f32 value.
    Returns (P, Cout) f32.
    """
    p, _ = x_pc.shape
    cols = []
    for dy in range(3):
        for dx in range(3):
            t = 3 * dy + dx
            s = (dy - 1) * ww + (dx - 1)            # static row shift
            if s == 0:
                cols.append(x_pc)                   # centre tap, no mask
            else:
                xr = pltpu.roll(x_pc, (-s) % p, axis=0)   # xr[q] = x[(q+s)%p]
                cols.append(xr * masks[:, t:t + 1])
    patches = jnp.concatenate(cols, axis=-1).astype(jnp.bfloat16)  # (P, 9*Cin)
    return jnp.dot(patches, w, preferred_element_type=jnp.float32) + b


# --------------------------- fused interpolation kernel ---------------------

def _interp_kernel(xcat_ref, mask_ref, hw_ref, hb_ref,
                   w1_ref, b1_ref, w2_ref, b2_ref,
                   ca1_ref, cb1_ref, ca2_ref, cb2_ref,
                   gw_ref, gb_ref, tw_ref, tb_ref,
                   o_ref, gin, xhead, *, hh, ww):
    g = pl.program_id(1)
    ng = pl.num_programs(1)
    masks = mask_ref[...]                                  # (P, 9) f32, hoisted

    # Head conv once per sample: x0 = conv3x3(concat(features)).
    @pl.when(g == 0)
    def _head():
        x0 = _conv3x3(xcat_ref[...].astype(jnp.float32), masks,
                      hw_ref[...], hb_ref[...], hh, ww)
        xhead[...] = x0          # long-skip operand
        gin[...] = x0            # first group's input

    # ---- 12 RCABs of this residual group, weights indexed dynamically -------
    def rcab(r, h):
        y = _conv3x3(h, masks, w1_ref[r], b1_ref[r], hh, ww)
        y = jnp.where(y >= 0, y, NEG_SLOPE * y)            # LeakyReLU(0.2)
        y = _conv3x3(y, masks, w2_ref[r], b2_ref[r], hh, ww)
        # Channel attention on VPU/XLU (M=1 matmuls are wasteful on the MXU).
        pool = jnp.mean(y, axis=0, keepdims=True)                        # (1, C)
        z = jnp.sum(ca1_ref[r] * pool, axis=1, keepdims=True) + cb1_ref[r]   # (Cr, 1)
        z = jnp.maximum(z, 0.0)
        s = jnp.sum(ca2_ref[r] * z, axis=0, keepdims=True) + cb2_ref[r]      # (1, C)
        s = jax.nn.sigmoid(s)
        return y * s + h

    h = lax.fori_loop(0, N_RESBLOCKS, rcab, gin[...])

    # End of the residual group: group conv + group skip.
    gout = _conv3x3(h, masks, gw_ref[...], gb_ref[...], hh, ww) + gin[...]
    gin[...] = gout

    # After the last group: long skip + tail conv, write the output block.
    @pl.when(g == ng - 1)
    def _tail():
        res = gout + xhead[...]
        o_ref[...] = _conv3x3(res, masks, tw_ref[...], tb_ref[...],
                              hh, ww).astype(o_ref.dtype)


def interpolation_pallas(xcat, masks, params, hh, ww):
    """xcat: (N, P, 2C) bf16 concatenated unshuffled features. Returns (N, P, C) f32."""
    n, p, cin2 = xcat.shape
    c = N_FEATS
    cr = c // REDUCTION
    R = N_RESBLOCKS

    kernel = functools.partial(_interp_kernel, hh=hh, ww=ww)
    return pl.pallas_call(
        kernel,
        out_shape=jax.ShapeDtypeStruct((n, p, c), jnp.float32),
        grid=(n, N_RESGROUPS),
        in_specs=[
            pl.BlockSpec((None, p, cin2), lambda i, g: (i, 0, 0)),        # xcat (bf16)
            pl.BlockSpec((p, 9), lambda i, g: (0, 0)),                    # tap masks
            pl.BlockSpec((9 * cin2, c), lambda i, g: (0, 0)),             # head_w
            pl.BlockSpec((1, c), lambda i, g: (0, 0)),                    # head_b
            pl.BlockSpec((None, R, 9 * c, c), lambda i, g: (g, 0, 0, 0)), # w1
            pl.BlockSpec((None, R, 1, c), lambda i, g: (g, 0, 0, 0)),     # b1
            pl.BlockSpec((None, R, 9 * c, c), lambda i, g: (g, 0, 0, 0)), # w2
            pl.BlockSpec((None, R, 1, c), lambda i, g: (g, 0, 0, 0)),     # b2
            pl.BlockSpec((None, R, cr, c), lambda i, g: (g, 0, 0, 0)),    # ca1
            pl.BlockSpec((None, R, cr, 1), lambda i, g: (g, 0, 0, 0)),    # cb1
            pl.BlockSpec((None, R, cr, c), lambda i, g: (g, 0, 0, 0)),    # ca2
            pl.BlockSpec((None, R, 1, c), lambda i, g: (g, 0, 0, 0)),     # cb2
            pl.BlockSpec((None, 9 * c, c), lambda i, g: (g, 0, 0)),       # gw
            pl.BlockSpec((None, 1, c), lambda i, g: (g, 0, 0)),           # gb
            pl.BlockSpec((9 * c, c), lambda i, g: (0, 0)),                # tail_w
            pl.BlockSpec((1, c), lambda i, g: (0, 0)),                    # tail_b
        ],
        out_specs=pl.BlockSpec((None, p, c), lambda i, g: (i, 0, 0)),
        scratch_shapes=[pltpu.VMEM((p, c), jnp.float32),                  # gin
                        pltpu.VMEM((p, c), jnp.float32)],                 # xhead
        compiler_params=pltpu.CompilerParams(
            dimension_semantics=("parallel", "arbitrary"),
            vmem_limit_bytes=48 * 1024 * 1024),
    )(xcat, masks,
      params["head_w"], params["head_b"],
      params["w1"], params["b1"], params["w2"], params["b2"],
      params["ca1"], params["cb1"], params["ca2"], params["cb2"],
      params["gw"], params["gb"],
      params["tail_w"], params["tail_b"])


# --------------------------- model building blocks --------------------------

def sub_mean(x_nchw):
    m = jnp.mean(x_nchw, axis=(2, 3), keepdims=True)
    return x_nchw - m, m


def pixel_unshuffle(x, r):  # PixelShuffle(1 / r) in the reference code
    n, c, h, w = x.shape
    x = x.reshape(n, c, h // r, r, w // r, r)
    x = x.transpose(0, 1, 3, 5, 2, 4)
    return x.reshape(n, c * r * r, h // r, w // r)


def pixel_shuffle(x, r):    # PixelShuffle(r)
    n, c, h, w = x.shape
    oc = c // (r * r)
    x = x.reshape(n, oc, r, r, h, w)
    x = x.transpose(0, 1, 4, 2, 5, 3)
    return x.reshape(n, oc, h * r, w * r)


def make_tap_masks(hh, ww):
    """(P, 9) f32 boundary masks for the 9 taps of a zero-padded 3x3 conv."""
    p = hh * ww
    row = np.arange(p).reshape(p, 1)
    col = row % ww
    cols = []
    for dy in range(3):
        for dx in range(3):
            oy, ox = dy - 1, dx - 1
            s = oy * ww + ox
            valid = ((col + ox >= 0) & (col + ox < ww) &
                     (row + s >= 0) & (row + s < p))
            cols.append(valid.astype(np.float32))
    return jnp.asarray(np.concatenate(cols, axis=1))


def cain_pred_forward(frames, params):
    """frames: sequence of NCHW (N, 1, H, W) f32 frames (torch `x` iterable)."""
    r = 2 ** DEPTH
    x_list, m_list = [], []
    for xi in frames:
        xi, mi = sub_mean(xi)
        x_list.append(xi)
        m_list.append(mi)
    feats_nhwc = [jnp.transpose(pixel_unshuffle(xi, r), (0, 2, 3, 1)) for xi in x_list]
    n, hh, ww, c = feats_nhwc[0].shape
    xcat = jnp.concatenate(feats_nhwc, axis=-1).reshape(n, hh * ww, c * len(feats_nhwc))
    xcat = xcat.astype(jnp.bfloat16)                          # half the HBM DMA
    masks = make_tap_masks(hh, ww)
    feat = interpolation_pallas(xcat, masks, params, hh, ww)  # (N, P, 64) f32
    feats = jnp.transpose(feat.reshape(n, hh, ww, N_FEATS), (0, 3, 1, 2))  # NCHW
    out = pixel_shuffle(feats, r)                             # (N, 1, H, W)
    mi = sum(m_list) / len(m_list)
    out = out + mi
    return out, feats


# ------------------------------- parameters --------------------------------
# Conv weights are pre-flattened for the fused im2col matmul:
#   w_flat[t*Cin + ci, co] = torch_w[co, ci, dy, dx],  t = 3*dy + dx.
# Channel-attention weights:
#   ca1[j, i] = torch conv_du[0].weight[j, i]   (shape (Cr, C))
#   ca2[i, j] = torch conv_du[2].weight[j, i]   (stored transposed, shape (Cr, C))

def init_params(key):
    c = N_FEATS
    cr = c // REDUCTION
    G, R = N_RESGROUPS, N_RESBLOCKS
    ks = jax.random.split(key, 14)

    def w(k, shape, scale, dtype=jnp.float32):
        return (jax.random.normal(k, shape, jnp.float32) * scale).astype(dtype)

    bf = jnp.bfloat16
    return {
        "head_w": w(ks[0], (9 * 2 * c, c), 0.02, bf),
        "head_b": w(ks[1], (1, c), 0.01),
        "tail_w": w(ks[2], (9 * c, c), 0.02, bf),
        "tail_b": w(ks[3], (1, c), 0.01),
        "w1": w(ks[4], (G, R, 9 * c, c), 0.02, bf),
        "b1": w(ks[5], (G, R, 1, c), 0.01),
        "w2": w(ks[6], (G, R, 9 * c, c), 0.02, bf),
        "b2": w(ks[7], (G, R, 1, c), 0.01),
        "ca1": w(ks[8], (G, R, cr, c), 0.05),
        "cb1": w(ks[9], (G, R, cr, 1), 0.01),
        "ca2": w(ks[10], (G, R, cr, c), 0.05),
        "cb2": w(ks[11], (G, R, 1, c), 0.01),
        "gw": w(ks[12], (G, 9 * c, c), 0.02, bf),
        "gb": w(ks[13], (G, 1, c), 0.01),
    }


# ---------------------------------- main ------------------------------------

if __name__ == "__main__":
    key = jax.random.PRNGKey(0)
    kp, k0, k1 = jax.random.split(key, 3)
    params = init_params(kp)

    N, C, H, W = 2, 1, 64, 64          # two input frames, NCHW, H,W divisible by 2**DEPTH
    x0 = jax.random.normal(k0, (N, C, H, W), jnp.float32)
    x1 = jax.random.normal(k1, (N, C, H, W), jnp.float32)

    fwd = jax.jit(lambda a, b: cain_pred_forward((a, b), params))
    out, feats = fwd(x0, x1)
    jax.block_until_ready((out, feats))

    assert out.shape == (N, C, H, W)
    assert feats.shape == (N, N_FEATS, H // 2 ** DEPTH, W // 2 ** DEPTH)
    assert bool(jnp.all(jnp.isfinite(out))) and bool(jnp.all(jnp.isfinite(feats)))
    print("KERNEL_OK")
</pallas_src>

<mosaic_0001>
module attributes {stable_mosaic.version = 11 : i64} {
  func.func @_interp_kernel(%arg0: i32, %arg1: i32, %arg2: memref<1x64x128xbf16, #tpu.memory_space<vmem>>, %arg3: memref<64x9xf32, #tpu.memory_space<vmem>>, %arg4: memref<1152x64xbf16, #tpu.memory_space<vmem>>, %arg5: memref<1x64xf32, #tpu.memory_space<vmem>>, %arg6: memref<1x12x576x64xbf16, #tpu.memory_space<vmem>>, %arg7: memref<1x12x1x64xf32, #tpu.memory_space<vmem>>, %arg8: memref<1x12x576x64xbf16, #tpu.memory_space<vmem>>, %arg9: memref<1x12x1x64xf32, #tpu.memory_space<vmem>>, %arg10: memref<1x12x4x64xf32, #tpu.memory_space<vmem>>, %arg11: memref<1x12x4x1xf32, #tpu.memory_space<vmem>>, %arg12: memref<1x12x4x64xf32, #tpu.memory_space<vmem>>, %arg13: memref<1x12x1x64xf32, #tpu.memory_space<vmem>>, %arg14: memref<1x576x64xbf16, #tpu.memory_space<vmem>>, %arg15: memref<1x1x64xf32, #tpu.memory_space<vmem>>, %arg16: memref<576x64xbf16, #tpu.memory_space<vmem>>, %arg17: memref<1x64xf32, #tpu.memory_space<vmem>>, %arg18: memref<1x64x64xf32, #tpu.memory_space<vmem>>, %arg19: memref<64x64xf32, #tpu.memory_space<vmem>>, %arg20: memref<64x64xf32, #tpu.memory_space<vmem>>) attributes {dimension_semantics = [#tpu.dimension_semantics<parallel>, #tpu.dimension_semantics<arbitrary>], iteration_bounds = array<i64: 2, 5>, scalar_prefetch = 0 : i64, scratch_operands = 2 : i64, tpu.core_type = #tpu.core_type<tc>, window_params = [{transform_indices = @transform_0, window_bounds = array<i64: 1, 64, 128>}, {pipeline_mode = #tpu.pipeline_mode<synchronous>, transform_indices = @transform_1, window_bounds = array<i64: 64, 9>}, {pipeline_mode = #tpu.pipeline_mode<synchronous>, transform_indices = @transform_2, window_bounds = array<i64: 1152, 64>}, {pipeline_mode = #tpu.pipeline_mode<synchronous>, transform_indices = @transform_3, window_bounds = array<i64: 1, 64>}, {transform_indices = @transform_4, window_bounds = array<i64: 1, 12, 576, 64>}, {transform_indices = @transform_5, window_bounds = array<i64: 1, 12, 1, 64>}, {transform_indices = @transform_6, window_bounds = array<i64: 1, 12, 576, 64>}, {transform_indices = @transform_7, window_bounds = array<i64: 1, 12, 1, 64>}, {transform_indices = @transform_8, window_bounds = array<i64: 1, 12, 4, 64>}, {transform_indices = @transform_9, window_bounds = array<i64: 1, 12, 4, 1>}, {transform_indices = @transform_10, window_bounds = array<i64: 1, 12, 4, 64>}, {transform_indices = @transform_11, window_bounds = array<i64: 1, 12, 1, 64>}, {transform_indices = @transform_12, window_bounds = array<i64: 1, 576, 64>}, {transform_indices = @transform_13, window_bounds = array<i64: 1, 1, 64>}, {pipeline_mode = #tpu.pipeline_mode<synchronous>, transform_indices = @transform_14, window_bounds = array<i64: 576, 64>}, {pipeline_mode = #tpu.pipeline_mode<synchronous>, transform_indices = @transform_15, window_bounds = array<i64: 1, 64>}, {transform_indices = @transform_16, window_bounds = array<i64: 1, 64, 64>}]} {
    %c0 = arith.constant 0 : index
    %c0_0 = arith.constant 0 : index
    %0 = vector.load %arg3[%c0, %c0_0] : memref<64x9xf32, #tpu.memory_space<vmem>>, vector<64x9xf32>
    %c0_i32 = arith.constant 0 : i32
    %1 = arith.cmpi eq, %arg1, %c0_i32 : i32
    %2 = arith.extui %1 : i1 to i32
    %c0_i32_1 = arith.constant 0 : i32
    %3 = arith.cmpi ne, %2, %c0_i32_1 : i32
    scf.if %3 {
      %c0_18 = arith.constant 0 : index
      %c0_19 = arith.constant 0 : index
      %c0_20 = arith.constant 0 : index
      %54 = vector.load %arg2[%c0_18, %c0_19, %c0_20] : memref<1x64x128xbf16, #tpu.memory_space<vmem>>, vector<1x64x128xbf16>
      %55 = vector.shape_cast %54 : vector<1x64x128xbf16> to vector<64x128xbf16>
      %56 = arith.extf %55 : vector<64x128xbf16> to vector<64x128xf32>
      %c0_21 = arith.constant 0 : index
      %c0_22 = arith.constant 0 : index
      %57 = vector.load %arg4[%c0_21, %c0_22] : memref<1152x64xbf16, #tpu.memory_space<vmem>>, vector<1152x64xbf16>
      %c0_23 = arith.constant 0 : index
      %c0_24 = arith.constant 0 : index
      %58 = vector.load %arg5[%c0_23, %c0_24] : memref<1x64xf32, #tpu.memory_space<vmem>>, vector<1x64xf32>
      %c9_i32_25 = arith.constant 9 : i32
      %59 = tpu.dynamic_rotate %56 by %c9_i32_25 dim 0 : vector<64x128xf32>, i32 -> vector<64x128xf32>
      %60 = vector.extract_strided_slice %0 {offsets = [0, 0], sizes = [64, 1], strides = [1, 1]} : vector<64x9xf32> to vector<64x1xf32>
      %61 = vector.broadcast %60 : vector<64x1xf32> to vector<64x128xf32>
      %62 = arith.mulf %59, %61 : vector<64x128xf32>
      %c8_i32_26 = arith.constant 8 : i32
      %63 = tpu.dynamic_rotate %56 by %c8_i32_26 dim 0 : vector<64x128xf32>, i32 -> vector<64x128xf32>
      %64 = vector.extract_strided_slice %0 {offsets = [0, 1], sizes = [64, 1], strides = [1, 1]} : vector<64x9xf32> to vector<64x1xf32>
      %65 = vector.broadcast %64 : vector<64x1xf32> to vector<64x128xf32>
      %66 = arith.mulf %63, %65 : vector<64x128xf32>
      %c7_i32_27 = arith.constant 7 : i32
      %67 = tpu.dynamic_rotate %56 by %c7_i32_27 dim 0 : vector<64x128xf32>, i32 -> vector<64x128xf32>
      %68 = vector.extract_strided_slice %0 {offsets = [0, 2], sizes = [64, 1], strides = [1, 1]} : vector<64x9xf32> to vector<64x1xf32>
      %69 = vector.broadcast %68 : vector<64x1xf32> to vector<64x128xf32>
      %70 = arith.mulf %67, %69 : vector<64x128xf32>
      %c1_i32_28 = arith.constant 1 : i32
      %71 = tpu.dynamic_rotate %56 by %c1_i32_28 dim 0 : vector<64x128xf32>, i32 -> vector<64x128xf32>
      %72 = vector.extract_strided_slice %0 {offsets = [0, 3], sizes = [64, 1], strides = [1, 1]} : vector<64x9xf32> to vector<64x1xf32>
      %73 = vector.broadcast %72 : vector<64x1xf32> to vector<64x128xf32>
      %74 = arith.mulf %71, %73 : vector<64x128xf32>
      %c63_i32_29 = arith.constant 63 : i32
      %75 = tpu.dynamic_rotate %56 by %c63_i32_29 dim 0 : vector<64x128xf32>, i32 -> vector<64x128xf32>
      %76 = vector.extract_strided_slice %0 {offsets = [0, 5], sizes = [64, 1], strides = [1, 1]} : vector<64x9xf32> to vector<64x1xf32>
      %77 = vector.broadcast %76 : vector<64x1xf32> to vector<64x128xf32>
      %78 = arith.mulf %75, %77 : vector<64x128xf32>
      %c57_i32_30 = arith.constant 57 : i32
      %79 = tpu.dynamic_rotate %56 by %c57_i32_30 dim 0 : vector<64x128xf32>, i32 -> vector<64x128xf32>
      %80 = vector.extract_strided_slice %0 {offsets = [0, 6], sizes = [64, 1], strides = [1, 1]} : vector<64x9xf32> to vector<64x1xf32>
      %81 = vector.broadcast %80 : vector<64x1xf32> to vector<64x128xf32>
      %82 = arith.mulf %79, %81 : vector<64x128xf32>
      %c56_i32_31 = arith.constant 56 : i32
      %83 = tpu.dynamic_rotate %56 by %c56_i32_31 dim 0 : vector<64x128xf32>, i32 -> vector<64x128xf32>
      %84 = vector.extract_strided_slice %0 {offsets = [0, 7], sizes = [64, 1], strides = [1, 1]} : vector<64x9xf32> to vector<64x1xf32>
      %85 = vector.broadcast %84 : vector<64x1xf32> to vector<64x128xf32>
      %86 = arith.mulf %83, %85 : vector<64x128xf32>
      %c55_i32_32 = arith.constant 55 : i32
      %87 = tpu.dynamic_rotate %56 by %c55_i32_32 dim 0 : vector<64x128xf32>, i32 -> vector<64x128xf32>
      %88 = vector.extract_strided_slice %0 {offsets = [0, 8], sizes = [64, 1], strides = [1, 1]} : vector<64x9xf32> to vector<64x1xf32>
      %89 = vector.broadcast %88 : vector<64x1xf32> to vector<64x128xf32>
      %90 = arith.mulf %87, %89 : vector<64x128xf32>
      %91 = tpu.concatenate %62, %66, %70, %74, %56, %78, %82, %86, %90 in 1 : vector<64x128xf32>, vector<64x128xf32>, vector<64x128xf32>, vector<64x128xf32>, vector<64x128xf32>, vector<64x128xf32>, vector<64x128xf32>, vector<64x128xf32>, vector<64x128xf32> -> vector<64x1152xf32>
      %92 = arith.truncf %91 : vector<64x1152xf32> to vector<64x1152xbf16>
      %cst_33 = arith.constant dense<0.000000e+00> : vector<64x64xf32>
      %93 = tpu.matmul %92, %57, %cst_33 {dimension_numbers = #tpu.dot_dimension_numbers<[1], [0], [0], [1], [0, 0, 1, 1], [], []>} : vector<64x1152xbf16>, vector<1152x64xbf16>, vector<64x64xf32> -> vector<64x64xf32>
      %94 = vector.broadcast %58 : vector<1x64xf32> to vector<64x64xf32>
      %95 = arith.addf %93, %94 : vector<64x64xf32>
      %c0_34 = arith.constant 0 : index
      %c0_35 = arith.constant 0 : index
      %96 = vector.load %arg20[%c0_34, %c0_35] : memref<64x64xf32, #tpu.memory_space<vmem>>, vector<64x64xf32>
      tpu.vector_store %arg20[%c0_34, %c0_35], %95 {strides = array<i32>} : memref<64x64xf32, #tpu.memory_space<vmem>>, vector<64x64xf32>,
      %c0_36 = arith.constant 0 : index
      %c0_37 = arith.constant 0 : index
      %97 = vector.load %arg19[%c0_36, %c0_37] : memref<64x64xf32, #tpu.memory_space<vmem>>, vector<64x64xf32>
      tpu.vector_store %arg19[%c0_36, %c0_37], %95 {strides = array<i32>} : memref<64x64xf32, #tpu.memory_space<vmem>>, vector<64x64xf32>,
    } else {
    }
    %c0_2 = arith.constant 0 : index
    %c0_3 = arith.constant 0 : index
    %4 = vector.load %arg19[%c0_2, %c0_3] : memref<64x64xf32, #tpu.memory_space<vmem>>, vector<64x64xf32>
    %c0_i32_4 = arith.constant 0 : i32
    %c12_i32 = arith.constant 12 : i32
    %5 = arith.addi %c0_i32_4, %c12_i32 : i32
    %c1_i32 = arith.constant 1 : i32
    %6 = scf.for %arg21 = %c0_i32_4 to %5 step %c1_i32 iter_args(%arg22 = %4) -> (vector<64x64xf32>)  : i32 {
      %c0_18 = arith.constant 0 : index
      %54 = arith.index_cast %arg21 : i32 to index
      %c0_19 = arith.constant 0 : index
      %c0_20 = arith.constant 0 : index
      %55 = vector.load %arg6[%c0_18, %54, %c0_19, %c0_20] : memref<1x12x576x64xbf16, #tpu.memory_space<vmem>>, vector<1x1x576x64xbf16>
      %56 = vector.shape_cast %55 : vector<1x1x576x64xbf16> to vector<576x64xbf16>
      %c0_21 = arith.constant 0 : index
      %57 = arith.index_cast %arg21 : i32 to index
      %c0_22 = arith.constant 0 : index
      %c0_23 = arith.constant 0 : index
      %58 = vector.load %arg7[%c0_21, %57, %c0_22, %c0_23] : memref<1x12x1x64xf32, #tpu.memory_space<vmem>>, vector<1x1x1x64xf32>
      %59 = vector.shape_cast %58 : vector<1x1x1x64xf32> to vector<1x64xf32>
      %c9_i32_24 = arith.constant 9 : i32
      %60 = tpu.dynamic_rotate %arg22 by %c9_i32_24 dim 0 : vector<64x64xf32>, i32 -> vector<64x64xf32>
      %61 = vector.extract_strided_slice %0 {offsets = [0, 0], sizes = [64, 1], strides = [1, 1]} : vector<64x9xf32> to vector<64x1xf32>
      %62 = vector.broadcast %61 : vector<64x1xf32> to vector<64x64xf32>
      %63 = arith.mulf %60, %62 : vector<64x64xf32>
      %c8_i32_25 = arith.constant 8 : i32
      %64 = tpu.dynamic_rotate %arg22 by %c8_i32_25 dim 0 : vector<64x64xf32>, i32 -> vector<64x64xf32>
      %65 = vector.extract_strided_slice %0 {offsets = [0, 1], sizes = [64, 1], strides = [1, 1]} : vector<64x9xf32> to vector<64x1xf32>
      %66 = vector.broadcast %65 : vector<64x1xf32> to vector<64x64xf32>
      %67 = arith.mulf %64, %66 : vector<64x64xf32>
      %c7_i32_26 = arith.constant 7 : i32
      %68 = tpu.dynamic_rotate %arg22 by %c7_i32_26 dim 0 : vector<64x64xf32>, i32 -> vector<64x64xf32>
      %69 = vector.extract_strided_slice %0 {offsets = [0, 2], sizes = [64, 1], strides = [1, 1]} : vector<64x9xf32> to vector<64x1xf32>
      %70 = vector.broadcast %69 : vector<64x1xf32> to vector<64x64xf32>
      %71 = arith.mulf %68, %70 : vector<64x64xf32>
      %c1_i32_27 = arith.constant 1 : i32
      %72 = tpu.dynamic_rotate %arg22 by %c1_i32_27 dim 0 : vector<64x64xf32>, i32 -> vector<64x64xf32>
      %73 = vector.extract_strided_slice %0 {offsets = [0, 3], sizes = [64, 1], strides = [1, 1]} : vector<64x9xf32> to vector<64x1xf32>
      %74 = vector.broadcast %73 : vector<64x1xf32> to vector<64x64xf32>
      %75 = arith.mulf %72, %74 : vector<64x64xf32>
      %c63_i32_28 = arith.constant 63 : i32
      %76 = tpu.dynamic_rotate %arg22 by %c63_i32_28 dim 0 : vector<64x64xf32>, i32 -> vector<64x64xf32>
      %77 = vector.extract_strided_slice %0 {offsets = [0, 5], sizes = [64, 1], strides = [1, 1]} : vector<64x9xf32> to vector<64x1xf32>
      %78 = vector.broadcast %77 : vector<64x1xf32> to vector<64x64xf32>
      %79 = arith.mulf %76, %78 : vector<64x64xf32>
      %c57_i32_29 = arith.constant 57 : i32
      %80 = tpu.dynamic_rotate %arg22 by %c57_i32_29 dim 0 : vector<64x64xf32>, i32 -> vector<64x64xf32>
      %81 = vector.extract_strided_slice %0 {offsets = [0, 6], sizes = [64, 1], strides = [1, 1]} : vector<64x9xf32> to vector<64x1xf32>
      %82 = vector.broadcast %81 : vector<64x1xf32> to vector<64x64xf32>
      %83 = arith.mulf %80, %82 : vector<64x64xf32>
      %c56_i32_30 = arith.constant 56 : i32
      %84 = tpu.dynamic_rotate %arg22 by %c56_i32_30 dim 0 : vector<64x64xf32>, i32 -> vector<64x64xf32>
      %85 = vector.extract_strided_slice %0 {offsets = [0, 7], sizes = [64, 1], strides = [1, 1]} : vector<64x9xf32> to vector<64x1xf32>
      %86 = vector.broadcast %85 : vector<64x1xf32> to vector<64x64xf32>
      %87 = arith.mulf %84, %86 : vector<64x64xf32>
      %c55_i32_31 = arith.constant 55 : i32
      %88 = tpu.dynamic_rotate %arg22 by %c55_i32_31 dim 0 : vector<64x64xf32>, i32 -> vector<64x64xf32>
      %89 = vector.extract_strided_slice %0 {offsets = [0, 8], sizes = [64, 1], strides = [1, 1]} : vector<64x9xf32> to vector<64x1xf32>
      %90 = vector.broadcast %89 : vector<64x1xf32> to vector<64x64xf32>
      %91 = arith.mulf %88, %90 : vector<64x64xf32>
      %92 = tpu.concatenate %63, %67, %71, %75, %arg22, %79, %83, %87, %91 in 1 : vector<64x64xf32>, vector<64x64xf32>, vector<64x64xf32>, vector<64x64xf32>, vector<64x64xf32>, vector<64x64xf32>, vector<64x64xf32>, vector<64x64xf32>, vector<64x64xf32> -> vector<64x576xf32>
      %93 = arith.truncf %92 : vector<64x576xf32> to vector<64x576xbf16>
      %cst_32 = arith.constant dense<0.000000e+00> : vector<64x64xf32>
      %94 = tpu.matmul %93, %56, %cst_32 {dimension_numbers = #tpu.dot_dimension_numbers<[1], [0], [0], [1], [0, 0, 1, 1], [], []>} : vector<64x576xbf16>, vector<576x64xbf16>, vector<64x64xf32> -> vector<64x64xf32>
      %95 = vector.broadcast %59 : vector<1x64xf32> to vector<64x64xf32>
      %96 = arith.addf %94, %95 : vector<64x64xf32>
      %cst_33 = arith.constant 0.000000e+00 : f32
      %97 = vector.broadcast %cst_33 : f32 to vector<64x64xf32>
      %98 = arith.cmpf oge, %96, %97 : vector<64x64xf32>
      %cst_34 = arith.constant 2.000000e-01 : f32
      %99 = vector.broadcast %cst_34 : f32 to vector<64x64xf32>
      %100 = arith.mulf %99, %96 : vector<64x64xf32>
      %101 = arith.select %98, %96, %100 : vector<64x64xi1>, vector<64x64xf32>
      %c0_35 = arith.constant 0 : index
      %102 = arith.index_cast %arg21 : i32 to index
      %c0_36 = arith.constant 0 : index
      %c0_37 = arith.constant 0 : index
      %103 = vector.load %arg8[%c0_35, %102, %c0_36, %c0_37] : memref<1x12x576x64xbf16, #tpu.memory_space<vmem>>, vector<1x1x576x64xbf16>
      %104 = vector.shape_cast %103 : vector<1x1x576x64xbf16> to vector<576x64xbf16>
      %c0_38 = arith.constant 0 : index
      %105 = arith.index_cast %arg21 : i32 to index
      %c0_39 = arith.constant 0 : index
      %c0_40 = arith.constant 0 : index
      %106 = vector.load %arg9[%c0_38, %105, %c0_39, %c0_40] : memref<1x12x1x64xf32, #tpu.memory_space<vmem>>, vector<1x1x1x64xf32>
      %107 = vector.shape_cast %106 : vector<1x1x1x64xf32> to vector<1x64xf32>
      %c9_i32_41 = arith.constant 9 : i32
      %108 = tpu.dynamic_rotate %101 by %c9_i32_41 dim 0 : vector<64x64xf32>, i32 -> vector<64x64xf32>
      %109 = vector.extract_strided_slice %0 {offsets = [0, 0], sizes = [64, 1], strides = [1, 1]} : vector<64x9xf32> to vector<64x1xf32>
      %110 = vector.broadcast %109 : vector<64x1xf32> to vector<64x64xf32>
      %111 = arith.mulf %108, %110 : vector<64x64xf32>
      %c8_i32_42 = arith.constant 8 : i32
      %112 = tpu.dynamic_rotate %101 by %c8_i32_42 dim 0 : vector<64x64xf32>, i32 -> vector<64x64xf32>
      %113 = vector.extract_strided_slice %0 {offsets = [0, 1], sizes = [64, 1], strides = [1, 1]} : vector<64x9xf32> to vector<64x1xf32>
      %114 = vector.broadcast %113 : vector<64x1xf32> to vector<64x64xf32>
      %115 = arith.mulf %112, %114 : vector<64x64xf32>
      %c7_i32_43 = arith.constant 7 : i32
      %116 = tpu.dynamic_rotate %101 by %c7_i32_43 dim 0 : vector<64x64xf32>, i32 -> vector<64x64xf32>
      %117 = vector.extract_strided_slice %0 {offsets = [0, 2], sizes = [64, 1], strides = [1, 1]} : vector<64x9xf32> to vector<64x1xf32>
      %118 = vector.broadcast %117 : vector<64x1xf32> to vector<64x64xf32>
      %119 = arith.mulf %116, %118 : vector<64x64xf32>
      %c1_i32_44 = arith.constant 1 : i32
      %120 = tpu.dynamic_rotate %101 by %c1_i32_44 dim 0 : vector<64x64xf32>, i32 -> vector<64x64xf32>
      %121 = vector.extract_strided_slice %0 {offsets = [0, 3], sizes = [64, 1], strides = [1, 1]} : vector<64x9xf32> to vector<64x1xf32>
      %122 = vector.broadcast %121 : vector<64x1xf32> to vector<64x64xf32>
      %123 = arith.mulf %120, %122 : vector<64x64xf32>
      %c63_i32_45 = arith.constant 63 : i32
      %124 = tpu.dynamic_rotate %101 by %c63_i32_45 dim 0 : vector<64x64xf32>, i32 -> vector<64x64xf32>
      %125 = vector.extract_strided_slice %0 {offsets = [0, 5], sizes = [64, 1], strides = [1, 1]} : vector<64x9xf32> to vector<64x1xf32>
      %126 = vector.broadcast %125 : vector<64x1xf32> to vector<64x64xf32>
      %127 = arith.mulf %124, %126 : vector<64x64xf32>
      %c57_i32_46 = arith.constant 57 : i32
      %128 = tpu.dynamic_rotate %101 by %c57_i32_46 dim 0 : vector<64x64xf32>, i32 -> vector<64x64xf32>
      %129 = vector.extract_strided_slice %0 {offsets = [0, 6], sizes = [64, 1], strides = [1, 1]} : vector<64x9xf32> to vector<64x1xf32>
      %130 = vector.broadcast %129 : vector<64x1xf32> to vector<64x64xf32>
      %131 = arith.mulf %128, %130 : vector<64x64xf32>
      %c56_i32_47 = arith.constant 56 : i32
      %132 = tpu.dynamic_rotate %101 by %c56_i32_47 dim 0 : vector<64x64xf32>, i32 -> vector<64x64xf32>
      %133 = vector.extract_strided_slice %0 {offsets = [0, 7], sizes = [64, 1], strides = [1, 1]} : vector<64x9xf32> to vector<64x1xf32>
      %134 = vector.broadcast %133 : vector<64x1xf32> to vector<64x64xf32>
      %135 = arith.mulf %132, %134 : vector<64x64xf32>
      %c55_i32_48 = arith.constant 55 : i32
      %136 = tpu.dynamic_rotate %101 by %c55_i32_48 dim 0 : vector<64x64xf32>, i32 -> vector<64x64xf32>
      %137 = vector.extract_strided_slice %0 {offsets = [0, 8], sizes = [64, 1], strides = [1, 1]} : vector<64x9xf32> to vector<64x1xf32>
      %138 = vector.broadcast %137 : vector<64x1xf32> to vector<64x64xf32>
      %139 = arith.mulf %136, %138 : vector<64x64xf32>
      %140 = tpu.concatenate %111, %115, %119, %123, %101, %127, %131, %135, %139 in 1 : vector<64x64xf32>, vector<64x64xf32>, vector<64x64xf32>, vector<64x64xf32>, vector<64x64xf32>, vector<64x64xf32>, vector<64x64xf32>, vector<64x64xf32>, vector<64x64xf32> -> vector<64x576xf32>
      %141 = arith.truncf %140 : vector<64x576xf32> to vector<64x576xbf16>
      %cst_49 = arith.constant dense<0.000000e+00> : vector<64x64xf32>
      %142 = tpu.matmul %141, %104, %cst_49 {dimension_numbers = #tpu.dot_dimension_numbers<[1], [0], [0], [1], [0, 0, 1, 1], [], []>} : vector<64x576xbf16>, vector<576x64xbf16>, vector<64x64xf32> -> vector<64x64xf32>
      %143 = vector.broadcast %107 : vector<1x64xf32> to vector<64x64xf32>
      %144 = arith.addf %142, %143 : vector<64x64xf32>
      %cst_50 = arith.constant dense<0.000000e+00> : vector<64xf32>
      %145 = vector.multi_reduction <add>, %144, %cst_50 [0] : vector<64x64xf32> to vector<64xf32>
      %146 = vector.shape_cast %145 : vector<64xf32> to vector<1x64xf32>
      %cst_51 = arith.constant 6.400000e+01 : f32
      %147 = vector.broadcast %cst_51 : f32 to vector<1x64xf32>
      %148 = arith.divf %146, %147 : vector<1x64xf32>
      %c0_52 = arith.constant 0 : index
      %149 = arith.index_cast %arg21 : i32 to index
      %c0_53 = arith.constant 0 : index
      %c0_54 = arith.constant 0 : index
      %150 = vector.load %arg10[%c0_52, %149, %c0_53, %c0_54] : memref<1x12x4x64xf32, #tpu.memory_space<vmem>>, vector<1x1x4x64xf32>
      %151 = vector.shape_cast %150 : vector<1x1x4x64xf32> to vector<4x64xf32>
      %152 = vector.broadcast %148 : vector<1x64xf32> to vector<4x64xf32>
      %153 = arith.mulf %151, %152 : vector<4x64xf32>
      %cst_55 = arith.constant dense<0.000000e+00> : vector<4xf32>
      %154 = vector.multi_reduction <add>, %153, %cst_55 [1] : vector<4x64xf32> to vector<4xf32>
      %155 = vector.shape_cast %154 : vector<4xf32> to vector<4x1xf32>
      %c0_56 = arith.constant 0 : index
      %156 = arith.index_cast %arg21 : i32 to index
      %c0_57 = arith.constant 0 : index
      %c0_58 = arith.constant 0 : index
      %157 = vector.load %arg11[%c0_56, %156, %c0_57, %c0_58] : memref<1x12x4x1xf32, #tpu.memory_space<vmem>>, vector<1x1x4x1xf32>
      %158 = vector.shape_cast %157 : vector<1x1x4x1xf32> to vector<4x1xf32>
      %159 = arith.addf %155, %158 : vector<4x1xf32>
      %cst_59 = arith.constant 0.000000e+00 : f32
      %160 = vector.broadcast %cst_59 : f32 to vector<4x1xf32>
      %161 = arith.maximumf %159, %160 : vector<4x1xf32>
      %c0_60 = arith.constant 0 : index
      %162 = arith.index_cast %arg21 : i32 to index
      %c0_61 = arith.constant 0 : index
      %c0_62 = arith.constant 0 : index
      %163 = vector.load %arg12[%c0_60, %162, %c0_61, %c0_62] : memref<1x12x4x64xf32, #tpu.memory_space<vmem>>, vector<1x1x4x64xf32>
      %164 = vector.shape_cast %163 : vector<1x1x4x64xf32> to vector<4x64xf32>
      %165 = vector.broadcast %161 : vector<4x1xf32> to vector<4x64xf32>
      %166 = arith.mulf %164, %165 : vector<4x64xf32>
      %cst_63 = arith.constant dense<0.000000e+00> : vector<64xf32>
      %167 = vector.multi_reduction <add>, %166, %cst_63 [0] : vector<4x64xf32> to vector<64xf32>
      %168 = vector.shape_cast %167 : vector<64xf32> to vector<1x64xf32>
      %c0_64 = arith.constant 0 : index
      %169 = arith.index_cast %arg21 : i32 to index
      %c0_65 = arith.constant 0 : index
      %c0_66 = arith.constant 0 : index
      %170 = vector.load %arg13[%c0_64, %169, %c0_65, %c0_66] : memref<1x12x1x64xf32, #tpu.memory_space<vmem>>, vector<1x1x1x64xf32>
      %171 = vector.shape_cast %170 : vector<1x1x1x64xf32> to vector<1x64xf32>
      %172 = arith.addf %168, %171 : vector<1x64xf32>
      %173 = arith.negf %172 : vector<1x64xf32>
      %174 = math.exp %173 : vector<1x64xf32>
      %cst_67 = arith.constant 1.000000e+00 : f32
      %175 = vector.broadcast %cst_67 : f32 to vector<1x64xf32>
      %176 = arith.addf %175, %174 : vector<1x64xf32>
      %177 = arith.divf %175, %176 : vector<1x64xf32>
      %178 = vector.broadcast %177 : vector<1x64xf32> to vector<64x64xf32>
      %179 = arith.mulf %144, %178 : vector<64x64xf32>
      %180 = arith.addf %179, %arg22 : vector<64x64xf32>
      scf.yield %180 : vector<64x64xf32>
    }
    %c12_i32_5 = arith.constant 12 : i32
    %c0_6 = arith.constant 0 : index
    %c0_7 = arith.constant 0 : index
    %c0_8 = arith.constant 0 : index
    %7 = vector.load %arg14[%c0_6, %c0_7, %c0_8] : memref<1x576x64xbf16, #tpu.memory_space<vmem>>, vector<1x576x64xbf16>
    %8 = vector.shape_cast %7 : vector<1x576x64xbf16> to vector<576x64xbf16>
    %c0_9 = arith.constant 0 : index
    %c0_10 = arith.constant 0 : index
    %c0_11 = arith.constant 0 : index
    %9 = vector.load %arg15[%c0_9, %c0_10, %c0_11] : memref<1x1x64xf32, #tpu.memory_space<vmem>>, vector<1x1x64xf32>
    %10 = vector.shape_cast %9 : vector<1x1x64xf32> to vector<1x64xf32>
    %c9_i32 = arith.constant 9 : i32
    %11 = tpu.dynamic_rotate %6 by %c9_i32 dim 0 : vector<64x64xf32>, i32 -> vector<64x64xf32>
    %12 = vector.extract_strided_slice %0 {offsets = [0, 0], sizes = [64, 1], strides = [1, 1]} : vector<64x9xf32> to vector<64x1xf32>
    %13 = vector.broadcast %12 : vector<64x1xf32> to vector<64x64xf32>
    %14 = arith.mulf %11, %13 : vector<64x64xf32>
    %c8_i32 = arith.constant 8 : i32
    %15 = tpu.dynamic_rotate %6 by %c8_i32 dim 0 : vector<64x64xf32>, i32 -> vector<64x64xf32>
    %16 = vector.extract_strided_slice %0 {offsets = [0, 1], sizes = [64, 1], strides = [1, 1]} : vector<64x9xf32> to vector<64x1xf32>
    %17 = vector.broadcast %16 : vector<64x1xf32> to vector<64x64xf32>
    %18 = arith.mulf %15, %17 : vector<64x64xf32>
    %c7_i32 = arith.constant 7 : i32
    %19 = tpu.dynamic_rotate %6 by %c7_i32 dim 0 : vector<64x64xf32>, i32 -> vector<64x64xf32>
    %20 = vector.extract_strided_slice %0 {offsets = [0, 2], sizes = [64, 1], strides = [1, 1]} : vector<64x9xf32> to vector<64x1xf32>
    %21 = vector.broadcast %20 : vector<64x1xf32> to vector<64x64xf32>
    %22 = arith.mulf %19, %21 : vector<64x64xf32>
    %c1_i32_12 = arith.constant 1 : i32
    %23 = tpu.dynamic_rotate %6 by %c1_i32_12 dim 0 : vector<64x64xf32>, i32 -> vector<64x64xf32>
    %24 = vector.extract_strided_slice %0 {offsets = [0, 3], sizes = [64, 1], strides = [1, 1]} : vector<64x9xf32> to vector<64x1xf32>
    %25 = vector.broadcast %24 : vector<64x1xf32> to vector<64x64xf32>
    %26 = arith.mulf %23, %25 : vector<64x64xf32>
    %c63_i32 = arith.constant 63 : i32
    %27 = tpu.dynamic_rotate %6 by %c63_i32 dim 0 : vector<64x64xf32>, i32 -> vector<64x64xf32>
    %28 = vector.extract_strided_slice %0 {offsets = [0, 5], sizes = [64, 1], strides = [1, 1]} : vector<64x9xf32> to vector<64x1xf32>
    %29 = vector.broadcast %28 : vector<64x1xf32> to vector<64x64xf32>
    %30 = arith.mulf %27, %29 : vector<64x64xf32>
    %c57_i32 = arith.constant 57 : i32
    %31 = tpu.dynamic_rotate %6 by %c57_i32 dim 0 : vector<64x64xf32>, i32 -> vector<64x64xf32>
    %32 = vector.extract_strided_slice %0 {offsets = [0, 6], sizes = [64, 1], strides = [1, 1]} : vector<64x9xf32> to vector<64x1xf32>
    %33 = vector.broadcast %32 : vector<64x1xf32> to vector<64x64xf32>
    %34 = arith.mulf %31, %33 : vector<64x64xf32>
    %c56_i32 = arith.constant 56 : i32
    %35 = tpu.dynamic_rotate %6 by %c56_i32 dim 0 : vector<64x64xf32>, i32 -> vector<64x64xf32>
    %36 = vector.extract_strided_slice %0 {offsets = [0, 7], sizes = [64, 1], strides = [1, 1]} : vector<64x9xf32> to vector<64x1xf32>
    %37 = vector.broadcast %36 : vector<64x1xf32> to vector<64x64xf32>
    %38 = arith.mulf %35, %37 : vector<64x64xf32>
    %c55_i32 = arith.constant 55 : i32
    %39 = tpu.dynamic_rotate %6 by %c55_i32 dim 0 : vector<64x64xf32>, i32 -> vector<64x64xf32>
    %40 = vector.extract_strided_slice %0 {offsets = [0, 8], sizes = [64, 1], strides = [1, 1]} : vector<64x9xf32> to vector<64x1xf32>
    %41 = vector.broadcast %40 : vector<64x1xf32> to vector<64x64xf32>
    %42 = arith.mulf %39, %41 : vector<64x64xf32>
    %43 = tpu.concatenate %14, %18, %22, %26, %6, %30, %34, %38, %42 in 1 : vector<64x64xf32>, vector<64x64xf32>, vector<64x64xf32>, vector<64x64xf32>, vector<64x64xf32>, vector<64x64xf32>, vector<64x64xf32>, vector<64x64xf32>, vector<64x64xf32> -> vector<64x576xf32>
    %44 = arith.truncf %43 : vector<64x576xf32> to vector<64x576xbf16>
    %cst = arith.constant dense<0.000000e+00> : vector<64x64xf32>
    %45 = tpu.matmul %44, %8, %cst {dimension_numbers = #tpu.dot_dimension_numbers<[1], [0], [0], [1], [0, 0, 1, 1], [], []>} : vector<64x576xbf16>, vector<576x64xbf16>, vector<64x64xf32> -> vector<64x64xf32>
    %46 = vector.broadcast %10 : vector<1x64xf32> to vector<64x64xf32>
    %47 = arith.addf %45, %46 : vector<64x64xf32>
    %c0_13 = arith.constant 0 : index
    %c0_14 = arith.constant 0 : index
    %48 = vector.load %arg19[%c0_13, %c0_14] : memref<64x64xf32, #tpu.memory_space<vmem>>, vector<64x64xf32>
    %49 = arith.addf %47, %48 : vector<64x64xf32>
    %c0_15 = arith.constant 0 : index
    %c0_16 = arith.constant 0 : index
    %50 = vector.load %arg19[%c0_15, %c0_16] : memref<64x64xf32, #tpu.memory_space<vmem>>, vector<64x64xf32>
    tpu.vector_store %arg19[%c0_15, %c0_16], %49 {strides = array<i32>} : memref<64x64xf32, #tpu.memory_space<vmem>>, vector<64x64xf32>,
    %c4_i32 = arith.constant 4 : i32
    %51 = arith.cmpi eq, %arg1, %c4_i32 : i32
    %52 = arith.extui %51 : i1 to i32
    %c0_i32_17 = arith.constant 0 : i32
    %53 = arith.cmpi ne, %52, %c0_i32_17 : i32
    scf.if %53 {
      %c0_18 = arith.constant 0 : index
      %c0_19 = arith.constant 0 : index
      %54 = vector.load %arg20[%c0_18, %c0_19] : memref<64x64xf32, #tpu.memory_space<vmem>>, vector<64x64xf32>
      %55 = arith.addf %49, %54 : vector<64x64xf32>
      %c0_20 = arith.constant 0 : index
      %c0_21 = arith.constant 0 : index
      %56 = vector.load %arg16[%c0_20, %c0_21] : memref<576x64xbf16, #tpu.memory_space<vmem>>, vector<576x64xbf16>
      %c0_22 = arith.constant 0 : index
      %c0_23 = arith.constant 0 : index
      %57 = vector.load %arg17[%c0_22, %c0_23] : memref<1x64xf32, #tpu.memory_space<vmem>>, vector<1x64xf32>
      %c9_i32_24 = arith.constant 9 : i32
      %58 = tpu.dynamic_rotate %55 by %c9_i32_24 dim 0 : vector<64x64xf32>, i32 -> vector<64x64xf32>
      %59 = vector.extract_strided_slice %0 {offsets = [0, 0], sizes = [64, 1], strides = [1, 1]} : vector<64x9xf32> to vector<64x1xf32>
      %60 = vector.broadcast %59 : vector<64x1xf32> to vector<64x64xf32>
      %61 = arith.mulf %58, %60 : vector<64x64xf32>
      %c8_i32_25 = arith.constant 8 : i32
      %62 = tpu.dynamic_rotate %55 by %c8_i32_25 dim 0 : vector<64x64xf32>, i32 -> vector<64x64xf32>
      %63 = vector.extract_strided_slice %0 {offsets = [0, 1], sizes = [64, 1], strides = [1, 1]} : vector<64x9xf32> to vector<64x1xf32>
      %64 = vector.broadcast %63 : vector<64x1xf32> to vector<64x64xf32>
      %65 = arith.mulf %62, %64 : vector<64x64xf32>
      %c7_i32_26 = arith.constant 7 : i32
      %66 = tpu.dynamic_rotate %55 by %c7_i32_26 dim 0 : vector<64x64xf32>, i32 -> vector<64x64xf32>
      %67 = vector.extract_strided_slice %0 {offsets = [0, 2], sizes = [64, 1], strides = [1, 1]} : vector<64x9xf32> to vector<64x1xf32>
      %68 = vector.broadcast %67 : vector<64x1xf32> to vector<64x64xf32>
      %69 = arith.mulf %66, %68 : vector<64x64xf32>
      %c1_i32_27 = arith.constant 1 : i32
      %70 = tpu.dynamic_rotate %55 by %c1_i32_27 dim 0 : vector<64x64xf32>, i32 -> vector<64x64xf32>
      %71 = vector.extract_strided_slice %0 {offsets = [0, 3], sizes = [64, 1], strides = [1, 1]} : vector<64x9xf32> to vector<64x1xf32>
      %72 = vector.broadcast %71 : vector<64x1xf32> to vector<64x64xf32>
      %73 = arith.mulf %70, %72 : vector<64x64xf32>
      %c63_i32_28 = arith.constant 63 : i32
      %74 = tpu.dynamic_rotate %55 by %c63_i32_28 dim 0 : vector<64x64xf32>, i32 -> vector<64x64xf32>
      %75 = vector.extract_strided_slice %0 {offsets = [0, 5], sizes = [64, 1], strides = [1, 1]} : vector<64x9xf32> to vector<64x1xf32>
      %76 = vector.broadcast %75 : vector<64x1xf32> to vector<64x64xf32>
      %77 = arith.mulf %74, %76 : vector<64x64xf32>
      %c57_i32_29 = arith.constant 57 : i32
      %78 = tpu.dynamic_rotate %55 by %c57_i32_29 dim 0 : vector<64x64xf32>, i32 -> vector<64x64xf32>
      %79 = vector.extract_strided_slice %0 {offsets = [0, 6], sizes = [64, 1], strides = [1, 1]} : vector<64x9xf32> to vector<64x1xf32>
      %80 = vector.broadcast %79 : vector<64x1xf32> to vector<64x64xf32>
      %81 = arith.mulf %78, %80 : vector<64x64xf32>
      %c56_i32_30 = arith.constant 56 : i32
      %82 = tpu.dynamic_rotate %55 by %c56_i32_30 dim 0 : vector<64x64xf32>, i32 -> vector<64x64xf32>
      %83 = vector.extract_strided_slice %0 {offsets = [0, 7], sizes = [64, 1], strides = [1, 1]} : vector<64x9xf32> to vector<64x1xf32>
      %84 = vector.broadcast %83 : vector<64x1xf32> to vector<64x64xf32>
      %85 = arith.mulf %82, %84 : vector<64x64xf32>
      %c55_i32_31 = arith.constant 55 : i32
      %86 = tpu.dynamic_rotate %55 by %c55_i32_31 dim 0 : vector<64x64xf32>, i32 -> vector<64x64xf32>
      %87 = vector.extract_strided_slice %0 {offsets = [0, 8], sizes = [64, 1], strides = [1, 1]} : vector<64x9xf32> to vector<64x1xf32>
      %88 = vector.broadcast %87 : vector<64x1xf32> to vector<64x64xf32>
      %89 = arith.mulf %86, %88 : vector<64x64xf32>
      %90 = tpu.concatenate %61, %65, %69, %73, %55, %77, %81, %85, %89 in 1 : vector<64x64xf32>, vector<64x64xf32>, vector<64x64xf32>, vector<64x64xf32>, vector<64x64xf32>, vector<64x64xf32>, vector<64x64xf32>, vector<64x64xf32>, vector<64x64xf32> -> vector<64x576xf32>
      %91 = arith.truncf %90 : vector<64x576xf32> to vector<64x576xbf16>
      %cst_32 = arith.constant dense<0.000000e+00> : vector<64x64xf32>
      %92 = tpu.matmul %91, %56, %cst_32 {dimension_numbers = #tpu.dot_dimension_numbers<[1], [0], [0], [1], [0, 0, 1, 1], [], []>} : vector<64x576xbf16>, vector<576x64xbf16>, vector<64x64xf32> -> vector<64x64xf32>
      %93 = vector.broadcast %57 : vector<1x64xf32> to vector<64x64xf32>
      %94 = arith.addf %92, %93 : vector<64x64xf32>
      %c0_33 = arith.constant 0 : index
      %c0_34 = arith.constant 0 : index
      %c0_35 = arith.constant 0 : index
      %95 = vector.load %arg18[%c0_33, %c0_34, %c0_35] : memref<1x64x64xf32, #tpu.memory_space<vmem>>, vector<1x64x64xf32>
      %96 = vector.shape_cast %95 : vector<1x64x64xf32> to vector<64x64xf32>
      %97 = vector.shape_cast %94 : vector<64x64xf32> to vector<1x64x64xf32>
      tpu.vector_store %arg18[%c0_33, %c0_34, %c0_35], %97 {strides = array<i32>} : memref<1x64x64xf32, #tpu.memory_space<vmem>>, vector<1x64x64xf32>,
    } else {
    }
    return
  }
  func.func @transform_0(%arg0: i32, %arg1: i32) -> (i32, i32, i32) {
    %c0_i32 = arith.constant 0 : i32
    %c0_i32_0 = arith.constant 0 : i32
    %c0_i32_1 = arith.constant 0 : i32
    return %arg0, %c0_i32, %c0_i32_0 : i32, i32, i32
  }
  func.func @transform_1(%arg0: i32, %arg1: i32) -> (i32, i32) {
    %c0_i32 = arith.constant 0 : i32
    %c0_i32_0 = arith.constant 0 : i32
    %c0_i32_1 = arith.constant 0 : i32
    return %c0_i32, %c0_i32_0 : i32, i32
  }
  func.func @transform_2(%arg0: i32, %arg1: i32) -> (i32, i32) {
    %c0_i32 = arith.constant 0 : i32
    %c0_i32_0 = arith.constant 0 : i32
    %c0_i32_1 = arith.constant 0 : i32
    return %c0_i32, %c0_i32_0 : i32, i32
  }
  func.func @transform_3(%arg0: i32, %arg1: i32) -> (i32, i32) {
    %c0_i32 = arith.constant 0 : i32
    %c0_i32_0 = arith.constant 0 : i32
    %c0_i32_1 = arith.constant 0 : i32
    return %c0_i32, %c0_i32_0 : i32, i32
  }
  func.func @transform_4(%arg0: i32, %arg1: i32) -> (i32, i32, i32, i32) {
    %c0_i32 = arith.constant 0 : i32
    %c0_i32_0 = arith.constant 0 : i32
    %c0_i32_1 = arith.constant 0 : i32
    %c0_i32_2 = arith.constant 0 : i32
    return %arg1, %c0_i32, %c0_i32_0, %c0_i32_1 : i32, i32, i32, i32
  }
  func.func @transform_5(%arg0: i32, %arg1: i32) -> (i32, i32, i32, i32) {
    %c0_i32 = arith.constant 0 : i32
    %c0_i32_0 = arith.constant 0 : i32
    %c0_i32_1 = arith.constant 0 : i32
    %c0_i32_2 = arith.constant 0 : i32
    return %arg1, %c0_i32, %c0_i32_0, %c0_i32_1 : i32, i32, i32, i32
  }
  func.func @transform_6(%arg0: i32, %arg1: i32) -> (i32, i32, i32, i32) {
    %c0_i32 = arith.constant 0 : i32
    %c0_i32_0 = arith.constant 0 : i32
    %c0_i32_1 = arith.constant 0 : i32
    %c0_i32_2 = arith.constant 0 : i32
    return %arg1, %c0_i32, %c0_i32_0, %c0_i32_1 : i32, i32, i32, i32
  }
  func.func @transform_7(%arg0: i32, %arg1: i32) -> (i32, i32, i32, i32) {
    %c0_i32 = arith.constant 0 : i32
    %c0_i32_0 = arith.constant 0 : i32
    %c0_i32_1 = arith.constant 0 : i32
    %c0_i32_2 = arith.constant 0 : i32
    return %arg1, %c0_i32, %c0_i32_0, %c0_i32_1 : i32, i32, i32, i32
  }
  func.func @transform_8(%arg0: i32, %arg1: i32) -> (i32, i32, i32, i32) {
    %c0_i32 = arith.constant 0 : i32
    %c0_i32_0 = arith.constant 0 : i32
    %c0_i32_1 = arith.constant 0 : i32
    %c0_i32_2 = arith.constant 0 : i32
    return %arg1, %c0_i32, %c0_i32_0, %c0_i32_1 : i32, i32, i32, i32
  }
  func.func @transform_9(%arg0: i32, %arg1: i32) -> (i32, i32, i32, i32) {
    %c0_i32 = arith.constant 0 : i32
    %c0_i32_0 = arith.constant 0 : i32
    %c0_i32_1 = arith.constant 0 : i32
    %c0_i32_2 = arith.constant 0 : i32
    return %arg1, %c0_i32, %c0_i32_0, %c0_i32_1 : i32, i32, i32, i32
  }
  func.func @transform_10(%arg0: i32, %arg1: i32) -> (i32, i32, i32, i32) {
    %c0_i32 = arith.constant 0 : i32
    %c0_i32_0 = arith.constant 0 : i32
    %c0_i32_1 = arith.constant 0 : i32
    %c0_i32_2 = arith.constant 0 : i32
    return %arg1, %c0_i32, %c0_i32_0, %c0_i32_1 : i32, i32, i32, i32
  }
  func.func @transform_11(%arg0: i32, %arg1: i32) -> (i32, i32, i32, i32) {
    %c0_i32 = arith.constant 0 : i32
    %c0_i32_0 = arith.constant 0 : i32
    %c0_i32_1 = arith.constant 0 : i32
    %c0_i32_2 = arith.constant 0 : i32
    return %arg1, %c0_i32, %c0_i32_0, %c0_i32_1 : i32, i32, i32, i32
  }
  func.func @transform_12(%arg0: i32, %arg1: i32) -> (i32, i32, i32) {
    %c0_i32 = arith.constant 0 : i32
    %c0_i32_0 = arith.constant 0 : i32
    %c0_i32_1 = arith.constant 0 : i32
    return %arg1, %c0_i32, %c0_i32_0 : i32, i32, i32
  }
  func.func @transform_13(%arg0: i32, %arg1: i32) -> (i32, i32, i32) {
    %c0_i32 = arith.constant 0 : i32
    %c0_i32_0 = arith.constant 0 : i32
    %c0_i32_1 = arith.constant 0 : i32
    return %arg1, %c0_i32, %c0_i32_0 : i32, i32, i32
  }
  func.func @transform_14(%arg0: i32, %arg1: i32) -> (i32, i32) {
    %c0_i32 = arith.constant 0 : i32
    %c0_i32_0 = arith.constant 0 : i32
    %c0_i32_1 = arith.constant 0 : i32
    return %c0_i32, %c0_i32_0 : i32, i32
  }
  func.func @transform_15(%arg0: i32, %arg1: i32) -> (i32, i32) {
    %c0_i32 = arith.constant 0 : i32
    %c0_i32_0 = arith.constant 0 : i32
    %c0_i32_1 = arith.constant 0 : i32
    return %c0_i32, %c0_i32_0 : i32, i32
  }
  func.func @transform_16(%arg0: i32, %arg1: i32) -> (i32, i32, i32) {
    %c0_i32 = arith.constant 0 : i32
    %c0_i32_0 = arith.constant 0 : i32
    %c0_i32_1 = arith.constant 0 : i32
    return %arg0, %c0_i32, %c0_i32_0 : i32, i32, i32
  }
}

</mosaic_0001>

<llo_original>
// kernel: _lambda_.1
$region0: #{_lambda_.1}
  #allocation0 [shape = 'u32[]', space=smem, size = 0x4, offset = 0x4, fixed_abs, tag = 'smem constant byte address 0x4 - core index']
  #allocation1 [shape = 'u32[144,128]{1,0:T(1,128)}', space=vmem, size = 0x12000, scoped, tag = 'internal scratch']
  #allocation2 [shape = 'f32[64,64]{1,0:T(8,128)}', space=vmem, size = 0x8000, scoped, tag = 'scratch operand']
  #allocation3 [shape = 'f32[64,64]{1,0:T(8,128)}', space=vmem, size = 0x8000, scoped, tag = 'scratch operand']
  %s0 = inlined_call_operand.vmem [shape: bf16[2,64,128], index: 0, kind: input, shape index: {}]
  %s1 = inlined_call_operand.hbm [shape: f32[64,9], index: 1, kind: input, shape index: {}]
  %s2 = inlined_call_operand.hbm [shape: bf16[1152,64], index: 2, kind: input, shape index: {}]
  %s3 = inlined_call_operand.hbm [shape: f32[1,64], index: 3, kind: input, shape index: {}]
  %s4 = inlined_call_operand.hbm [shape: bf16[5,12,576,64], index: 4, kind: input, shape index: {}]
  %s5 = inlined_call_operand.hbm [shape: f32[5,12,1,64], index: 5, kind: input, shape index: {}]
  %s6 = inlined_call_operand.hbm [shape: bf16[5,12,576,64], index: 6, kind: input, shape index: {}]
  %s7 = inlined_call_operand.hbm [shape: f32[5,12,1,64], index: 7, kind: input, shape index: {}]
  %s8 = inlined_call_operand.hbm [shape: f32[5,12,4,64], index: 8, kind: input, shape index: {}]
  %s9 = inlined_call_operand.hbm [shape: f32[5,12,4,1], index: 9, kind: input, shape index: {}]
  %s10 = inlined_call_operand.hbm [shape: f32[5,12,4,64], index: 10, kind: input, shape index: {}]
  %s11 = inlined_call_operand.hbm [shape: f32[5,12,1,64], index: 11, kind: input, shape index: {}]
  %s12 = inlined_call_operand.hbm [shape: bf16[5,576,64], index: 12, kind: input, shape index: {}]
  %s13 = inlined_call_operand.hbm [shape: f32[5,1,64], index: 13, kind: input, shape index: {}]
  %s14 = inlined_call_operand.hbm [shape: bf16[576,64], index: 14, kind: input, shape index: {}]
  %s15 = inlined_call_operand.hbm [shape: f32[1,64], index: 15, kind: input, shape index: {}]
  %s16 = inlined_call_operand.vmem [shape: f32[2,64,64], index: 16, kind: output, shape index: {}]
  %s17 = sld [smem:[#allocation0]]
  $region172: #{_lambda_.1} parent=0
    _
  %s19 = ssub.s32 1, %s17
  %s20 = scalar_select 0, %s19, %s17
  $region1: #{_lambda_.1} parent=0
    #allocation4 [shape = 'u8[32768]{0}', space=vmem, size = 0x8000, scoped, tag = 'input window, operand 1, single buffered']
    #allocation5 [shape = 's32[2]{0}', space=sflag, size = 0x8, scoped, tag = 'scoped memory for _lambda_.1']
    #allocation6 [shape = 'u8[294912]{0}', space=vmem, size = 0x48000, scoped, tag = 'input window, operand 2, single buffered']
    #allocation7 [shape = 's32[1]{0}', space=sflag, size = 0x4, scoped, tag = 'scoped memory for _lambda_.1']
    #allocation8 [shape = 'u8[512]{0}', space=vmem, size = 0x400, scoped, tag = 'input window, operand 3, single buffered']
    #allocation9 [shape = 'u8[3538944]{0}', space=vmem, size = 0x360000, scoped, tag = 'input window, operand 4']
    #allocation10 [shape = 's32[2]{0}', space=sflag, size = 0x8, scoped, tag = 'scoped memory for _lambda_.1']
    #allocation11 [shape = 'u8[12288]{0}', space=vmem, size = 0x3000, scoped, tag = 'input window, operand 5']
    #allocation12 [shape = 'u8[3538944]{0}', space=vmem, size = 0x360000, scoped, tag = 'input window, operand 6']
    #allocation13 [shape = 's32[2]{0}', space=sflag, size = 0x8, scoped, tag = 'scoped memory for _lambda_.1']
    #allocation14 [shape = 'u8[12288]{0}', space=vmem, size = 0x3000, scoped, tag = 'input window, operand 7']
    #allocation15 [shape = 'u8[49152]{0}', space=vmem, size = 0xc000, scoped, tag = 'input window, operand 8']
    #allocation16 [shape = 's32[2]{0}', space=sflag, size = 0x8, scoped, tag = 'scoped memory for _lambda_.1']
    #allocation17 [shape = 'u8[49152]{0}', space=vmem, size = 0xc000, scoped, tag = 'input window, operand 9']
    #allocation18 [shape = 'u8[49152]{0}', space=vmem, size = 0xc000, scoped, tag = 'input window, operand 10']
    #allocation19 [shape = 's32[2]{0}', space=sflag, size = 0x8, scoped, tag = 'scoped memory for _lambda_.1']
    #allocation20 [shape = 'u8[12288]{0}', space=vmem, size = 0x3000, scoped, tag = 'input window, operand 11']
    #allocation21 [shape = 'u8[294912]{0}', space=vmem, size = 0x48000, scoped, tag = 'input window, operand 12']
    #allocation22 [shape = 's32[2]{0}', space=sflag, size = 0x8, scoped, tag = 'scoped memory for _lambda_.1']
    #allocation23 [shape = 'u8[1024]{0}', space=vmem, size = 0x400, scoped, tag = 'input window, operand 13']
    #allocation24 [shape = 'u8[147456]{0}', space=vmem, size = 0x24000, scoped, tag = 'input window, operand 14, single buffered']
    #allocation25 [shape = 's32[1]{0}', space=sflag, size = 0x4, scoped, tag = 'scoped memory for _lambda_.1']
    #allocation26 [shape = 'u8[512]{0}', space=vmem, size = 0x400, scoped, tag = 'input window, operand 15, single buffered']
    %21 = vsyncpa [#allocation5], 0
    %22 = vsyncpa [#allocation7], 0
    %23 = vsyncpa [#allocation10], 0
    %s24 = scalar_lea.sflag [#allocation10], 1
    %25 = vsyncpa %s24, 0
    %26 = vsyncpa [#allocation13], 0
    %s27 = scalar_lea.sflag [#allocation13], 1
    %28 = vsyncpa %s27, 0
    %29 = vsyncpa [#allocation16], 0
    %s30 = scalar_lea.sflag [#allocation16], 1
    %31 = vsyncpa %s30, 0
    %32 = vsyncpa [#allocation19], 0
    %s33 = scalar_lea.sflag [#allocation19], 1
    %34 = vsyncpa %s33, 0
    %35 = vsyncpa [#allocation22], 0
    %s36 = scalar_lea.sflag [#allocation22], 1
    %37 = vsyncpa %s36, 0
    %38 = vsyncpa [#allocation25], 0
    loop: start=0, step=1, limit=12
    $region2: #{_lambda_.1} parent=1 // loop_pre_header
      _
    $region3: #{_lambda_.1} parent=1 // loop_header
      %s40 = sphi 0, %s44
      %p41 = scmp.ge.s32.totalorder %s40, 12
      %s47 = sphi 0, %s59
      %s48 = sphi 0, %s55
      %s49 = sphi 0, %s47
      %s50 = sphi 0, %s48
      %s51 = sphi 0, %s49
      %s52 = sphi 0, %s50
      %s62 = sphi 0, %s64
      %s65 = sphi 0, %s62
      %s66 = sphi 0, %s65
      %s82 = sphi 0, %s66
      %s86 = sphi 0, %s86
      %s88 = sphi 0, %s86
      %s89 = sphi 0, %s88
      %s103 = sphi 0, %s89
      %s107 = sphi 0, %s107
      %s109 = sphi 0, %s107
      %s110 = sphi 0, %s109
      %s124 = sphi 0, %s110
      %s128 = sphi 0, %s128
      %s130 = sphi 0, %s128
      %s131 = sphi 0, %s130
      %s145 = sphi 0, %s131
      %s151 = sphi 0, %s153
      %s154 = sphi 0, %s151
      %s155 = sphi 0, %s154
      %s171 = sphi 0, %s155
      %s177 = sphi 0, %s179
      %s180 = sphi 0, %s177
      %s181 = sphi 0, %s180
      %s197 = sphi 0, %s181
      %s203 = sphi 0, %s205
      %s206 = sphi 0, %s203
      %s207 = sphi 0, %s206
      %s223 = sphi 0, %s207
      %s229 = sphi 0, %s231
      %s232 = sphi 0, %s229
      %s233 = sphi 0, %s232
      %s249 = sphi 0, %s233
      %s255 = sphi 0, %s257
      %s258 = sphi 0, %s255
      %s259 = sphi 0, %s258
      %s275 = sphi 0, %s259
      %s281 = sphi 0, %s283
      %s284 = sphi 0, %s281
      %s285 = sphi 0, %s284
      %s301 = sphi 0, %s285
      %s307 = sphi 0, %s309
      %s310 = sphi 0, %s307
      %s311 = sphi 0, %s310
      %s327 = sphi 0, %s311
      %s333 = sphi 0, %s335
      %s336 = sphi 0, %s333
      %s337 = sphi 0, %s336
      %s353 = sphi 0, %s337
      %s359 = sphi 0, %s361
      %s362 = sphi 0, %s359
      %s363 = sphi 0, %s362
      %s379 = sphi 0, %s363
      %s385 = sphi 0, %s387
      %s388 = sphi 0, %s385
      %s389 = sphi 0, %s388
      %s405 = sphi 0, %s389
      %s409 = sphi 0, %s409
      %s411 = sphi 0, %s409
      %s412 = sphi 0, %s411
      %s426 = sphi 0, %s412
      %s430 = sphi 0, %s430
      %s432 = sphi 0, %s430
      %s433 = sphi 0, %s432
      %s447 = sphi 0, %s433
      %s453 = sphi 0, %s455
      %s456 = sphi 0, %s453
      %s457 = sphi 0, %s456
      %s473 = sphi 0, %s457
    $region4: #{_lambda_.1} parent=1 // loop_header_branch
      %43 = sbr.rel (%p41) target = $region8
    $region5: #{_lambda_.1} parent=1 // loop_body
      %s45 = ssub.s32 %s40, 1
      %s46 = ssub.s32 %s40, 2
      %s53 = sadd.s32 1, %s48
      %p54 = scmp.ge.s32.totalorder %s53, 5
      %s55 = scalar_select %p54, 0, %s53
      %s56 = sadd.s32 1, %s47
      %s57 = scalar_select %p54, %s56, %s47
      %p58 = scmp.ge.s32.totalorder %s57, 2
      %s59 = scalar_select %p58, 0, %s57
      %s60 = ssub.s32 %s47, %s59
      %p61 = scmp.eq.s32.totalorder %s60, 0
      %s63 = sadd.s32 %s62, 1
      %s64 = scalar_select %p61, %s62, %s63
      %p67 = pneg %p61
      %p68 = scmp.eq.s32.totalorder %s40, 9
      %p69 = por %p67, %p68
      %p70 = scmp.ne.s32.totalorder %s62, %s65
      %p71 = scmp.eq.s32.totalorder %s40, 0
      %p72 = por %p70, %p71
      %p73 = scmp.ne.s32.totalorder %s62, %s65
      %p74 = scmp.eq.s32.totalorder %s45, 9
      %p75 = por %p73, %p74
      %p76 = scmp.ne.s32.totalorder %s65, %s66
      %p77 = scmp.eq.s32.totalorder %s45, 0
      %p78 = por %p76, %p77
      %p79 = scmp.ne.s32.totalorder %s65, %s66
      %p80 = scmp.eq.s32.totalorder %s46, 9
      %p81 = por %p79, %p80
      %p83 = scmp.ne.s32.totalorder %s66, %s82
      %p84 = scmp.eq.s32.totalorder %s46, 0
      %p85 = por %p83, %p84
      %s87 = sadd.s32 %s86, 1
      %p90 = scmp.eq.s32.totalorder %s40, 9
      %p91 = scmp.ne.s32.totalorder %s86, %s88
      %p92 = scmp.eq.s32.totalorder %s40, 0
      %p93 = por %p91, %p92
      %p94 = scmp.ne.s32.totalorder %s86, %s88
      %p95 = scmp.eq.s32.totalorder %s45, 9
      %p96 = por %p94, %p95
      %p97 = scmp.ne.s32.totalorder %s88, %s89
      %p98 = scmp.eq.s32.totalorder %s45, 0
      %p99 = por %p97, %p98
      %p100 = scmp.ne.s32.totalorder %s88, %s89
      %p101 = scmp.eq.s32.totalorder %s46, 9
      %p102 = por %p100, %p101
      %p104 = scmp.ne.s32.totalorder %s89, %s103
      %p105 = scmp.eq.s32.totalorder %s46, 0
      %p106 = por %p104, %p105
      %s108 = sadd.s32 %s107, 1
      %p111 = scmp.eq.s32.totalorder %s40, 9
      %p112 = scmp.ne.s32.totalorder %s107, %s109
      %p113 = scmp.eq.s32.totalorder %s40, 0
      %p114 = por %p112, %p113
      %p115 = scmp.ne.s32.totalorder %s107, %s109
      %p116 = scmp.eq.s32.totalorder %s45, 9
      %p117 = por %p115, %p116
      %p118 = scmp.ne.s32.totalorder %s109, %s110
      %p119 = scmp.eq.s32.totalorder %s45, 0
      %p120 = por %p118, %p119
      %p121 = scmp.ne.s32.totalorder %s109, %s110
      %p122 = scmp.eq.s32.totalorder %s46, 9
      %p123 = por %p121, %p122
      %p125 = scmp.ne.s32.totalorder %s110, %s124
      %p126 = scmp.eq.s32.totalorder %s46, 0
      %p127 = por %p125, %p126
      %s129 = sadd.s32 %s128, 1
      %p132 = scmp.eq.s32.totalorder %s40, 9
      %p133 = scmp.ne.s32.totalorder %s128, %s130
      %p134 = scmp.eq.s32.totalorder %s40, 0
      %p135 = por %p133, %p134
      %p136 = scmp.ne.s32.totalorder %s128, %s130
      %p137 = scmp.eq.s32.totalorder %s45, 9
      %p138 = por %p136, %p137
      %p139 = scmp.ne.s32.totalorder %s130, %s131
      %p140 = scmp.eq.s32.totalorder %s45, 0
      %p141 = por %p139, %p140
      %p142 = scmp.ne.s32.totalorder %s130, %s131
      %p143 = scmp.eq.s32.totalorder %s46, 9
      %p144 = por %p142, %p143
      %p146 = scmp.ne.s32.totalorder %s131, %s145
      %p147 = scmp.eq.s32.totalorder %s46, 0
      %p148 = por %p146, %p147
      %s149 = ssub.s32 %s48, %s55
      %p150 = scmp.eq.s32.totalorder %s149, 0
      %s152 = sadd.s32 %s151, 1
      %s153 = scalar_select %p150, %s151, %s152
      %p156 = pneg %p150
      %p157 = scmp.eq.s32.totalorder %s40, 9
      %p158 = por %p156, %p157
      %p159 = scmp.ne.s32.totalorder %s151, %s154
      %p160 = scmp.eq.s32.totalorder %s40, 0
      %p161 = por %p159, %p160
      %p162 = scmp.ne.s32.totalorder %s151, %s154
      %p163 = scmp.eq.s32.totalorder %s45, 9
      %p164 = por %p162, %p163
      %p165 = scmp.ne.s32.totalorder %s154, %s155
      %p166 = scmp.eq.s32.totalorder %s45, 0
      %p167 = por %p165, %p166
      %p168 = scmp.ne.s32.totalorder %s154, %s155
      %p169 = scmp.eq.s32.totalorder %s46, 9
      %p170 = por %p168, %p169
      %p172 = scmp.ne.s32.totalorder %s155, %s171
      %p173 = scmp.eq.s32.totalorder %s46, 0
      %p174 = por %p172, %p173
      %s175 = ssub.s32 %s48, %s55
      %p176 = scmp.eq.s32.totalorder %s175, 0
      %s178 = sadd.s32 %s177, 1
      %s179 = scalar_select %p176, %s177, %s178
      %p182 = pneg %p176
      %p183 = scmp.eq.s32.totalorder %s40, 9
      %p184 = por %p182, %p183
      %p185 = scmp.ne.s32.totalorder %s177, %s180
      %p186 = scmp.eq.s32.totalorder %s40, 0
      %p187 = por %p185, %p186
      %p188 = scmp.ne.s32.totalorder %s177, %s180
      %p189 = scmp.eq.s32.totalorder %s45, 9
      %p190 = por %p188, %p189
      %p191 = scmp.ne.s32.totalorder %s180, %s181
      %p192 = scmp.eq.s32.totalorder %s45, 0
      %p193 = por %p191, %p192
      %p194 = scmp.ne.s32.totalorder %s180, %s181
      %p195 = scmp.eq.s32.totalorder %s46, 9
      %p196 = por %p194, %p195
      %p198 = scmp.ne.s32.totalorder %s181, %s197
      %p199 = scmp.eq.s32.totalorder %s46, 0
      %p200 = por %p198, %p199
      %s201 = ssub.s32 %s48, %s55
      %p202 = scmp.eq.s32.totalorder %s201, 0
      %s204 = sadd.s32 %s203, 1
      %s205 = scalar_select %p202, %s203, %s204
      %p208 = pneg %p202
      %p209 = scmp.eq.s32.totalorder %s40, 9
      %p210 = por %p208, %p209
      %p211 = scmp.ne.s32.totalorder %s203, %s206
      %p212 = scmp.eq.s32.totalorder %s40, 0
      %p213 = por %p211, %p212
      %p214 = scmp.ne.s32.totalorder %s203, %s206
      %p215 = scmp.eq.s32.totalorder %s45, 9
      %p216 = por %p214, %p215
      %p217 = scmp.ne.s32.totalorder %s206, %s207
      %p218 = scmp.eq.s32.totalorder %s45, 0
      %p219 = por %p217, %p218
      %p220 = scmp.ne.s32.totalorder %s206, %s207
      %p221 = scmp.eq.s32.totalorder %s46, 9
      %p222 = por %p220, %p221
      %p224 = scmp.ne.s32.totalorder %s207, %s223
      %p225 = scmp.eq.s32.totalorder %s46, 0
      %p226 = por %p224, %p225
      %s227 = ssub.s32 %s48, %s55
      %p228 = scmp.eq.s32.totalorder %s227, 0
      %s230 = sadd.s32 %s229, 1
      %s231 = scalar_select %p228, %s229, %s230
      %p234 = pneg %p228
      %p235 = scmp.eq.s32.totalorder %s40, 9
      %p236 = por %p234, %p235
      %p237 = scmp.ne.s32.totalorder %s229, %s232
      %p238 = scmp.eq.s32.totalorder %s40, 0
      %p239 = por %p237, %p238
      %p240 = scmp.ne.s32.totalorder %s229, %s232
      %p241 = scmp.eq.s32.totalorder %s45, 9
      %p242 = por %p240, %p241
      %p243 = scmp.ne.s32.totalorder %s232, %s233
      %p244 = scmp.eq.s32.totalorder %s45, 0
      %p245 = por %p243, %p244
      %p246 = scmp.ne.s32.totalorder %s232, %s233
      %p247 = scmp.eq.s32.totalorder %s46, 9
      %p248 = por %p246, %p247
      %p250 = scmp.ne.s32.totalorder %s233, %s249
      %p251 = scmp.eq.s32.totalorder %s46, 0
      %p252 = por %p250, %p251
      %s253 = ssub.s32 %s48, %s55
      %p254 = scmp.eq.s32.totalorder %s253, 0
      %s256 = sadd.s32 %s255, 1
      %s257 = scalar_select %p254, %s255, %s256
      %p260 = pneg %p254
      %p261 = scmp.eq.s32.totalorder %s40, 9
      %p262 = por %p260, %p261
      %p263 = scmp.ne.s32.totalorder %s255, %s258
      %p264 = scmp.eq.s32.totalorder %s40, 0
      %p265 = por %p263, %p264
      %p266 = scmp.ne.s32.totalorder %s255, %s258
      %p267 = scmp.eq.s32.totalorder %s45, 9
      %p268 = por %p266, %p267
      %p269 = scmp.ne.s32.totalorder %s258, %s259
      %p270 = scmp.eq.s32.totalorder %s45, 0
      %p271 = por %p269, %p270
      %p272 = scmp.ne.s32.totalorder %s258, %s259
      %p273 = scmp.eq.s32.totalorder %s46, 9
      %p274 = por %p272, %p273
      %p276 = scmp.ne.s32.totalorder %s259, %s275
      %p277 = scmp.eq.s32.totalorder %s46, 0
      %p278 = por %p276, %p277
      %s279 = ssub.s32 %s48, %s55
      %p280 = scmp.eq.s32.totalorder %s279, 0
      %s282 = sadd.s32 %s281, 1
      %s283 = scalar_select %p280, %s281, %s282
      %p286 = pneg %p280
      %p287 = scmp.eq.s32.totalorder %s40, 9
      %p288 = por %p286, %p287
      %p289 = scmp.ne.s32.totalorder %s281, %s284
      %p290 = scmp.eq.s32.totalorder %s40, 0
      %p291 = por %p289, %p290
      %p292 = scmp.ne.s32.totalorder %s281, %s284
      %p293 = scmp.eq.s32.totalorder %s45, 9
      %p294 = por %p292, %p293
      %p295 = scmp.ne.s32.totalorder %s284, %s285
      %p296 = scmp.eq.s32.totalorder %s45, 0
      %p297 = por %p295, %p296
      %p298 = scmp.ne.s32.totalorder %s284, %s285
      %p299 = scmp.eq.s32.totalorder %s46, 9
      %p300 = por %p298, %p299
      %p302 = scmp.ne.s32.totalorder %s285, %s301
      %p303 = scmp.eq.s32.totalorder %s46, 0
      %p304 = por %p302, %p303
      %s305 = ssub.s32 %s48, %s55
      %p306 = scmp.eq.s32.totalorder %s305, 0
      %s308 = sadd.s32 %s307, 1
      %s309 = scalar_select %p306, %s307, %s308
      %p312 = pneg %p306
      %p313 = scmp.eq.s32.totalorder %s40, 9
      %p314 = por %p312, %p313
      %p315 = scmp.ne.s32.totalorder %s307, %s310
      %p316 = scmp.eq.s32.totalorder %s40, 0
      %p317 = por %p315, %p316
      %p318 = scmp.ne.s32.totalorder %s307, %s310
      %p319 = scmp.eq.s32.totalorder %s45, 9
      %p320 = por %p318, %p319
      %p321 = scmp.ne.s32.totalorder %s310, %s311
      %p322 = scmp.eq.s32.totalorder %s45, 0
      %p323 = por %p321, %p322
      %p324 = scmp.ne.s32.totalorder %s310, %s311
      %p325 = scmp.eq.s32.totalorder %s46, 9
      %p326 = por %p324, %p325
      %p328 = scmp.ne.s32.totalorder %s311, %s327
      %p329 = scmp.eq.s32.totalorder %s46, 0
      %p330 = por %p328, %p329
      %s331 = ssub.s32 %s48, %s55
      %p332 = scmp.eq.s32.totalorder %s331, 0
      %s334 = sadd.s32 %s333, 1
      %s335 = scalar_select %p332, %s333, %s334
      %p338 = pneg %p332
      %p339 = scmp.eq.s32.totalorder %s40, 9
      %p340 = por %p338, %p339
      %p341 = scmp.ne.s32.totalorder %s333, %s336
      %p342 = scmp.eq.s32.totalorder %s40, 0
      %p343 = por %p341, %p342
      %p344 = scmp.ne.s32.totalorder %s333, %s336
      %p345 = scmp.eq.s32.totalorder %s45, 9
      %p346 = por %p344, %p345
      %p347 = scmp.ne.s32.totalorder %s336, %s337
      %p348 = scmp.eq.s32.totalorder %s45, 0
      %p349 = por %p347, %p348
      %p350 = scmp.ne.s32.totalorder %s336, %s337
      %p351 = scmp.eq.s32.totalorder %s46, 9
      %p352 = por %p350, %p351
      %p354 = scmp.ne.s32.totalorder %s337, %s353
      %p355 = scmp.eq.s32.totalorder %s46, 0
      %p356 = por %p354, %p355
      %s357 = ssub.s32 %s48, %s55
      %p358 = scmp.eq.s32.totalorder %s357, 0
      %s360 = sadd.s32 %s359, 1
      %s361 = scalar_select %p358, %s359, %s360
      %p364 = pneg %p358
      %p365 = scmp.eq.s32.totalorder %s40, 9
      %p366 = por %p364, %p365
      %p367 = scmp.ne.s32.totalorder %s359, %s362
      %p368 = scmp.eq.s32.totalorder %s40, 0
      %p369 = por %p367, %p368
      %p370 = scmp.ne.s32.totalorder %s359, %s362
      %p371 = scmp.eq.s32.totalorder %s45, 9
      %p372 = por %p370, %p371
      %p373 = scmp.ne.s32.totalorder %s362, %s363
      %p374 = scmp.eq.s32.totalorder %s45, 0
      %p375 = por %p373, %p374
      %p376 = scmp.ne.s32.totalorder %s362, %s363
      %p377 = scmp.eq.s32.totalorder %s46, 9
      %p378 = por %p376, %p377
      %p380 = scmp.ne.s32.totalorder %s363, %s379
      %p381 = scmp.eq.s32.totalorder %s46, 0
      %p382 = por %p380, %p381
      %s383 = ssub.s32 %s48, %s55
      %p384 = scmp.eq.s32.totalorder %s383, 0
      %s386 = sadd.s32 %s385, 1
      %s387 = scalar_select %p384, %s385, %s386
      %p390 = pneg %p384
      %p391 = scmp.eq.s32.totalorder %s40, 9
      %p392 = por %p390, %p391
      %p393 = scmp.ne.s32.totalorder %s385, %s388
      %p394 = scmp.eq.s32.totalorder %s40, 0
      %p395 = por %p393, %p394
      %p396 = scmp.ne.s32.totalorder %s385, %s388
      %p397 = scmp.eq.s32.totalorder %s45, 9
      %p398 = por %p396, %p397
      %p399 = scmp.ne.s32.totalorder %s388, %s389
      %p400 = scmp.eq.s32.totalorder %s45, 0
      %p401 = por %p399, %p400
      %p402 = scmp.ne.s32.totalorder %s388, %s389
      %p403 = scmp.eq.s32.totalorder %s46, 9
      %p404 = por %p402, %p403
      %p406 = scmp.ne.s32.totalorder %s389, %s405
      %p407 = scmp.eq.s32.totalorder %s46, 0
      %p408 = por %p406, %p407
      %s410 = sadd.s32 %s409, 1
      %p413 = scmp.eq.s32.totalorder %s40, 9
      %p414 = scmp.ne.s32.totalorder %s409, %s411
      %p415 = scmp.eq.s32.totalorder %s40, 0
      %p416 = por %p414, %p415
      %p417 = scmp.ne.s32.totalorder %s409, %s411
      %p418 = scmp.eq.s32.totalorder %s45, 9
      %p419 = por %p417, %p418
      %p420 = scmp.ne.s32.totalorder %s411, %s412
      %p421 = scmp.eq.s32.totalorder %s45, 0
      %p422 = por %p420, %p421
      %p423 = scmp.ne.s32.totalorder %s411, %s412
      %p424 = scmp.eq.s32.totalorder %s46, 9
      %p425 = por %p423, %p424
      %p427 = scmp.ne.s32.totalorder %s412, %s426
      %p428 = scmp.eq.s32.totalorder %s46, 0
      %p429 = por %p427, %p428
      %s431 = sadd.s32 %s430, 1
      %p434 = scmp.eq.s32.totalorder %s40, 9
      %p435 = scmp.ne.s32.totalorder %s430, %s432
      %p436 = scmp.eq.s32.totalorder %s40, 0
      %p437 = por %p435, %p436
      %p438 = scmp.ne.s32.totalorder %s430, %s432
      %p439 = scmp.eq.s32.totalorder %s45, 9
      %p440 = por %p438, %p439
      %p441 = scmp.ne.s32.totalorder %s432, %s433
      %p442 = scmp.eq.s32.totalorder %s45, 0
      %p443 = por %p441, %p442
      %p444 = scmp.ne.s32.totalorder %s432, %s433
      %p445 = scmp.eq.s32.totalorder %s46, 9
      %p446 = por %p444, %p445
      %p448 = scmp.ne.s32.totalorder %s433, %s447
      %p449 = scmp.eq.s32.totalorder %s46, 0
      %p450 = por %p448, %p449
      %s451 = ssub.s32 %s47, %s59
      %p452 = scmp.eq.s32.totalorder %s451, 0
      %s454 = sadd.s32 %s453, 1
      %s455 = scalar_select %p452, %s453, %s454
      %p458 = pneg %p452
      %p459 = scmp.eq.s32.totalorder %s40, 9
      %p460 = por %p458, %p459
      %p461 = scmp.ne.s32.totalorder %s453, %s456
      %p462 = scmp.eq.s32.totalorder %s40, 0
      %p463 = por %p461, %p462
      %p464 = scmp.ne.s32.totalorder %s453, %s456
      %p465 = scmp.eq.s32.totalorder %s45, 9
      %p466 = por %p464, %p465
      %p467 = scmp.ne.s32.totalorder %s456, %s457
      %p468 = scmp.eq.s32.totalorder %s45, 0
      %p469 = por %p467, %p468
      %p470 = scmp.ne.s32.totalorder %s456, %s457
      %p471 = scmp.eq.s32.totalorder %s46, 9
      %p472 = por %p470, %p471
      %p474 = scmp.ne.s32.totalorder %s457, %s473
      %p475 = scmp.eq.s32.totalorder %s46, 0
      %p476 = por %p474, %p475
      %p477 = scmp.le.s32.totalorder 1, %s40
      %p478 = scmp.lt.s32.totalorder %s40, 11
      %p479 = pnand %p477, %p478
      %p480 = pneg %p479
      // Predicated region
      $region9: #{_lambda_.1} parent=5 // pred_check
        _
      $region10: #{_lambda_.1} parent=5 // pred_check_branch
        %482 = sbr.rel (%p479) target = $region12
      $region11: #{_lambda_.1} parent=5 // pred_region
        %s483 = ssub.s32 %s40, 1
        // Predicated region
        $region13: #{_lambda_.1} parent=11 // pred_check
          %p484 = pneg %p99
        $region14: #{_lambda_.1} parent=11 // pred_check_branch
          %486 = sbr.rel (%p484) target = $region16
        $region15: #{_lambda_.1} parent=11 // pred_region
          %s488 = ssub.s32 1024, 1024
          %489 = vsyncadd [#allocation5], %s488
          %s490 = sshll.u32 [#allocation4], 4
          %s491 = int_to_ptr.vmem [resolvable:$true] %s490
          %496 = dma.hbm_to_vmem [thread:$0]  %s1, 1024, %s491, [#allocation5], 128, 128, 8
        $region16: #{_lambda_.1} parent=11 // pred_fallthru
          _
        // Predicated region
        $region17: #{_lambda_.1} parent=11 // pred_check
          %p497 = pneg %p120
        $region18: #{_lambda_.1} parent=11 // pred_check_branch
          %499 = sbr.rel (%p497) target = $region20
        $region19: #{_lambda_.1} parent=11 // pred_region
          %s501 = ssub.s32 9216, 9216
          %502 = vsyncadd [#allocation7], %s501
          %s503 = sshll.u32 [#allocation6], 4
          %s504 = int_to_ptr.vmem [resolvable:$true] %s503
          %509 = dma.hbm_to_vmem [thread:$0]  %s2, 9216, %s504, [#allocation7], 64, 64, 4
        $region20: #{_lambda_.1} parent=11 // pred_fallthru
          _
        // Predicated region
        $region21: #{_lambda_.1} parent=11 // pred_check
          %p510 = pneg %p141
        $region22: #{_lambda_.1} parent=11 // pred_check_branch
          %512 = sbr.rel (%p510) target = $region24
        $region23: #{_lambda_.1} parent=11 // pred_region
          %s514 = ssub.s32 16, 16
          %515 = vsyncadd [#allocation7], %s514
          %s517 = sshll.u32 [#allocation8], 4
          %s518 = int_to_ptr.vmem [resolvable:$true] %s517
          %520 = dma.hbm_to_vmem [thread:$0]  %s3, 16, %s518, [#allocation7]
        $region24: #{_lambda_.1} parent=11 // pred_fallthru
          _
        // Predicated region
        $region25: #{_lambda_.1} parent=11 // pred_check
          %p521 = pneg %p422
        $region26: #{_lambda_.1} parent=11 // pred_check_branch
          %523 = sbr.rel (%p521) target = $region28
        $region27: #{_lambda_.1} parent=11 // pred_region
          %s525 = ssub.s32 4608, 4608
          %526 = vsyncadd [#allocation25], %s525
          %s527 = sshll.u32 [#allocation24], 4
          %s528 = int_to_ptr.vmem [resolvable:$true] %s527
          %533 = dma.hbm_to_vmem [thread:$0]  %s14, 4608, %s528, [#allocation25], 64, 64, 4
        $region28: #{_lambda_.1} parent=11 // pred_fallthru
          _
        // Predicated region
        $region29: #{_lambda_.1} parent=11 // pred_check
          %p534 = pneg %p443
        $region30: #{_lambda_.1} parent=11 // pred_check_branch
          %536 = sbr.rel (%p534) target = $region32
        $region31: #{_lambda_.1} parent=11 // pred_region
          %s538 = ssub.s32 16, 16
          %539 = vsyncadd [#allocation25], %s538
          %s541 = sshll.u32 [#allocation26], 4
          %s542 = int_to_ptr.vmem [resolvable:$true] %s541
          %544 = dma.hbm_to_vmem [thread:$0]  %s15, 16, %s542, [#allocation25]
        $region32: #{_lambda_.1} parent=11 // pred_fallthru
          _
      $region12: #{_lambda_.1} parent=5 // pred_fallthru
        _
      %p545 = scmp.lt.s32.totalorder %s40, 10
      // Predicated region
      $region33: #{_lambda_.1} parent=5 // pred_check
        %p546 = pneg %p545
      $region34: #{_lambda_.1} parent=5 // pred_check_branch
        %548 = sbr.rel (%p546) target = $region36
      $region35: #{_lambda_.1} parent=5 // pred_region
        // Predicated region
        $region37: #{_lambda_.1} parent=35 // pred_check
          %p549 = pneg %p72
        $region38: #{_lambda_.1} parent=35 // pred_check_branch
          %551 = sbr.rel (%p549) target = $region40
        $region39: #{_lambda_.1} parent=35 // pred_region
          %p552 = scmp.lt.s32.totalorder %s47, 1
          %s553 = scalar_select %p552, %s47, 1
          %s554 = smul.addr %s553, 8
          %s555 = smul.addr %s554, 4
          %s556 = scalar_lea.vmem %s0, %s555
        $region40: #{_lambda_.1} parent=35 // pred_fallthru
          _
        // Predicated region
        $region41: #{_lambda_.1} parent=35 // pred_check
          %p557 = pneg %p161
        $region42: #{_lambda_.1} parent=35 // pred_check_branch
          %559 = sbr.rel (%p557) target = $region44
        $region43: #{_lambda_.1} parent=35 // pred_region
          %s560 = sand.u32 %s40, 1
          %s561 = scalar_lea.sflag [#allocation10], %s560
          %s562 = sand.u32 %s151, 1
          %s563 = smul.addr %s562, 3456
          %s564 = scalar_lea.vmem [#allocation9], %s563
          %s566 = ssub.s32 55296, 55296
          %567 = vsyncadd %s561, %s566
          %s568 = smul.addr %s48, 864
          %s569 = smul.addr %s568, 64
          %s570 = scalar_lea.hbm %s4, %s569
          %s571 = sshll.u32 %s564, 4
          %s572 = int_to_ptr.vmem [resolvable:$true] %s571
          %577 = dma.hbm_to_vmem [thread:$0]  %s570, 55296, %s572, %s561, 64, 64, 4
        $region44: #{_lambda_.1} parent=35 // pred_fallthru
          _
        // Predicated region
        $region45: #{_lambda_.1} parent=35 // pred_check
          %p578 = pneg %p187
        $region46: #{_lambda_.1} parent=35 // pred_check_branch
          %580 = sbr.rel (%p578) target = $region48
        $region47: #{_lambda_.1} parent=35 // pred_region
          %s581 = sand.u32 %s40, 1
          %s582 = scalar_lea.sflag [#allocation10], %s581
          %s583 = sand.u32 %s177, 1
          %s584 = smul.addr %s583, 12
          %s585 = scalar_lea.vmem [#allocation11], %s584
          %s587 = ssub.s32 192, 192
          %588 = vsyncadd %s582, %s587
          %s589 = smul.addr %s48, 12
          %s590 = smul.addr %s589, 16
          %s591 = scalar_lea.hbm %s5, %s590
          %s592 = sshll.u32 %s585, 4
          %s593 = int_to_ptr.vmem [resolvable:$true] %s592
          %598 = dma.hbm_to_vmem [thread:$0]  %s591, 192, %s593, %s582, 16, 16, 1
        $region48: #{_lambda_.1} parent=35 // pred_fallthru
          _
        // Predicated region
        $region49: #{_lambda_.1} parent=35 // pred_check
          %p599 = pneg %p213
        $region50: #{_lambda_.1} parent=35 // pred_check_branch
          %601 = sbr.rel (%p599) target = $region52
        $region51: #{_lambda_.1} parent=35 // pred_region
          %s602 = sand.u32 %s40, 1
          %s603 = scalar_lea.sflag [#allocation13], %s602
          %s604 = sand.u32 %s203, 1
          %s605 = smul.addr %s604, 3456
          %s606 = scalar_lea.vmem [#allocation12], %s605
          %s608 = ssub.s32 55296, 55296
          %609 = vsyncadd %s603, %s608
          %s610 = smul.addr %s48, 864
          %s611 = smul.addr %s610, 64
          %s612 = scalar_lea.hbm %s6, %s611
          %s613 = sshll.u32 %s606, 4
          %s614 = int_to_ptr.vmem [resolvable:$true] %s613
          %619 = dma.hbm_to_vmem [thread:$0]  %s612, 55296, %s614, %s603, 64, 64, 4
        $region52: #{_lambda_.1} parent=35 // pred_fallthru
          _
        // Predicated region
        $region53: #{_lambda_.1} parent=35 // pred_check
          %p620 = pneg %p239
        $region54: #{_lambda_.1} parent=35 // pred_check_branch
          %622 = sbr.rel (%p620) target = $region56
        $region55: #{_lambda_.1} parent=35 // pred_region
          %s623 = sand.u32 %s40, 1
          %s624 = scalar_lea.sflag [#allocation13], %s623
          %s625 = sand.u32 %s229, 1
          %s626 = smul.addr %s625, 12
          %s627 = scalar_lea.vmem [#allocation14], %s626
          %s629 = ssub.s32 192, 192
          %630 = vsyncadd %s624, %s629
          %s631 = smul.addr %s48, 12
          %s632 = smul.addr %s631, 16
          %s633 = scalar_lea.hbm %s7, %s632
          %s634 = sshll.u32 %s627, 4
          %s635 = int_to_ptr.vmem [resolvable:$true] %s634
          %640 = dma.hbm_to_vmem [thread:$0]  %s633, 192, %s635, %s624, 16, 16, 1
        $region56: #{_lambda_.1} parent=35 // pred_fallthru
          _
        // Predicated region
        $region57: #{_lambda_.1} parent=35 // pred_check
          %p641 = pneg %p265
        $region58: #{_lambda_.1} parent=35 // pred_check_branch
          %643 = sbr.rel (%p641) target = $region60
        $region59: #{_lambda_.1} parent=35 // pred_region
          %s644 = sand.u32 %s40, 1
          %s645 = scalar_lea.sflag [#allocation16], %s644
          %s646 = sand.u32 %s255, 1
          %s647 = smul.addr %s646, 48
          %s648 = scalar_lea.vmem [#allocation15], %s647
          %s650 = ssub.s32 768, 768
          %651 = vsyncadd %s645, %s650
          %s652 = smul.addr %s48, 12
          %s653 = smul.addr %s652, 64
          %s654 = scalar_lea.hbm %s8, %s653
          %s655 = sshll.u32 %s648, 4
          %s656 = int_to_ptr.vmem [resolvable:$true] %s655
          %661 = dma.hbm_to_vmem [thread:$0]  %s654, 768, %s656, %s645, 64, 64, 4
        $region60: #{_lambda_.1} parent=35 // pred_fallthru
          _
        // Predicated region
        $region61: #{_lambda_.1} parent=35 // pred_check
          %p662 = pneg %p291
        $region62: #{_lambda_.1} parent=35 // pred_check_branch
          %664 = sbr.rel (%p662) target = $region64
        $region63: #{_lambda_.1} parent=35 // pred_region
          %s665 = sand.u32 %s40, 1
          %s666 = scalar_lea.sflag [#allocation16], %s665
          %s667 = sand.u32 %s281, 1
          %s668 = smul.addr %s667, 48
          %s669 = scalar_lea.vmem [#allocation17], %s668
          %s671 = ssub.s32 768, 768
          %672 = vsyncadd %s666, %s671
          %s673 = smul.addr %s48, 12
          %s674 = smul.addr %s673, 64
          %s675 = scalar_lea.hbm %s9, %s674
          %s676 = sshll.u32 %s669, 4
          %s677 = int_to_ptr.vmem [resolvable:$true] %s676
          %682 = dma.hbm_to_vmem [thread:$0]  %s675, 768, %s677, %s666, 64, 64, 4
        $region64: #{_lambda_.1} parent=35 // pred_fallthru
          _
        // Predicated region
        $region65: #{_lambda_.1} parent=35 // pred_check
          %p683 = pneg %p317
        $region66: #{_lambda_.1} parent=35 // pred_check_branch
          %685 = sbr.rel (%p683) target = $region68
        $region67: #{_lambda_.1} parent=35 // pred_region
          %s686 = sand.u32 %s40, 1
          %s687 = scalar_lea.sflag [#allocation19], %s686
          %s688 = sand.u32 %s307, 1
          %s689 = smul.addr %s688, 48
          %s690 = scalar_lea.vmem [#allocation18], %s689
          %s692 = ssub.s32 768, 768
          %693 = vsyncadd %s687, %s692
          %s694 = smul.addr %s48, 12
          %s695 = smul.addr %s694, 64
          %s696 = scalar_lea.hbm %s10, %s695
          %s697 = sshll.u32 %s690, 4
          %s698 = int_to_ptr.vmem [resolvable:$true] %s697
          %703 = dma.hbm_to_vmem [thread:$0]  %s696, 768, %s698, %s687, 64, 64, 4
        $region68: #{_lambda_.1} parent=35 // pred_fallthru
          _
        // Predicated region
        $region69: #{_lambda_.1} parent=35 // pred_check
          %p704 = pneg %p343
        $region70: #{_lambda_.1} parent=35 // pred_check_branch
          %706 = sbr.rel (%p704) target = $region72
        $region71: #{_lambda_.1} parent=35 // pred_region
          %s707 = sand.u32 %s40, 1
          %s708 = scalar_lea.sflag [#allocation19], %s707
          %s709 = sand.u32 %s333, 1
          %s710 = smul.addr %s709, 12
          %s711 = scalar_lea.vmem [#allocation20], %s710
          %s713 = ssub.s32 192, 192
          %714 = vsyncadd %s708, %s713
          %s715 = smul.addr %s48, 12
          %s716 = smul.addr %s715, 16
          %s717 = scalar_lea.hbm %s11, %s716
          %s718 = sshll.u32 %s711, 4
          %s719 = int_to_ptr.vmem [resolvable:$true] %s718
          %724 = dma.hbm_to_vmem [thread:$0]  %s717, 192, %s719, %s708, 16, 16, 1
        $region72: #{_lambda_.1} parent=35 // pred_fallthru
          _
        // Predicated region
        $region73: #{_lambda_.1} parent=35 // pred_check
          %p725 = pneg %p369
        $region74: #{_lambda_.1} parent=35 // pred_check_branch
          %727 = sbr.rel (%p725) target = $region76
        $region75: #{_lambda_.1} parent=35 // pred_region
          %s728 = sand.u32 %s40, 1
          %s729 = scalar_lea.sflag [#allocation22], %s728
          %s730 = sand.u32 %s359, 1
          %s731 = smul.addr %s730, 288
          %s732 = scalar_lea.vmem [#allocation21], %s731
          %s734 = ssub.s32 4608, 4608
          %735 = vsyncadd %s729, %s734
          %s736 = smul.addr %s48, 72
          %s737 = smul.addr %s736, 64
          %s738 = scalar_lea.hbm %s12, %s737
          %s739 = sshll.u32 %s732, 4
          %s740 = int_to_ptr.vmem [resolvable:$true] %s739
          %745 = dma.hbm_to_vmem [thread:$0]  %s738, 4608, %s740, %s729, 64, 64, 4
        $region76: #{_lambda_.1} parent=35 // pred_fallthru
          _
        // Predicated region
        $region77: #{_lambda_.1} parent=35 // pred_check
          %p746 = pneg %p395
        $region78: #{_lambda_.1} parent=35 // pred_check_branch
          %748 = sbr.rel (%p746) target = $region80
        $region79: #{_lambda_.1} parent=35 // pred_region
          %s749 = sand.u32 %s40, 1
          %s750 = scalar_lea.sflag [#allocation22], %s749
          %s751 = sand.u32 %s385, 1
          %s752 = scalar_lea.vmem [#allocation23], %s751
          %s754 = ssub.s32 16, 16
          %755 = vsyncadd %s750, %s754
          %s756 = smul.addr %s48, 16
          %s757 = scalar_lea.hbm %s13, %s756
          %s759 = sshll.u32 %s752, 4
          %s760 = int_to_ptr.vmem [resolvable:$true] %s759
          %762 = dma.hbm_to_vmem [thread:$0]  %s757, 16, %s760, %s750
        $region80: #{_lambda_.1} parent=35 // pred_fallthru
          _
      $region36: #{_lambda_.1} parent=5 // pred_fallthru
        _
      %p763 = scmp.le.s32.totalorder 1, %s40
      %p764 = scmp.lt.s32.totalorder %s40, 11
      %p765 = pnand %p763, %p764
      %p766 = pneg %p765
      // Predicated region
      $region81: #{_lambda_.1} parent=5 // pred_check
        _
      $region82: #{_lambda_.1} parent=5 // pred_check_branch
        %768 = sbr.rel (%p765) target = $region84
      $region83: #{_lambda_.1} parent=5 // pred_region
        %s769 = ssub.s32 %s40, 1
        // Predicated region
        $region85: #{_lambda_.1} parent=83 // pred_check
          %p770 = pneg %p99
        $region86: #{_lambda_.1} parent=83 // pred_check_branch
          %772 = sbr.rel (%p770) target = $region88
        $region87: #{_lambda_.1} parent=83 // pred_region
          %773 = dma.done [#allocation5], 1024
        $region88: #{_lambda_.1} parent=83 // pred_fallthru
          _
        // Predicated region
        $region89: #{_lambda_.1} parent=83 // pred_check
          %p774 = pneg %p120
        $region90: #{_lambda_.1} parent=83 // pred_check_branch
          %776 = sbr.rel (%p774) target = $region92
        $region91: #{_lambda_.1} parent=83 // pred_region
          %777 = dma.done [#allocation7], 9216
        $region92: #{_lambda_.1} parent=83 // pred_fallthru
          _
        // Predicated region
        $region93: #{_lambda_.1} parent=83 // pred_check
          %p778 = pneg %p141
        $region94: #{_lambda_.1} parent=83 // pred_check_branch
          %780 = sbr.rel (%p778) target = $region96
        $region95: #{_lambda_.1} parent=83 // pred_region
          %781 = dma.done [#allocation7], 16
        $region96: #{_lambda_.1} parent=83 // pred_fallthru
          _
        %s782 = sand.u32 %s45, 1
        %s783 = scalar_lea.sflag [#allocation10], %s782
        %s784 = sand.u32 %s154, 1
        %s785 = smul.addr %s784, 3456
        %s786 = scalar_lea.vmem [#allocation9], %s785
        // Predicated region
        $region97: #{_lambda_.1} parent=83 // pred_check
          %p787 = pneg %p167
        $region98: #{_lambda_.1} parent=83 // pred_check_branch
          %789 = sbr.rel (%p787) target = $region100
        $region99: #{_lambda_.1} parent=83 // pred_region
          %790 = dma.done %s783, 55296
        $region100: #{_lambda_.1} parent=83 // pred_fallthru
          _
        %s791 = sand.u32 %s45, 1
        %s792 = scalar_lea.sflag [#allocation10], %s791
        %s793 = sand.u32 %s180, 1
        %s794 = smul.addr %s793, 12
        %s795 = scalar_lea.vmem [#allocation11], %s794
        // Predicated region
        $region101: #{_lambda_.1} parent=83 // pred_check
          %p796 = pneg %p193
        $region102: #{_lambda_.1} parent=83 // pred_check_branch
          %798 = sbr.rel (%p796) target = $region104
        $region103: #{_lambda_.1} parent=83 // pred_region
          %799 = dma.done %s792, 192
        $region104: #{_lambda_.1} parent=83 // pred_fallthru
          _
        %s800 = sand.u32 %s45, 1
        %s801 = scalar_lea.sflag [#allocation13], %s800
        %s802 = sand.u32 %s206, 1
        %s803 = smul.addr %s802, 3456
        %s804 = scalar_lea.vmem [#allocation12], %s803
        // Predicated region
        $region105: #{_lambda_.1} parent=83 // pred_check
          %p805 = pneg %p219
        $region106: #{_lambda_.1} parent=83 // pred_check_branch
          %807 = sbr.rel (%p805) target = $region108
        $region107: #{_lambda_.1} parent=83 // pred_region
          %808 = dma.done %s801, 55296
        $region108: #{_lambda_.1} parent=83 // pred_fallthru
          _
        %s809 = sand.u32 %s45, 1
        %s810 = scalar_lea.sflag [#allocation13], %s809
        %s811 = sand.u32 %s232, 1
        %s812 = smul.addr %s811, 12
        %s813 = scalar_lea.vmem [#allocation14], %s812
        // Predicated region
        $region109: #{_lambda_.1} parent=83 // pred_check
          %p814 = pneg %p245
        $region110: #{_lambda_.1} parent=83 // pred_check_branch
          %816 = sbr.rel (%p814) target = $region112
        $region111: #{_lambda_.1} parent=83 // pred_region
          %817 = dma.done %s810, 192
        $region112: #{_lambda_.1} parent=83 // pred_fallthru
          _
        %s818 = sand.u32 %s45, 1
        %s819 = scalar_lea.sflag [#allocation16], %s818
        %s820 = sand.u32 %s258, 1
        %s821 = smul.addr %s820, 48
        %s822 = scalar_lea.vmem [#allocation15], %s821
        // Predicated region
        $region113: #{_lambda_.1} parent=83 // pred_check
          %p823 = pneg %p271
        $region114: #{_lambda_.1} parent=83 // pred_check_branch
          %825 = sbr.rel (%p823) target = $region116
        $region115: #{_lambda_.1} parent=83 // pred_region
          %826 = dma.done %s819, 768
        $region116: #{_lambda_.1} parent=83 // pred_fallthru
          _
        %s827 = sand.u32 %s45, 1
        %s828 = scalar_lea.sflag [#allocation16], %s827
        %s829 = sand.u32 %s284, 1
        %s830 = smul.addr %s829, 48
        %s831 = scalar_lea.vmem [#allocation17], %s830
        // Predicated region
        $region117: #{_lambda_.1} parent=83 // pred_check
          %p832 = pneg %p297
        $region118: #{_lambda_.1} parent=83 // pred_check_branch
          %834 = sbr.rel (%p832) target = $region120
        $region119: #{_lambda_.1} parent=83 // pred_region
          %835 = dma.done %s828, 768
        $region120: #{_lambda_.1} parent=83 // pred_fallthru
          _
        %s836 = sand.u32 %s45, 1
        %s837 = scalar_lea.sflag [#allocation19], %s836
        %s838 = sand.u32 %s310, 1
        %s839 = smul.addr %s838, 48
        %s840 = scalar_lea.vmem [#allocation18], %s839
        // Predicated region
        $region121: #{_lambda_.1} parent=83 // pred_check
          %p841 = pneg %p323
        $region122: #{_lambda_.1} parent=83 // pred_check_branch
          %843 = sbr.rel (%p841) target = $region124
        $region123: #{_lambda_.1} parent=83 // pred_region
          %844 = dma.done %s837, 768
        $region124: #{_lambda_.1} parent=83 // pred_fallthru
          _
        %s845 = sand.u32 %s45, 1
        %s846 = scalar_lea.sflag [#allocation19], %s845
        %s847 = sand.u32 %s336, 1
        %s848 = smul.addr %s847, 12
        %s849 = scalar_lea.vmem [#allocation20], %s848
        // Predicated region
        $region125: #{_lambda_.1} parent=83 // pred_check
          %p850 = pneg %p349
        $region126: #{_lambda_.1} parent=83 // pred_check_branch
          %852 = sbr.rel (%p850) target = $region128
        $region127: #{_lambda_.1} parent=83 // pred_region
          %853 = dma.done %s846, 192
        $region128: #{_lambda_.1} parent=83 // pred_fallthru
          _
        %s854 = sand.u32 %s45, 1
        %s855 = scalar_lea.sflag [#allocation22], %s854
        %s856 = sand.u32 %s362, 1
        %s857 = smul.addr %s856, 288
        %s858 = scalar_lea.vmem [#allocation21], %s857
        // Predicated region
        $region129: #{_lambda_.1} parent=83 // pred_check
          %p859 = pneg %p375
        $region130: #{_lambda_.1} parent=83 // pred_check_branch
          %861 = sbr.rel (%p859) target = $region132
        $region131: #{_lambda_.1} parent=83 // pred_region
          %862 = dma.done %s855, 4608
        $region132: #{_lambda_.1} parent=83 // pred_fallthru
          _
        %s863 = sand.u32 %s45, 1
        %s864 = scalar_lea.sflag [#allocation22], %s863
        %s865 = sand.u32 %s388, 1
        %s866 = scalar_lea.vmem [#allocation23], %s865
        // Predicated region
        $region133: #{_lambda_.1} parent=83 // pred_check
          %p867 = pneg %p401
        $region134: #{_lambda_.1} parent=83 // pred_check_branch
          %869 = sbr.rel (%p867) target = $region136
        $region135: #{_lambda_.1} parent=83 // pred_region
          %870 = dma.done %s864, 16
        $region136: #{_lambda_.1} parent=83 // pred_fallthru
          _
        // Predicated region
        $region137: #{_lambda_.1} parent=83 // pred_check
          %p871 = pneg %p422
        $region138: #{_lambda_.1} parent=83 // pred_check_branch
          %873 = sbr.rel (%p871) target = $region140
        $region139: #{_lambda_.1} parent=83 // pred_region
          %874 = dma.done [#allocation25], 4608
        $region140: #{_lambda_.1} parent=83 // pred_fallthru
          _
        // Predicated region
        $region141: #{_lambda_.1} parent=83 // pred_check
          %p875 = pneg %p443
        $region142: #{_lambda_.1} parent=83 // pred_check_branch
          %877 = sbr.rel (%p875) target = $region144
        $region143: #{_lambda_.1} parent=83 // pred_region
          %878 = dma.done [#allocation25], 16
        $region144: #{_lambda_.1} parent=83 // pred_fallthru
          _
        %p879 = scmp.lt.s32.totalorder %s49, 1
        %s880 = scalar_select %p879, %s49, 1
        %s881 = smul.addr %s880, 8
        %s882 = smul.addr %s881, 4
        %s883 = scalar_lea.vmem %s0, %s882
        %p884 = pneg %p78
        %p885 = pneg %p75
        %p886 = pneg %p99
        %p887 = pneg %p96
        %p888 = pneg %p120
        %p889 = pneg %p117
        %p890 = pneg %p141
        %p891 = pneg %p138
        %s892 = sand.u32 %s45, 1
        %s893 = scalar_lea.sflag [#allocation10], %s892
        %s894 = sand.u32 %s154, 1
        %s895 = smul.addr %s894, 3456
        %s896 = scalar_lea.vmem [#allocation9], %s895
        %p897 = pneg %p167
        %p898 = pneg %p164
        %s899 = sand.u32 %s45, 1
        %s900 = scalar_lea.sflag [#allocation10], %s899
        %s901 = sand.u32 %s180, 1
        %s902 = smul.addr %s901, 12
        %s903 = scalar_lea.vmem [#allocation11], %s902
        %p904 = pneg %p193
        %p905 = pneg %p190
        %s906 = sand.u32 %s45, 1
        %s907 = scalar_lea.sflag [#allocation13], %s906
        %s908 = sand.u32 %s206, 1
        %s909 = smul.addr %s908, 3456
        %s910 = scalar_lea.vmem [#allocation12], %s909
        %p911 = pneg %p219
        %p912 = pneg %p216
        %s913 = sand.u32 %s45, 1
        %s914 = scalar_lea.sflag [#allocation13], %s913
        %s915 = sand.u32 %s232, 1
        %s916 = smul.addr %s915, 12
        %s917 = scalar_lea.vmem [#allocation14], %s916
        %p918 = pneg %p245
        %p919 = pneg %p242
        %s920 = sand.u32 %s45, 1
        %s921 = scalar_lea.sflag [#allocation16], %s920
        %s922 = sand.u32 %s258, 1
        %s923 = smul.addr %s922, 48
        %s924 = scalar_lea.vmem [#allocation15], %s923
        %p925 = pneg %p271
        %p926 = pneg %p268
        %s927 = sand.u32 %s45, 1
        %s928 = scalar_lea.sflag [#allocation16], %s927
        %s929 = sand.u32 %s284, 1
        %s930 = smul.addr %s929, 48
        %s931 = scalar_lea.vmem [#allocation17], %s930
        %p932 = pneg %p297
        %p933 = pneg %p294
        %s934 = sand.u32 %s45, 1
        %s935 = scalar_lea.sflag [#allocation19], %s934
        %s936 = sand.u32 %s310, 1
        %s937 = smul.addr %s936, 48
        %s938 = scalar_lea.vmem [#allocation18], %s937
        %p939 = pneg %p323
        %p940 = pneg %p320
        %s941 = sand.u32 %s45, 1
        %s942 = scalar_lea.sflag [#allocation19], %s941
        %s943 = sand.u32 %s336, 1
        %s944 = smul.addr %s943, 12
        %s945 = scalar_lea.vmem [#allocation20], %s944
        %p946 = pneg %p349
        %p947 = pneg %p346
        %s948 = sand.u32 %s45, 1
        %s949 = scalar_lea.sflag [#allocation22], %s948
        %s950 = sand.u32 %s362, 1
        %s951 = smul.addr %s950, 288
        %s952 = scalar_lea.vmem [#allocation21], %s951
        %p953 = pneg %p375
        %p954 = pneg %p372
        %s955 = sand.u32 %s45, 1
        %s956 = scalar_lea.sflag [#allocation22], %s955
        %s957 = sand.u32 %s388, 1
        %s958 = scalar_lea.vmem [#allocation23], %s957
        %p959 = pneg %p401
        %p960 = pneg %p398
        %p961 = pneg %p422
        %p962 = pneg %p419
        %p963 = pneg %p443
        %p964 = pneg %p440
        %p965 = pneg %p469
        %p966 = pneg %p466
        %p967 = scmp.lt.s32.totalorder %s49, 1
        %s968 = scalar_select %p967, %s49, 1
        %s969 = smul.addr %s968, 8
        %s970 = smul.addr %s969, 8
        %s971 = scalar_lea.vmem %s16, %s970
        %p972 = scmp.lt.s32.totalorder %s49, 1
        %s973 = scalar_select %p972, %s49, 1
        %s974 = smul.addr %s973, 8
        %s975 = smul.addr %s974, 4
        %s976 = scalar_lea.vmem %s0, %s975
        %p977 = scmp.lt.s32.totalorder %s49, 1
        %s978 = scalar_select %p977, %s49, 1
        %s979 = smul.addr %s978, 8
        %s980 = smul.addr %s979, 8
        %s981 = scalar_lea.vmem %s16, %s980
        %v983 = vld [vmem:[#allocation4] sm:$0xff]
        %v984 = vld [vmem:[#allocation4 + $0x8] sm:$0xff]
        %v985 = vld [vmem:[#allocation4 + $0x10] sm:$0xff]
        %v986 = vld [vmem:[#allocation4 + $0x18] sm:$0xff]
        %v987 = vld [vmem:[#allocation4 + $0x20] sm:$0xff]
        %v988 = vld [vmem:[#allocation4 + $0x28] sm:$0xff]
        %v989 = vld [vmem:[#allocation4 + $0x30] sm:$0xff]
        %v990 = vld [vmem:[#allocation4 + $0x38] sm:$0xff]
        %p991 = scmp.eq.s32.totalorder %s50, 0
        // Predicated region
        $region145: #{_lambda_.1} parent=83 // pred_check
          %p992 = pneg %p991
        $region146: #{_lambda_.1} parent=83 // pred_check_branch
          %994 = sbr.rel (%p992) target = $region148
        $region147: #{_lambda_.1} parent=83 // pred_region
          %v995 = vld [vmem:[%s976] sm:$0xf]
          %v996 = vld [vmem:[%s976 + $0x4] sm:$0xf]
          %v997 = vld [vmem:[%s976 + $0x8] sm:$0xf]
          %v998 = vld [vmem:[%s976 + $0xc] sm:$0xf]
          %v999 = vld [vmem:[%s976 + $0x10] sm:$0xf]
          %v1000 = vld [vmem:[%s976 + $0x14] sm:$0xf]
          %v1001 = vld [vmem:[%s976 + $0x18] sm:$0xf]
          %v1002 = vld [vmem:[%s976 + $0x1c] sm:$0xf]
          %v1003 = vunpack.c.l.bf16 %v995
          %v1004 = vunpack.c.l.bf16 %v996
          %v1005 = vunpack.c.l.bf16 %v997
          %v1006 = vunpack.c.l.bf16 %v998
          %v1007 = vunpack.c.l.bf16 %v999
          %v1008 = vunpack.c.l.bf16 %v1000
          %v1009 = vunpack.c.l.bf16 %v1001
          %v1010 = vunpack.c.l.bf16 %v1002
          %v1011 = vld [vmem:[#allocation6] sm:$0xf]
          %v1012 = vld [vmem:[#allocation6 + $0x4] sm:$0xf]
          %v1013 = vld [vmem:[#allocation6 + $0x8] sm:$0xf]
          %v1014 = vld [vmem:[#allocation6 + $0xc] sm:$0xf]
          %v1015 = vld [vmem:[#allocation6 + $0x10] sm:$0xf]
          %v1016 = vld [vmem:[#allocation6 + $0x14] sm:$0xf]
          %v1017 = vld [vmem:[#allocation6 + $0x18] sm:$0xf]
          %v1018 = vld [vmem:[#allocation6 + $0x1c] sm:$0xf]
          %v1019 = vld [vmem:[#allocation6 + $0x20] sm:$0xf]
          %v1020 = vld [vmem:[#allocation6 + $0x24] sm:$0xf]
          %v1021 = vld [vmem:[#allocation6 + $0x28] sm:$0xf]
          %v1022 = vld [vmem:[#allocation6 + $0x2c] sm:$0xf]
          %v1023 = vld [vmem:[#allocation6 + $0x30] sm:$0xf]
          %v1024 = vld [vmem:[#allocation6 + $0x34] sm:$0xf]
          %v1025 = vld [vmem:[#allocation6 + $0x38] sm:$0xf]
          %v1026 = vld [vmem:[#allocation6 + $0x3c] sm:$0xf]
          %v1027 = vld [vmem:[#allocation6 + $0x40] sm:$0xf]
          %v1028 = vld [vmem:[#allocation6 + $0x44] sm:$0xf]
          %v1029 = vld [vmem:[#allocation6 + $0x48] sm:$0xf]
          %v1030 = vld [vmem:[#allocation6 + $0x4c] sm:$0xf]
          %v1031 = vld [vmem:[#allocation6 + $0x50] sm:$0xf]
          %v1032 = vld [vmem:[#allocation6 + $0x54] sm:$0xf]
          %v1033 = vld [vmem:[#allocation6 + $0x58] sm:$0xf]
          %v1034 = vld [vmem:[#allocation6 + $0x5c] sm:$0xf]
          %v1035 = vld [vmem:[#allocation6 + $0x60] sm:$0xf]
          %v1036 = vld [vmem:[#allocation6 + $0x64] sm:$0xf]
          %v1037 = vld [vmem:[#allocation6 + $0x68] sm:$0xf]
          %v1038 = vld [vmem:[#allocation6 + $0x6c] sm:$0xf]
          %v1039 = vld [vmem:[#allocation6 + $0x70] sm:$0xf]
          %v1040 = vld [vmem:[#allocation6 + $0x74] sm:$0xf]
          %v1041 = vld [vmem:[#allocation6 + $0x78] sm:$0xf]
          %v1042 = vld [vmem:[#allocation6 + $0x7c] sm:$0xf]
          %v1043 = vld [vmem:[#allocation6 + $0x80] sm:$0xf]
          %v1044 = vld [vmem:[#allocation6 + $0x84] sm:$0xf]
          %v1045 = vld [vmem:[#allocation6 + $0x88] sm:$0xf]
          %v1046 = vld [vmem:[#allocation6 + $0x8c] sm:$0xf]
          %v1047 = vld [vmem:[#allocation6 + $0x90] sm:$0xf]
          %v1048 = vld [vmem:[#allocation6 + $0x94] sm:$0xf]
          %v1049 = vld [vmem:[#allocation6 + $0x98] sm:$0xf]
          %v1050 = vld [vmem:[#allocation6 + $0x9c] sm:$0xf]
          %v1051 = vld [vmem:[#allocation6 + $0xa0] sm:$0xf]
          %v1052 = vld [vmem:[#allocation6 + $0xa4] sm:$0xf]
          %v1053 = vld [vmem:[#allocation6 + $0xa8] sm:$0xf]
          %v1054 = vld [vmem:[#allocation6 + $0xac] sm:$0xf]
          %v1055 = vld [vmem:[#allocation6 + $0xb0] sm:$0xf]
          %v1056 = vld [vmem:[#allocation6 + $0xb4] sm:$0xf]
          %v1057 = vld [vmem:[#allocation6 + $0xb8] sm:$0xf]
          %v1058 = vld [vmem:[#allocation6 + $0xbc] sm:$0xf]
          %v1059 = vld [vmem:[#allocation6 + $0xc0] sm:$0xf]
          %v1060 = vld [vmem:[#allocation6 + $0xc4] sm:$0xf]
          %v1061 = vld [vmem:[#allocation6 + $0xc8] sm:$0xf]
          %v1062 = vld [vmem:[#allocation6 + $0xcc] sm:$0xf]
          %v1063 = vld [vmem:[#allocation6 + $0xd0] sm:$0xf]
          %v1064 = vld [vmem:[#allocation6 + $0xd4] sm:$0xf]
          %v1065 = vld [vmem:[#allocation6 + $0xd8] sm:$0xf]
          %v1066 = vld [vmem:[#allocation6 + $0xdc] sm:$0xf]
          %v1067 = vld [vmem:[#allocation6 + $0xe0] sm:$0xf]
          %v1068 = vld [vmem:[#allocation6 + $0xe4] sm:$0xf]
          %v1069 = vld [vmem:[#allocation6 + $0xe8] sm:$0xf]
          %v1070 = vld [vmem:[#allocation6 + $0xec] sm:$0xf]
          %v1071 = vld [vmem:[#allocation6 + $0xf0] sm:$0xf]
          %v1072 = vld [vmem:[#allocation6 + $0xf4] sm:$0xf]
          %v1073 = vld [vmem:[#allocation6 + $0xf8] sm:$0xf]
          %v1074 = vld [vmem:[#allocation6 + $0xfc] sm:$0xf]
          %v1075 = vld [vmem:[#allocation6 + $0x100] sm:$0xf]
          %v1076 = vld [vmem:[#allocation6 + $0x104] sm:$0xf]
          %v1077 = vld [vmem:[#allocation6 + $0x108] sm:$0xf]
          %v1078 = vld [vmem:[#allocation6 + $0x10c] sm:$0xf]
          %v1079 = vld [vmem:[#allocation6 + $0x110] sm:$0xf]
          %v1080 = vld [vmem:[#allocation6 + $0x114] sm:$0xf]
          %v1081 = vld [vmem:[#allocation6 + $0x118] sm:$0xf]
          %v1082 = vld [vmem:[#allocation6 + $0x11c] sm:$0xf]
          %v1083 = vld [vmem:[#allocation6 + $0x120] sm:$0xf]
          %v1084 = vld [vmem:[#allocation6 + $0x124] sm:$0xf]
          %v1085 = vld [vmem:[#allocation6 + $0x128] sm:$0xf]
          %v1086 = vld [vmem:[#allocation6 + $0x12c] sm:$0xf]
          %v1087 = vld [vmem:[#allocation6 + $0x130] sm:$0xf]
          %v1088 = vld [vmem:[#allocation6 + $0x134] sm:$0xf]
          %v1089 = vld [vmem:[#allocation6 + $0x138] sm:$0xf]
          %v1090 = vld [vmem:[#allocation6 + $0x13c] sm:$0xf]
          %v1091 = vld [vmem:[#allocation6 + $0x140] sm:$0xf]
          %v1092 = vld [vmem:[#allocation6 + $0x144] sm:$0xf]
          %v1093 = vld [vmem:[#allocation6 + $0x148] sm:$0xf]
          %v1094 = vld [vmem:[#allocation6 + $0x14c] sm:$0xf]
          %v1095 = vld [vmem:[#allocation6 + $0x150] sm:$0xf]
          %v1096 = vld [vmem:[#allocation6 + $0x154] sm:$0xf]
          %v1097 = vld [vmem:[#allocation6 + $0x158] sm:$0xf]
          %v1098 = vld [vmem:[#allocation6 + $0x15c] sm:$0xf]
          %v1099 = vld [vmem:[#allocation6 + $0x160] sm:$0xf]
          %v1100 = vld [vmem:[#allocation6 + $0x164] sm:$0xf]
          %v1101 = vld [vmem:[#allocation6 + $0x168] sm:$0xf]
          %v1102 = vld [vmem:[#allocation6 + $0x16c] sm:$0xf]
          %v1103 = vld [vmem:[#allocation6 + $0x170] sm:$0xf]
          %v1104 = vld [vmem:[#allocation6 + $0x174] sm:$0xf]
          %v1105 = vld [vmem:[#allocation6 + $0x178] sm:$0xf]
          %v1106 = vld [vmem:[#allocation6 + $0x17c] sm:$0xf]
          %v1107 = vld [vmem:[#allocation6 + $0x180] sm:$0xf]
          %v1108 = vld [vmem:[#allocation6 + $0x184] sm:$0xf]
          %v1109 = vld [vmem:[#allocation6 + $0x188] sm:$0xf]
          %v1110 = vld [vmem:[#allocation6 + $0x18c] sm:$0xf]
          %v1111 = vld [vmem:[#allocation6 + $0x190] sm:$0xf]
          %v1112 = vld [vmem:[#allocation6 + $0x194] sm:$0xf]
          %v1113 = vld [vmem:[#allocation6 + $0x198] sm:$0xf]
          %v1114 = vld [vmem:[#allocation6 + $0x19c] sm:$0xf]
          %v1115 = vld [vmem:[#allocation6 + $0x1a0] sm:$0xf]
          %v1116 = vld [vmem:[#allocation6 + $0x1a4] sm:$0xf]
          %v1117 = vld [vmem:[#allocation6 + $0x1a8] sm:$0xf]
          %v1118 = vld [vmem:[#allocation6 + $0x1ac] sm:$0xf]
          %v1119 = vld [vmem:[#allocation6 + $0x1b0] sm:$0xf]
          %v1120 = vld [vmem:[#allocation6 + $0x1b4] sm:$0xf]
          %v1121 = vld [vmem:[#allocation6 + $0x1b8] sm:$0xf]
          %v1122 = vld [vmem:[#allocation6 + $0x1bc] sm:$0xf]
          %v1123 = vld [vmem:[#allocation6 + $0x1c0] sm:$0xf]
          %v1124 = vld [vmem:[#allocation6 + $0x1c4] sm:$0xf]
          %v1125 = vld [vmem:[#allocation6 + $0x1c8] sm:$0xf]
          %v1126 = vld [vmem:[#allocation6 + $0x1cc] sm:$0xf]
          %v1127 = vld [vmem:[#allocation6 + $0x1d0] sm:$0xf]
          %v1128 = vld [vmem:[#allocation6 + $0x1d4] sm:$0xf]
          %v1129 = vld [vmem:[#allocation6 + $0x1d8] sm:$0xf]
          %v1130 = vld [vmem:[#allocation6 + $0x1dc] sm:$0xf]
          %v1131 = vld [vmem:[#allocation6 + $0x1e0] sm:$0xf]
          %v1132 = vld [vmem:[#allocation6 + $0x1e4] sm:$0xf]
          %v1133 = vld [vmem:[#allocation6 + $0x1e8] sm:$0xf]
          %v1134 = vld [vmem:[#allocation6 + $0x1ec] sm:$0xf]
          %v1135 = vld [vmem:[#allocation6 + $0x1f0] sm:$0xf]
          %v1136 = vld [vmem:[#allocation6 + $0x1f4] sm:$0xf]
          %v1137 = vld [vmem:[#allocation6 + $0x1f8] sm:$0xf]
          %v1138 = vld [vmem:[#allocation6 + $0x1fc] sm:$0xf]
          %v1139 = vld [vmem:[#allocation6 + $0x200] sm:$0xf]
          %v1140 = vld [vmem:[#allocation6 + $0x204] sm:$0xf]
          %v1141 = vld [vmem:[#allocation6 + $0x208] sm:$0xf]
          %v1142 = vld [vmem:[#allocation6 + $0x20c] sm:$0xf]
          %v1143 = vld [vmem:[#allocation6 + $0x210] sm:$0xf]
          %v1144 = vld [vmem:[#allocation6 + $0x214] sm:$0xf]
          %v1145 = vld [vmem:[#allocation6 + $0x218] sm:$0xf]
          %v1146 = vld [vmem:[#allocation6 + $0x21c] sm:$0xf]
          %v1147 = vld [vmem:[#allocation6 + $0x220] sm:$0xf]
          %v1148 = vld [vmem:[#allocation6 + $0x224] sm:$0xf]
          %v1149 = vld [vmem:[#allocation6 + $0x228] sm:$0xf]
          %v1150 = vld [vmem:[#allocation6 + $0x22c] sm:$0xf]
          %v1151 = vld [vmem:[#allocation6 + $0x230] sm:$0xf]
          %v1152 = vld [vmem:[#allocation6 + $0x234] sm:$0xf]
          %v1153 = vld [vmem:[#allocation6 + $0x238] sm:$0xf]
          %v1154 = vld [vmem:[#allocation6 + $0x23c] sm:$0xf]
          %v1155 = vld [vmem:[#allocation8] sm:$0x1]
          %v1156 = vrot.slane %v1003, 7
          %v1157 = vrot.slane %v1004, 7
          %v1158 = vrot.slane %v1005, 7
          %v1159 = vrot.slane %v1006, 7
          %v1160 = vrot.slane %v1007, 7
          %v1161 = vrot.slane %v1008, 7
          %v1162 = vrot.slane %v1009, 7
          %v1163 = vrot.slane %v1010, 7
          %v1164 = vlaneseq
          %v1165 = vshrl.u32 %v1164, 7
          %vm1166 = vcmp.lt.s32.totalorder %v1165, 1
          %v1167 = vsel %vm1166, %v1162, %v1163
          %v1168 = vsel %vm1166, %v1161, %v1162
          %v1169 = vsel %vm1166, %v1160, %v1161
          %v1170 = vsel %vm1166, %v1159, %v1160
          %v1171 = vsel %vm1166, %v1158, %v1159
          %v1172 = vsel %vm1166, %v1157, %v1158
          %v1173 = vsel %vm1166, %v1156, %v1157
          %v1174 = vsel %vm1166, %v1163, %v1156
          %1176 = vset.pattern.permute.xlu0 0
          %1177 = vperm.xlu0 %1176, %v983
          %v1178 = vpop.permute.xlu0 %1177
          %1181 = vset.pattern.permute.xlu0 0
          %1182 = vperm.xlu0 %1181, %v984
          %v1183 = vpop.permute.xlu0 %1182
          %1186 = vset.pattern.permute.xlu0 0
          %1187 = vperm.xlu0 %1186, %v985
          %v1188 = vpop.permute.xlu0 %1187
          %1191 = vset.pattern.permute.xlu0 0
          %1192 = vperm.xlu0 %1191, %v986
          %v1193 = vpop.permute.xlu0 %1192
          %1196 = vset.pattern.permute.xlu0 0
          %1197 = vperm.xlu0 %1196, %v987
          %v1198 = vpop.permute.xlu0 %1197
          %1201 = vset.pattern.permute.xlu0 0
          %1202 = vperm.xlu0 %1201, %v988
          %v1203 = vpop.permute.xlu0 %1202
          %1206 = vset.pattern.permute.xlu0 0
          %1207 = vperm.xlu0 %1206, %v989
          %v1208 = vpop.permute.xlu0 %1207
          %1211 = vset.pattern.permute.xlu0 0
          %1212 = vperm.xlu0 %1211, %v990
          %v1213 = vpop.permute.xlu0 %1212
          %v1215 = vmul.f32 %v1167, %v1178
          %v1216 = vmul.f32 %v1174, %v1183
          %v1217 = vmul.f32 %v1173, %v1188
          %v1218 = vmul.f32 %v1172, %v1193
          %v1219 = vmul.f32 %v1171, %v1198
          %v1220 = vmul.f32 %v1170, %v1203
          %v1221 = vmul.f32 %v1169, %v1208
          %v1222 = vmul.f32 %v1168, %v1213
          %1223 = vset.pattern.permute.xlu0 1
          %1224 = vperm.xlu0 %1223, %v983
          %v1225 = vpop.permute.xlu0 %1224
          %1227 = vset.pattern.permute.xlu0 1
          %1228 = vperm.xlu0 %1227, %v984
          %v1229 = vpop.permute.xlu0 %1228
          %1231 = vset.pattern.permute.xlu0 1
          %1232 = vperm.xlu0 %1231, %v985
          %v1233 = vpop.permute.xlu0 %1232
          %1235 = vset.pattern.permute.xlu0 1
          %1236 = vperm.xlu0 %1235, %v986
          %v1237 = vpop.permute.xlu0 %1236
          %1239 = vset.pattern.permute.xlu0 1
          %1240 = vperm.xlu0 %1239, %v987
          %v1241 = vpop.permute.xlu0 %1240
          %1243 = vset.pattern.permute.xlu0 1
          %1244 = vperm.xlu0 %1243, %v988
          %v1245 = vpop.permute.xlu0 %1244
          %1247 = vset.pattern.permute.xlu0 1
          %1248 = vperm.xlu0 %1247, %v989
          %v1249 = vpop.permute.xlu0 %1248
          %1251 = vset.pattern.permute.xlu0 1
          %1252 = vperm.xlu0 %1251, %v990
          %v1253 = vpop.permute.xlu0 %1252
          %v1255 = vmul.f32 %v1010, %v1225
          %v1256 = vmul.f32 %v1003, %v1229
          %v1257 = vmul.f32 %v1004, %v1233
          %v1258 = vmul.f32 %v1005, %v1237
          %v1259 = vmul.f32 %v1006, %v1241
          %v1260 = vmul.f32 %v1007, %v1245
          %v1261 = vmul.f32 %v1008, %v1249
          %v1262 = vmul.f32 %v1009, %v1253
          %v1263 = vrot.slane %v1003, 1
          %v1264 = vrot.slane %v1004, 1
          %v1265 = vrot.slane %v1005, 1
          %v1266 = vrot.slane %v1006, 1
          %v1267 = vrot.slane %v1007, 1
          %v1268 = vrot.slane %v1008, 1
          %v1269 = vrot.slane %v1009, 1
          %v1270 = vrot.slane %v1010, 1
          %vm1271 = vcmp.lt.s32.totalorder %v1165, 7
          %v1272 = vsel %vm1271, %v1269, %v1270
          %v1273 = vsel %vm1271, %v1268, %v1269
          %v1274 = vsel %vm1271, %v1267, %v1268
          %v1275 = vsel %vm1271, %v1266, %v1267
          %v1276 = vsel %vm1271, %v1265, %v1266
          %v1277 = vsel %vm1271, %v1264, %v1265
          %v1278 = vsel %vm1271, %v1263, %v1264
          %v1279 = vsel %vm1271, %v1270, %v1263
          %1280 = vset.pattern.permute.xlu0 2
          %1281 = vperm.xlu0 %1280, %v983
          %v1282 = vpop.permute.xlu0 %1281
          %1284 = vset.pattern.permute.xlu0 2
          %1285 = vperm.xlu0 %1284, %v984
          %v1286 = vpop.permute.xlu0 %1285
          %1288 = vset.pattern.permute.xlu0 2
          %1289 = vperm.xlu0 %1288, %v985
          %v1290 = vpop.permute.xlu0 %1289
          %1292 = vset.pattern.permute.xlu0 2
          %1293 = vperm.xlu0 %1292, %v986
          %v1294 = vpop.permute.xlu0 %1293
          %1296 = vset.pattern.permute.xlu0 2
          %1297 = vperm.xlu0 %1296, %v987
          %v1298 = vpop.permute.xlu0 %1297
          %1300 = vset.pattern.permute.xlu0 2
          %1301 = vperm.xlu0 %1300, %v988
          %v1302 = vpop.permute.xlu0 %1301
          %1304 = vset.pattern.permute.xlu0 2
          %1305 = vperm.xlu0 %1304, %v989
          %v1306 = vpop.permute.xlu0 %1305
          %1308 = vset.pattern.permute.xlu0 2
          %1309 = vperm.xlu0 %1308, %v990
          %v1310 = vpop.permute.xlu0 %1309
          %v1312 = vmul.f32 %v1279, %v1282
          %v1313 = vmul.f32 %v1278, %v1286
          %v1314 = vmul.f32 %v1277, %v1290
          %v1315 = vmul.f32 %v1276, %v1294
          %v1316 = vmul.f32 %v1275, %v1298
          %v1317 = vmul.f32 %v1274, %v1302
          %v1318 = vmul.f32 %v1273, %v1306
          %v1319 = vmul.f32 %v1272, %v1310
          %1320 = vset.pattern.permute.xlu0 3
          %1321 = vperm.xlu0 %1320, %v983
          %v1322 = vpop.permute.xlu0 %1321
          %1324 = vset.pattern.permute.xlu0 3
          %1325 = vperm.xlu0 %1324, %v984
          %v1326 = vpop.permute.xlu0 %1325
          %1328 = vset.pattern.permute.xlu0 3
          %1329 = vperm.xlu0 %1328, %v985
          %v1330 = vpop.permute.xlu0 %1329
          %1332 = vset.pattern.permute.xlu0 3
          %1333 = vperm.xlu0 %1332, %v986
          %v1334 = vpop.permute.xlu0 %1333
          %1336 = vset.pattern.permute.xlu0 3
          %1337 = vperm.xlu0 %1336, %v987
          %v1338 = vpop.permute.xlu0 %1337
          %1340 = vset.pattern.permute.xlu0 3
          %1341 = vperm.xlu0 %1340, %v988
          %v1342 = vpop.permute.xlu0 %1341
          %1344 = vset.pattern.permute.xlu0 3
          %1345 = vperm.xlu0 %1344, %v989
          %v1346 = vpop.permute.xlu0 %1345
          %1348 = vset.pattern.permute.xlu0 3
          %1349 = vperm.xlu0 %1348, %v990
          %v1350 = vpop.permute.xlu0 %1349
          %v1352 = vmul.f32 %v1174, %v1322
          %v1353 = vmul.f32 %v1173, %v1326
          %v1354 = vmul.f32 %v1172, %v1330
          %v1355 = vmul.f32 %v1171, %v1334
          %v1356 = vmul.f32 %v1170, %v1338
          %v1357 = vmul.f32 %v1169, %v1342
          %v1358 = vmul.f32 %v1168, %v1346
          %v1359 = vmul.f32 %v1167, %v1350
          %1360 = vset.pattern.permute.xlu0 5
          %1361 = vperm.xlu0 %1360, %v983
          %v1362 = vpop.permute.xlu0 %1361
          %1364 = vset.pattern.permute.xlu0 5
          %1365 = vperm.xlu0 %1364, %v984
          %v1366 = vpop.permute.xlu0 %1365
          %1368 = vset.pattern.permute.xlu0 5
          %1369 = vperm.xlu0 %1368, %v985
          %v1370 = vpop.permute.xlu0 %1369
          %1372 = vset.pattern.permute.xlu0 5
          %1373 = vperm.xlu0 %1372, %v986
          %v1374 = vpop.permute.xlu0 %1373
          %1376 = vset.pattern.permute.xlu0 5
          %1377 = vperm.xlu0 %1376, %v987
          %v1378 = vpop.permute.xlu0 %1377
          %1380 = vset.pattern.permute.xlu0 5
          %1381 = vperm.xlu0 %1380, %v988
          %v1382 = vpop.permute.xlu0 %1381
          %1384 = vset.pattern.permute.xlu0 5
          %1385 = vperm.xlu0 %1384, %v989
          %v1386 = vpop.permute.xlu0 %1385
          %1388 = vset.pattern.permute.xlu0 5
          %1389 = vperm.xlu0 %1388, %v990
          %v1390 = vpop.permute.xlu0 %1389
          %v1392 = vmul.f32 %v1278, %v1362
          %v1393 = vmul.f32 %v1277, %v1366
          %v1394 = vmul.f32 %v1276, %v1370
          %v1395 = vmul.f32 %v1275, %v1374
          %v1396 = vmul.f32 %v1274, %v1378
          %v1397 = vmul.f32 %v1273, %v1382
          %v1398 = vmul.f32 %v1272, %v1386
          %v1399 = vmul.f32 %v1279, %v1390
          %1400 = vset.pattern.permute.xlu0 6
          %1401 = vperm.xlu0 %1400, %v983
          %v1402 = vpop.permute.xlu0 %1401
          %1404 = vset.pattern.permute.xlu0 6
          %1405 = vperm.xlu0 %1404, %v984
          %v1406 = vpop.permute.xlu0 %1405
          %1408 = vset.pattern.permute.xlu0 6
          %1409 = vperm.xlu0 %1408, %v985
          %v1410 = vpop.permute.xlu0 %1409
          %1412 = vset.pattern.permute.xlu0 6
          %1413 = vperm.xlu0 %1412, %v986
          %v1414 = vpop.permute.xlu0 %1413
          %1416 = vset.pattern.permute.xlu0 6
          %1417 = vperm.xlu0 %1416, %v987
          %v1418 = vpop.permute.xlu0 %1417
          %1420 = vset.pattern.permute.xlu0 6
          %1421 = vperm.xlu0 %1420, %v988
          %v1422 = vpop.permute.xlu0 %1421
          %1424 = vset.pattern.permute.xlu0 6
          %1425 = vperm.xlu0 %1424, %v989
          %v1426 = vpop.permute.xlu0 %1425
          %1428 = vset.pattern.permute.xlu0 6
          %1429 = vperm.xlu0 %1428, %v990
          %v1430 = vpop.permute.xlu0 %1429
          %v1432 = vmul.f32 %v1173, %v1402
          %v1433 = vmul.f32 %v1172, %v1406
          %v1434 = vmul.f32 %v1171, %v1410
          %v1435 = vmul.f32 %v1170, %v1414
          %v1436 = vmul.f32 %v1169, %v1418
          %v1437 = vmul.f32 %v1168, %v1422
          %v1438 = vmul.f32 %v1167, %v1426
          %v1439 = vmul.f32 %v1174, %v1430
          %1440 = vset.pattern.permute.xlu0 7
          %1441 = vperm.xlu0 %1440, %v983
          %v1442 = vpop.permute.xlu0 %1441
          %1444 = vset.pattern.permute.xlu0 7
          %1445 = vperm.xlu0 %1444, %v984
          %v1446 = vpop.permute.xlu0 %1445
          %1448 = vset.pattern.permute.xlu0 7
          %1449 = vperm.xlu0 %1448, %v985
          %v1450 = vpop.permute.xlu0 %1449
          %1452 = vset.pattern.permute.xlu0 7
          %1453 = vperm.xlu0 %1452, %v986
          %v1454 = vpop.permute.xlu0 %1453
          %1456 = vset.pattern.permute.xlu0 7
          %1457 = vperm.xlu0 %1456, %v987
          %v1458 = vpop.permute.xlu0 %1457
          %1460 = vset.pattern.permute.xlu0 7
          %1461 = vperm.xlu0 %1460, %v988
          %v1462 = vpop.permute.xlu0 %1461
          %1464 = vset.pattern.permute.xlu0 7
          %1465 = vperm.xlu0 %1464, %v989
          %v1466 = vpop.permute.xlu0 %1465
          %1468 = vset.pattern.permute.xlu0 7
          %1469 = vperm.xlu0 %1468, %v990
          %v1470 = vpop.permute.xlu0 %1469
          %v1472 = vmul.f32 %v1004, %v1442
          %v1473 = vmul.f32 %v1005, %v1446
          %v1474 = vmul.f32 %v1006, %v1450
          %v1475 = vmul.f32 %v1007, %v1454
          %v1476 = vmul.f32 %v1008, %v1458
          %v1477 = vmul.f32 %v1009, %v1462
          %v1478 = vmul.f32 %v1010, %v1466
          %v1479 = vmul.f32 %v1003, %v1470
          %1480 = vset.pattern.permute.xlu0 8
          %1481 = vperm.xlu0 %1480, %v983
          %v1482 = vpop.permute.xlu0 %1481
          %1484 = vset.pattern.permute.xlu0 8
          %1485 = vperm.xlu0 %1484, %v984
          %v1486 = vpop.permute.xlu0 %1485
          %1488 = vset.pattern.permute.xlu0 8
          %1489 = vperm.xlu0 %1488, %v985
          %v1490 = vpop.permute.xlu0 %1489
          %1492 = vset.pattern.permute.xlu0 8
          %1493 = vperm.xlu0 %1492, %v986
          %v1494 = vpop.permute.xlu0 %1493
          %1496 = vset.pattern.permute.xlu0 8
          %1497 = vperm.xlu0 %1496, %v987
          %v1498 = vpop.permute.xlu0 %1497
          %1500 = vset.pattern.permute.xlu0 8
          %1501 = vperm.xlu0 %1500, %v988
          %v1502 = vpop.permute.xlu0 %1501
          %1504 = vset.pattern.permute.xlu0 8
          %1505 = vperm.xlu0 %1504, %v989
          %v1506 = vpop.permute.xlu0 %1505
          %1508 = vset.pattern.permute.xlu0 8
          %1509 = vperm.xlu0 %1508, %v990
          %v1510 = vpop.permute.xlu0 %1509
          %v1512 = vmul.f32 %v1277, %v1482
          %v1513 = vmul.f32 %v1276, %v1486
          %v1514 = vmul.f32 %v1275, %v1490
          %v1515 = vmul.f32 %v1274, %v1494
          %v1516 = vmul.f32 %v1273, %v1498
          %v1517 = vmul.f32 %v1272, %v1502
          %v1518 = vmul.f32 %v1279, %v1506
          %v1519 = vmul.f32 %v1278, %v1510
          %v1520 = vpack.c.bf16 %v1216, %v1215
          %v1521 = vpack.c.bf16 %v1256, %v1255
          %v1522 = vpack.c.bf16 %v1313, %v1312
          %v1523 = vpack.c.bf16 %v1353, %v1352
          %v1524 = vpack.c.bf16 %v1004, %v1003
          %v1525 = vpack.c.bf16 %v1393, %v1392
          %v1526 = vpack.c.bf16 %v1433, %v1432
          %v1527 = vpack.c.bf16 %v1473, %v1472
          %v1528 = vpack.c.bf16 %v1513, %v1512
          %v1529 = vpack.c.bf16 %v1218, %v1217
          %v1530 = vpack.c.bf16 %v1258, %v1257
          %v1531 = vpack.c.bf16 %v1315, %v1314
          %v1532 = vpack.c.bf16 %v1355, %v1354
          %v1533 = vpack.c.bf16 %v1006, %v1005
          %v1534 = vpack.c.bf16 %v1395, %v1394
          %v1535 = vpack.c.bf16 %v1435, %v1434
          %v1536 = vpack.c.bf16 %v1475, %v1474
          %v1537 = vpack.c.bf16 %v1515, %v1514
          %v1538 = vpack.c.bf16 %v1220, %v1219
          %v1539 = vpack.c.bf16 %v1260, %v1259
          %v1540 = vpack.c.bf16 %v1317, %v1316
          %v1541 = vpack.c.bf16 %v1357, %v1356
          %v1542 = vpack.c.bf16 %v1008, %v1007
          %v1543 = vpack.c.bf16 %v1397, %v1396
          %v1544 = vpack.c.bf16 %v1437, %v1436
          %v1545 = vpack.c.bf16 %v1477, %v1476
          %v1546 = vpack.c.bf16 %v1517, %v1516
          %v1547 = vpack.c.bf16 %v1222, %v1221
          %v1548 = vpack.c.bf16 %v1262, %v1261
          %v1549 = vpack.c.bf16 %v1319, %v1318
          %v1550 = vpack.c.bf16 %v1359, %v1358
          %v1551 = vpack.c.bf16 %v1010, %v1009
          %v1552 = vpack.c.bf16 %v1399, %v1398
          %v1553 = vpack.c.bf16 %v1439, %v1438
          %v1554 = vpack.c.bf16 %v1479, %v1478
          %v1555 = vpack.c.bf16 %v1519, %v1518
          %v1557 = vlaneseq
          %v1558 = vshrl.u32 %v1557, 7
          %v1559 = vsub.s32 0, %v1558
          %v1560 = vrot.slane %v1155, %v1559
          %v1706 = vunpack.c.l.b16 %v1011
          %v1707 = vunpack.c.l.b16 %v1012
          %v1708 = vunpack.c.l.b16 %v1013
          %v1709 = vunpack.c.l.b16 %v1014
          %v1710 = vunpack.c.l.b16 %v1015
          %v1711 = vunpack.c.l.b16 %v1016
          %v1712 = vunpack.c.l.b16 %v1017
          %v1713 = vunpack.c.l.b16 %v1018
          %v1714 = vunpack.c.l.b16 %v1019
          %v1715 = vunpack.c.l.b16 %v1020
          %v1716 = vunpack.c.l.b16 %v1021
          %v1717 = vunpack.c.l.b16 %v1022
          %v1718 = vunpack.c.l.b16 %v1023
          %v1719 = vunpack.c.l.b16 %v1024
          %v1720 = vunpack.c.l.b16 %v1025
          %v1721 = vunpack.c.l.b16 %v1026
          %v1722 = vunpack.c.l.b16 %v1027
          %v1723 = vunpack.c.l.b16 %v1028
          %v1724 = vunpack.c.l.b16 %v1029
          %v1725 = vunpack.c.l.b16 %v1030
          %v1726 = vunpack.c.l.b16 %v1031
          %v1727 = vunpack.c.l.b16 %v1032
          %v1728 = vunpack.c.l.b16 %v1033
          %v1729 = vunpack.c.l.b16 %v1034
          %v1730 = vunpack.c.l.b16 %v1035
          %v1731 = vunpack.c.l.b16 %v1036
          %v1732 = vunpack.c.l.b16 %v1037
          %v1733 = vunpack.c.l.b16 %v1038
          %v1734 = vunpack.c.l.b16 %v1039
          %v1735 = vunpack.c.l.b16 %v1040
          %v1736 = vunpack.c.l.b16 %v1041
          %v1737 = vunpack.c.l.b16 %v1042
          %v1738 = vunpack.c.l.b16 %v1043
          %v1739 = vunpack.c.l.b16 %v1044
          %v1740 = vunpack.c.l.b16 %v1045
          %v1741 = vunpack.c.l.b16 %v1046
          %v1742 = vunpack.c.l.b16 %v1047
          %v1743 = vunpack.c.l.b16 %v1048
          %v1744 = vunpack.c.l.b16 %v1049
          %v1745 = vunpack.c.l.b16 %v1050
          %v1746 = vunpack.c.l.b16 %v1051
          %v1747 = vunpack.c.l.b16 %v1052
          %v1748 = vunpack.c.l.b16 %v1053
          %v1749 = vunpack.c.l.b16 %v1054
          %v1750 = vunpack.c.l.b16 %v1055
          %v1751 = vunpack.c.l.b16 %v1056
          %v1752 = vunpack.c.l.b16 %v1057
          %v1753 = vunpack.c.l.b16 %v1058
          %v1754 = vunpack.c.l.b16 %v1059
          %v1755 = vunpack.c.l.b16 %v1060
          %v1756 = vunpack.c.l.b16 %v1061
          %v1757 = vunpack.c.l.b16 %v1062
          %v1758 = vunpack.c.l.b16 %v1063
          %v1759 = vunpack.c.l.b16 %v1064
          %v1760 = vunpack.c.l.b16 %v1065
          %v1761 = vunpack.c.l.b16 %v1066
          %v1762 = vunpack.c.l.b16 %v1067
          %v1763 = vunpack.c.l.b16 %v1068
          %v1764 = vunpack.c.l.b16 %v1069
          %v1765 = vunpack.c.l.b16 %v1070
          %v1766 = vunpack.c.l.b16 %v1071
          %v1767 = vunpack.c.l.b16 %v1072
          %v1768 = vunpack.c.l.b16 %v1073
          %v1769 = vunpack.c.l.b16 %v1074
          %v1770 = vunpack.c.l.b16 %v1075
          %v1771 = vunpack.c.l.b16 %v1076
          %v1772 = vunpack.c.l.b16 %v1077
          %v1773 = vunpack.c.l.b16 %v1078
          %v1774 = vunpack.c.l.b16 %v1079
          %v1775 = vunpack.c.l.b16 %v1080
          %v1776 = vunpack.c.l.b16 %v1081
          %v1777 = vunpack.c.l.b16 %v1082
          %v1778 = vunpack.c.l.b16 %v1083
          %v1779 = vunpack.c.l.b16 %v1084
          %v1780 = vunpack.c.l.b16 %v1085
          %v1781 = vunpack.c.l.b16 %v1086
          %v1782 = vunpack.c.l.b16 %v1087
          %v1783 = vunpack.c.l.b16 %v1088
          %v1784 = vunpack.c.l.b16 %v1089
          %v1785 = vunpack.c.l.b16 %v1090
          %v1786 = vunpack.c.l.b16 %v1091
          %v1787 = vunpack.c.l.b16 %v1092
          %v1788 = vunpack.c.l.b16 %v1093
          %v1789 = vunpack.c.l.b16 %v1094
          %v1790 = vunpack.c.l.b16 %v1095
          %v1791 = vunpack.c.l.b16 %v1096
          %v1792 = vunpack.c.l.b16 %v1097
          %v1793 = vunpack.c.l.b16 %v1098
          %v1794 = vunpack.c.l.b16 %v1099
          %v1795 = vunpack.c.l.b16 %v1100
          %v1796 = vunpack.c.l.b16 %v1101
          %v1797 = vunpack.c.l.b16 %v1102
          %v1798 = vunpack.c.l.b16 %v1103
          %v1799 = vunpack.c.l.b16 %v1104
          %v1800 = vunpack.c.l.b16 %v1105
          %v1801 = vunpack.c.l.b16 %v1106
          %v1802 = vunpack.c.l.b16 %v1107
          %v1803 = vunpack.c.l.b16 %v1108
          %v1804 = vunpack.c.l.b16 %v1109
          %v1805 = vunpack.c.l.b16 %v1110
          %v1806 = vunpack.c.l.b16 %v1111
          %v1807 = vunpack.c.l.b16 %v1112
          %v1808 = vunpack.c.l.b16 %v1113
          %v1809 = vunpack.c.l.b16 %v1114
          %v1810 = vunpack.c.l.b16 %v1115
          %v1811 = vunpack.c.l.b16 %v1116
          %v1812 = vunpack.c.l.b16 %v1117
          %v1813 = vunpack.c.l.b16 %v1118
          %v1814 = vunpack.c.l.b16 %v1119
          %v1815 = vunpack.c.l.b16 %v1120
          %v1816 = vunpack.c.l.b16 %v1121
          %v1817 = vunpack.c.l.b16 %v1122
          %v1818 = vunpack.c.l.b16 %v1123
          %v1819 = vunpack.c.l.b16 %v1124
          %v1820 = vunpack.c.l.b16 %v1125
          %v1821 = vunpack.c.l.b16 %v1126
          %v1822 = vunpack.c.l.b16 %v1127
          %v1823 = vunpack.c.l.b16 %v1128
          %v1824 = vunpack.c.l.b16 %v1129
          %v1825 = vunpack.c.l.b16 %v1130
          %v1826 = vunpack.c.l.b16 %v1131
          %v1827 = vunpack.c.l.b16 %v1132
          %v1828 = vunpack.c.l.b16 %v1133
          %v1829 = vunpack.c.l.b16 %v1134
          %v1830 = vunpack.c.l.b16 %v1135
          %v1831 = vunpack.c.l.b16 %v1136
          %v1832 = vunpack.c.l.b16 %v1137
          %v1833 = vunpack.c.l.b16 %v1138
          %v1834 = vunpack.c.l.b16 %v1139
          %v1835 = vunpack.c.l.b16 %v1140
          %v1836 = vunpack.c.l.b16 %v1141
          %v1837 = vunpack.c.l.b16 %v1142
          %v1838 = vunpack.c.l.b16 %v1143
          %v1839 = vunpack.c.l.b16 %v1144
          %v1840 = vunpack.c.l.b16 %v1145
          %v1841 = vunpack.c.l.b16 %v1146
          %v1842 = vunpack.c.l.b16 %v1147
          %v1843 = vunpack.c.l.b16 %v1148
          %v1844 = vunpack.c.l.b16 %v1149
          %v1845 = vunpack.c.l.b16 %v1150
          %v1846 = vunpack.c.l.b16 %v1151
          %v1847 = vunpack.c.l.b16 %v1152
          %v1848 = vunpack.c.l.b16 %v1153
          %v1849 = vunpack.c.l.b16 %v1154
          %v1850 = vpack.c.b16 %v1707, %v1706
          %v1851 = vpack.c.b16 %v1709, %v1708
          %v1852 = vpack.c.b16 %v1711, %v1710
          %v1853 = vpack.c.b16 %v1713, %v1712
          %v1854 = vpack.c.b16 %v1715, %v1714
          %v1855 = vpack.c.b16 %v1717, %v1716
          %v1856 = vpack.c.b16 %v1719, %v1718
          %v1857 = vpack.c.b16 %v1721, %v1720
          %v1858 = vpack.c.b16 %v1723, %v1722
          %v1859 = vpack.c.b16 %v1725, %v1724
          %v1860 = vpack.c.b16 %v1727, %v1726
          %v1861 = vpack.c.b16 %v1729, %v1728
          %v1862 = vpack.c.b16 %v1731, %v1730
          %v1863 = vpack.c.b16 %v1733, %v1732
          %v1864 = vpack.c.b16 %v1735, %v1734
          %v1865 = vpack.c.b16 %v1737, %v1736
          %v1866 = vpack.c.b16 %v1739, %v1738
          %v1867 = vpack.c.b16 %v1741, %v1740
          %v1868 = vpack.c.b16 %v1743, %v1742
          %v1869 = vpack.c.b16 %v1745, %v1744
          %v1870 = vpack.c.b16 %v1747, %v1746
          %v1871 = vpack.c.b16 %v1749, %v1748
          %v1872 = vpack.c.b16 %v1751, %v1750
          %v1873 = vpack.c.b16 %v1753, %v1752
          %v1874 = vpack.c.b16 %v1755, %v1754
          %v1875 = vpack.c.b16 %v1757, %v1756
          %v1876 = vpack.c.b16 %v1759, %v1758
          %v1877 = vpack.c.b16 %v1761, %v1760
          %v1878 = vpack.c.b16 %v1763, %v1762
          %v1879 = vpack.c.b16 %v1765, %v1764
          %v1880 = vpack.c.b16 %v1767, %v1766
          %v1881 = vpack.c.b16 %v1769, %v1768
          %v1882 = vpack.c.b16 %v1771, %v1770
          %v1883 = vpack.c.b16 %v1773, %v1772
          %v1884 = vpack.c.b16 %v1775, %v1774
          %v1885 = vpack.c.b16 %v1777, %v1776
          %v1886 = vpack.c.b16 %v1779, %v1778
          %v1887 = vpack.c.b16 %v1781, %v1780
          %v1888 = vpack.c.b16 %v1783, %v1782
          %v1889 = vpack.c.b16 %v1785, %v1784
          %v1890 = vpack.c.b16 %v1787, %v1786
          %v1891 = vpack.c.b16 %v1789, %v1788
          %v1892 = vpack.c.b16 %v1791, %v1790
          %v1893 = vpack.c.b16 %v1793, %v1792
          %v1894 = vpack.c.b16 %v1795, %v1794
          %v1895 = vpack.c.b16 %v1797, %v1796
          %v1896 = vpack.c.b16 %v1799, %v1798
          %v1897 = vpack.c.b16 %v1801, %v1800
          %v1898 = vpack.c.b16 %v1803, %v1802
          %v1899 = vpack.c.b16 %v1805, %v1804
          %v1900 = vpack.c.b16 %v1807, %v1806
          %v1901 = vpack.c.b16 %v1809, %v1808
          %v1902 = vpack.c.b16 %v1811, %v1810
          %v1903 = vpack.c.b16 %v1813, %v1812
          %v1904 = vpack.c.b16 %v1815, %v1814
          %v1905 = vpack.c.b16 %v1817, %v1816
          %v1906 = vpack.c.b16 %v1819, %v1818
          %v1907 = vpack.c.b16 %v1821, %v1820
          %v1908 = vpack.c.b16 %v1823, %v1822
          %v1909 = vpack.c.b16 %v1825, %v1824
          %v1910 = vpack.c.b16 %v1827, %v1826
          %v1911 = vpack.c.b16 %v1829, %v1828
          %v1912 = vpack.c.b16 %v1831, %v1830
          %v1913 = vpack.c.b16 %v1833, %v1832
          %v1914 = vpack.c.b16 %v1835, %v1834
          %v1915 = vpack.c.b16 %v1837, %v1836
          %v1916 = vpack.c.b16 %v1839, %v1838
          %v1917 = vpack.c.b16 %v1841, %v1840
          %v1918 = vpack.c.b16 %v1843, %v1842
          %v1919 = vpack.c.b16 %v1845, %v1844
          %v1920 = vpack.c.b16 %v1847, %v1846
          %v1921 = vpack.c.b16 %v1849, %v1848
          %1994 = vmatprep.subr.bf16.mxu0 0
          %1995 = vmatpush1.bf16.msra.mxu0 %v1857
          %1996 = vmatprep.subr.bf16.mxu0 0
          %1997 = vmatpush1.bf16.msra.mxu0 %v1856
          %1998 = vmatprep.subr.bf16.mxu0 0
          %1999 = vmatpush1.bf16.msra.mxu0 %v1855
          %2000 = vmatprep.subr.bf16.mxu0 0
          %2001 = vmatpush1.bf16.msra.mxu0 %v1854
          %2002 = vmatprep.subr.bf16.mxu0 0
          %2003 = vmatpush1.bf16.msra.mxu0 %v1853
          %2004 = vmatprep.subr.bf16.mxu0 0
          %2005 = vmatpush1.bf16.msra.mxu0 %v1852
          %2006 = vmatprep.subr.bf16.mxu0 0
          %2007 = vmatpush1.bf16.msra.mxu0 %v1851
          %2008 = vmatprep.subr.bf16.mxu0 0
          %2009 = vmatpush1.bf16.msra.mxu0 %v1850
          %2010 = vmatprep.subr.bf16.mxu0 0
          %2011 = vmatpush2.bf16.msra.mxu0 %v1865
          %2012 = vmatprep.subr.bf16.mxu0 0
          %2013 = vmatpush2.bf16.msra.mxu0 %v1864
          %2014 = vmatprep.subr.bf16.mxu0 0
          %2015 = vmatpush2.bf16.msra.mxu0 %v1863
          %2016 = vmatprep.subr.bf16.mxu0 0
          %2017 = vmatpush2.bf16.msra.mxu0 %v1862
          %2018 = vmatprep.subr.bf16.mxu0 0
          %2019 = vmatpush2.bf16.msra.mxu0 %v1861
          %2020 = vmatprep.subr.bf16.mxu0 0
          %2021 = vmatpush2.bf16.msra.mxu0 %v1860
          %2022 = vmatprep.subr.bf16.mxu0 0
          %2023 = vmatpush2.bf16.msra.mxu0 %v1859
          %2024 = vmatprep.subr.bf16.mxu0 0
          %2025 = vmatpush2.bf16.msra.mxu0 %v1858
          %2026 = vmatprep.mubr.bf16.mxu0 %v1521
          %2027 = vmatmul.mubr.bf16.gmra.mxu0 %v1520
          %v2028 = vpop.f32.mrf.mxu0
          %v2029 = vadd.f32 %v1560, %v2028
          %v2030 = vpop.f32.mrf.mxu0
          %v2031 = vpop.f32.mrf.mxu0
          %v2032 = vadd.f32 %v1560, %v2031
          %v2033 = vpop.f32.mrf.mxu0
          %2034 = vmatprep.mubr.bf16.mxu0 %v1530
          %2035 = vmatmul.mubr.bf16.gmra.mxu0 %v1529
          %v2036 = vpop.f32.mrf.mxu0
          %v2037 = vadd.f32 %v1560, %v2036
          %v2038 = vpop.f32.mrf.mxu0
          %v2039 = vpop.f32.mrf.mxu0
          %v2040 = vadd.f32 %v1560, %v2039
          %v2041 = vpop.f32.mrf.mxu0
          %2042 = vmatprep.mubr.bf16.mxu0 %v1539
          %2043 = vmatmul.mubr.bf16.gmra.mxu0 %v1538
          %v2044 = vpop.f32.mrf.mxu0
          %v2045 = vadd.f32 %v1560, %v2044
          %v2046 = vpop.f32.mrf.mxu0
          %v2047 = vpop.f32.mrf.mxu0
          %v2048 = vadd.f32 %v1560, %v2047
          %v2049 = vpop.f32.mrf.mxu0
          %2050 = vmatprep.mubr.bf16.mxu0 %v1548
          %2051 = vmatmul.mubr.bf16.gmra.mxu0 %v1547
          %v2052 = vpop.f32.mrf.mxu0
          %v2053 = vadd.f32 %v1560, %v2052
          %v2054 = vpop.f32.mrf.mxu0
          %v2055 = vpop.f32.mrf.mxu0
          %v2056 = vadd.f32 %v1560, %v2055
          %v2057 = vpop.f32.mrf.mxu0
          %2058 = vdwg.mxu0
          %2059 = vmatprep.subr.bf16.mxu0 0
          %2060 = vmatpush1.bf16.msra.mxu0 %v1873
          %2061 = vmatprep.subr.bf16.mxu0 0
          %2062 = vmatpush1.bf16.msra.mxu0 %v1872
          %2063 = vmatprep.subr.bf16.mxu0 0
          %2064 = vmatpush1.bf16.msra.mxu0 %v1871
          %2065 = vmatprep.subr.bf16.mxu0 0
          %2066 = vmatpush1.bf16.msra.mxu0 %v1870
          %2067 = vmatprep.subr.bf16.mxu0 0
          %2068 = vmatpush1.bf16.msra.mxu0 %v1869
          %2069 = vmatprep.subr.bf16.mxu0 0
          %2070 = vmatpush1.bf16.msra.mxu0 %v1868
          %2071 = vmatprep.subr.bf16.mxu0 0
          %2072 = vmatpush1.bf16.msra.mxu0 %v1867
          %2073 = vmatprep.subr.bf16.mxu0 0
          %2074 = vmatpush1.bf16.msra.mxu0 %v1866
          %2075 = vmatprep.subr.bf16.mxu0 0
          %2076 = vmatpush2.bf16.msra.mxu0 %v1881
          %2077 = vmatprep.subr.bf16.mxu0 0
          %2078 = vmatpush2.bf16.msra.mxu0 %v1880
          %2079 = vmatprep.subr.bf16.mxu0 0
          %2080 = vmatpush2.bf16.msra.mxu0 %v1879
          %2081 = vmatprep.subr.bf16.mxu0 0
          %2082 = vmatpush2.bf16.msra.mxu0 %v1878
          %2083 = vmatprep.subr.bf16.mxu0 0
          %2084 = vmatpush2.bf16.msra.mxu0 %v1877
          %2085 = vmatprep.subr.bf16.mxu0 0
          %2086 = vmatpush2.bf16.msra.mxu0 %v1876
          %2087 = vmatprep.subr.bf16.mxu0 0
          %2088 = vmatpush2.bf16.msra.mxu0 %v1875
          %2089 = vmatprep.subr.bf16.mxu0 0
          %2090 = vmatpush2.bf16.msra.mxu0 %v1874
          %2091 = vmatprep.mubr.bf16.mxu0 %v1523
          %2092 = vmatmul.mubr.bf16.gmra.mxu0 %v1522
          %v2093 = vpop.f32.mrf.mxu0
          %v2094 = vadd.f32 %v2029, %v2093
          %v2095 = vpop.f32.mrf.mxu0
          %v2096 = vpop.f32.mrf.mxu0
          %v2097 = vadd.f32 %v2032, %v2096
          %v2098 = vpop.f32.mrf.mxu0
          %2099 = vmatprep.mubr.bf16.mxu0 %v1532
          %2100 = vmatmul.mubr.bf16.gmra.mxu0 %v1531
          %v2101 = vpop.f32.mrf.mxu0
          %v2102 = vadd.f32 %v2037, %v2101
          %v2103 = vpop.f32.mrf.mxu0
          %v2104 = vpop.f32.mrf.mxu0
          %v2105 = vadd.f32 %v2040, %v2104
          %v2106 = vpop.f32.mrf.mxu0
          %2107 = vmatprep.mubr.bf16.mxu0 %v1541
          %2108 = vmatmul.mubr.bf16.gmra.mxu0 %v1540
          %v2109 = vpop.f32.mrf.mxu0
          %v2110 = vadd.f32 %v2045, %v2109
          %v2111 = vpop.f32.mrf.mxu0
          %v2112 = vpop.f32.mrf.mxu0
          %v2113 = vadd.f32 %v2048, %v2112
          %v2114 = vpop.f32.mrf.mxu0
          %2115 = vmatprep.mubr.bf16.mxu0 %v1550
          %2116 = vmatmul.mubr.bf16.gmra.mxu0 %v1549
          %v2117 = vpop.f32.mrf.mxu0
          %v2118 = vadd.f32 %v2053, %v2117
          %v2119 = vpop.f32.mrf.mxu0
          %v2120 = vpop.f32.mrf.mxu0
          %v2121 = vadd.f32 %v2056, %v2120
          %v2122 = vpop.f32.mrf.mxu0
          %2123 = vdwg.mxu0
          %2124 = vmatprep.subr.bf16.mxu0 0
          %2125 = vmatpush1.bf16.msra.mxu0 %v1889
          %2126 = vmatprep.subr.bf16.mxu0 0
          %2127 = vmatpush1.bf16.msra.mxu0 %v1888
          %2128 = vmatprep.subr.bf16.mxu0 0
          %2129 = vmatpush1.bf16.msra.mxu0 %v1887
          %2130 = vmatprep.subr.bf16.mxu0 0
          %2131 = vmatpush1.bf16.msra.mxu0 %v1886
          %2132 = vmatprep.subr.bf16.mxu0 0
          %2133 = vmatpush1.bf16.msra.mxu0 %v1885
          %2134 = vmatprep.subr.bf16.mxu0 0
          %2135 = vmatpush1.bf16.msra.mxu0 %v1884
          %2136 = vmatprep.subr.bf16.mxu0 0
          %2137 = vmatpush1.bf16.msra.mxu0 %v1883
          %2138 = vmatprep.subr.bf16.mxu0 0
          %2139 = vmatpush1.bf16.msra.mxu0 %v1882
          %2140 = vmatprep.subr.bf16.mxu0 0
          %2141 = vmatpush2.bf16.msra.mxu0 %v1897
          %2142 = vmatprep.subr.bf16.mxu0 0
          %2143 = vmatpush2.bf16.msra.mxu0 %v1896
          %2144 = vmatprep.subr.bf16.mxu0 0
          %2145 = vmatpush2.bf16.msra.mxu0 %v1895
          %2146 = vmatprep.subr.bf16.mxu0 0
          %2147 = vmatpush2.bf16.msra.mxu0 %v1894
          %2148 = vmatprep.subr.bf16.mxu0 0
          %2149 = vmatpush2.bf16.msra.mxu0 %v1893
          %2150 = vmatprep.subr.bf16.mxu0 0
          %2151 = vmatpush2.bf16.msra.mxu0 %v1892
          %2152 = vmatprep.subr.bf16.mxu0 0
          %2153 = vmatpush2.bf16.msra.mxu0 %v1891
          %2154 = vmatprep.subr.bf16.mxu0 0
          %2155 = vmatpush2.bf16.msra.mxu0 %v1890
          %2156 = vmatprep.mubr.bf16.mxu0 %v1525
          %2157 = vmatmul.mubr.bf16.gmra.mxu0 %v1524
          %v2158 = vpop.f32.mrf.mxu0
          %v2159 = vadd.f32 %v2094, %v2158
          %v2160 = vpop.f32.mrf.mxu0
          %v2161 = vpop.f32.mrf.mxu0
          %v2162 = vadd.f32 %v2097, %v2161
          %v2163 = vpop.f32.mrf.mxu0
          %2164 = vmatprep.mubr.bf16.mxu0 %v1534
          %2165 = vmatmul.mubr.bf16.gmra.mxu0 %v1533
          %v2166 = vpop.f32.mrf.mxu0
          %v2167 = vadd.f32 %v2102, %v2166
          %v2168 = vpop.f32.mrf.mxu0
          %v2169 = vpop.f32.mrf.mxu0
          %v2170 = vadd.f32 %v2105, %v2169
          %v2171 = vpop.f32.mrf.mxu0
          %2172 = vmatprep.mubr.bf16.mxu0 %v1543
          %2173 = vmatmul.mubr.bf16.gmra.mxu0 %v1542
          %v2174 = vpop.f32.mrf.mxu0
          %v2175 = vadd.f32 %v2110, %v2174
          %v2176 = vpop.f32.mrf.mxu0
          %v2177 = vpop.f32.mrf.mxu0
          %v2178 = vadd.f32 %v2113, %v2177
          %v2179 = vpop.f32.mrf.mxu0
          %2180 = vmatprep.mubr.bf16.mxu0 %v1552
          %2181 = vmatmul.mubr.bf16.gmra.mxu0 %v1551
          %v2182 = vpop.f32.mrf.mxu0
          %v2183 = vadd.f32 %v2118, %v2182
          %v2184 = vpop.f32.mrf.mxu0
          %v2185 = vpop.f32.mrf.mxu0
          %v2186 = vadd.f32 %v2121, %v2185
          %v2187 = vpop.f32.mrf.mxu0
          %2188 = vdwg.mxu0
          %2189 = vmatprep.subr.bf16.mxu0 0
          %2190 = vmatpush1.bf16.msra.mxu0 %v1905
          %2191 = vmatprep.subr.bf16.mxu0 0
          %2192 = vmatpush1.bf16.msra.mxu0 %v1904
          %2193 = vmatprep.subr.bf16.mxu0 0
          %2194 = vmatpush1.bf16.msra.mxu0 %v1903
          %2195 = vmatprep.subr.bf16.mxu0 0
          %2196 = vmatpush1.bf16.msra.mxu0 %v1902
          %2197 = vmatprep.subr.bf16.mxu0 0
          %2198 = vmatpush1.bf16.msra.mxu0 %v1901
          %2199 = vmatprep.subr.bf16.mxu0 0
          %2200 = vmatpush1.bf16.msra.mxu0 %v1900
          %2201 = vmatprep.subr.bf16.mxu0 0
          %2202 = vmatpush1.bf16.msra.mxu0 %v1899
          %2203 = vmatprep.subr.bf16.mxu0 0
          %2204 = vmatpush1.bf16.msra.mxu0 %v1898
          %2205 = vmatprep.subr.bf16.mxu0 0
          %2206 = vmatpush2.bf16.msra.mxu0 %v1913
          %2207 = vmatprep.subr.bf16.mxu0 0
          %2208 = vmatpush2.bf16.msra.mxu0 %v1912
          %2209 = vmatprep.subr.bf16.mxu0 0
          %2210 = vmatpush2.bf16.msra.mxu0 %v1911
          %2211 = vmatprep.subr.bf16.mxu0 0
          %2212 = vmatpush2.bf16.msra.mxu0 %v1910
          %2213 = vmatprep.subr.bf16.mxu0 0
          %2214 = vmatpush2.bf16.msra.mxu0 %v1909
          %2215 = vmatprep.subr.bf16.mxu0 0
          %2216 = vmatpush2.bf16.msra.mxu0 %v1908
          %2217 = vmatprep.subr.bf16.mxu0 0
          %2218 = vmatpush2.bf16.msra.mxu0 %v1907
          %2219 = vmatprep.subr.bf16.mxu0 0
          %2220 = vmatpush2.bf16.msra.mxu0 %v1906
          %2221 = vmatprep.mubr.bf16.mxu0 %v1527
          %2222 = vmatmul.mubr.bf16.gmra.mxu0 %v1526
          %v2223 = vpop.f32.mrf.mxu0
          %v2224 = vadd.f32 %v2159, %v2223
          %v2225 = vpop.f32.mrf.mxu0
          %v2226 = vpop.f32.mrf.mxu0
          %v2227 = vadd.f32 %v2162, %v2226
          %v2228 = vpop.f32.mrf.mxu0
          %2229 = vmatprep.mubr.bf16.mxu0 %v1536
          %2230 = vmatmul.mubr.bf16.gmra.mxu0 %v1535
          %v2231 = vpop.f32.mrf.mxu0
          %v2232 = vadd.f32 %v2167, %v2231
          %v2233 = vpop.f32.mrf.mxu0
          %v2234 = vpop.f32.mrf.mxu0
          %v2235 = vadd.f32 %v2170, %v2234
          %v2236 = vpop.f32.mrf.mxu0
          %2237 = vmatprep.mubr.bf16.mxu0 %v1545
          %2238 = vmatmul.mubr.bf16.gmra.mxu0 %v1544
          %v2239 = vpop.f32.mrf.mxu0
          %v2240 = vadd.f32 %v2175, %v2239
          %v2241 = vpop.f32.mrf.mxu0
          %v2242 = vpop.f32.mrf.mxu0
          %v2243 = vadd.f32 %v2178, %v2242
          %v2244 = vpop.f32.mrf.mxu0
          %2245 = vmatprep.mubr.bf16.mxu0 %v1554
          %2246 = vmatmul.mubr.bf16.gmra.mxu0 %v1553
          %v2247 = vpop.f32.mrf.mxu0
          %v2248 = vadd.f32 %v2183, %v2247
          %v2249 = vpop.f32.mrf.mxu0
          %v2250 = vpop.f32.mrf.mxu0
          %v2251 = vadd.f32 %v2186, %v2250
          %v2252 = vpop.f32.mrf.mxu0
          %2253 = vdwg.mxu0
          %2254 = vmatprep.subr.bf16.mxu0 0
          %2255 = vmatpush1.bf16.msra.mxu0 %v1921
          %2256 = vmatprep.subr.bf16.mxu0 0
          %2257 = vmatpush1.bf16.msra.mxu0 %v1920
          %2258 = vmatprep.subr.bf16.mxu0 0
          %2259 = vmatpush1.bf16.msra.mxu0 %v1919
          %2260 = vmatprep.subr.bf16.mxu0 0
          %2261 = vmatpush1.bf16.msra.mxu0 %v1918
          %2262 = vmatprep.subr.bf16.mxu0 0
          %2263 = vmatpush1.bf16.msra.mxu0 %v1917
          %2264 = vmatprep.subr.bf16.mxu0 0
          %2265 = vmatpush1.bf16.msra.mxu0 %v1916
          %2266 = vmatprep.subr.bf16.mxu0 0
          %2267 = vmatpush1.bf16.msra.mxu0 %v1915
          %2268 = vmatprep.subr.bf16.mxu0 0
          %2269 = vmatpush1.bf16.msra.mxu0 %v1914
          %2270 = vmatprep.subr.bf16.mxu0 0
          %2271 = vmatpush2.bf16.msra.mxu0 0
          %2272 = vmatprep.subr.bf16.mxu0 0
          %2273 = vmatpush2.bf16.msra.mxu0 0
          %2274 = vmatprep.subr.bf16.mxu0 0
          %2275 = vmatpush2.bf16.msra.mxu0 0
          %2276 = vmatprep.subr.bf16.mxu0 0
          %2277 = vmatpush2.bf16.msra.mxu0 0
          %2278 = vmatprep.subr.bf16.mxu0 0
          %2279 = vmatpush2.bf16.msra.mxu0 0
          %2280 = vmatprep.subr.bf16.mxu0 0
          %2281 = vmatpush2.bf16.msra.mxu0 0
          %2282 = vmatprep.subr.bf16.mxu0 0
          %2283 = vmatpush2.bf16.msra.mxu0 0
          %2284 = vmatprep.subr.bf16.mxu0 0
          %2285 = vmatpush2.bf16.msra.mxu0 0
          %2286 = vmatprep.mubr.bf16.mxu0 0
          %2287 = vmatmul.mubr.bf16.gmra.mxu0 %v1528
          %v2288 = vpop.f32.mrf.mxu0
          %v2289 = vadd.f32 %v2224, %v2288
          %v2290 = vpop.f32.mrf.mxu0
          %v2291 = vpop.f32.mrf.mxu0
          %v2292 = vadd.f32 %v2227, %v2291
          %v2293 = vpop.f32.mrf.mxu0
          %2294 = vmatprep.mubr.bf16.mxu0 0
          %2295 = vmatmul.mubr.bf16.gmra.mxu0 %v1537
          %v2296 = vpop.f32.mrf.mxu0
          %v2297 = vadd.f32 %v2232, %v2296
          %v2298 = vpop.f32.mrf.mxu0
          %v2299 = vpop.f32.mrf.mxu0
          %v2300 = vadd.f32 %v2235, %v2299
          %v2301 = vpop.f32.mrf.mxu0
          %2302 = vmatprep.mubr.bf16.mxu0 0
          %2303 = vmatmul.mubr.bf16.gmra.mxu0 %v1546
          %v2304 = vpop.f32.mrf.mxu0
          %v2305 = vadd.f32 %v2240, %v2304
          %v2306 = vpop.f32.mrf.mxu0
          %v2307 = vpop.f32.mrf.mxu0
          %v2308 = vadd.f32 %v2243, %v2307
          %v2309 = vpop.f32.mrf.mxu0
          %2310 = vmatprep.mubr.bf16.mxu0 0
          %2311 = vmatmul.mubr.bf16.gmra.mxu0 %v1555
          %v2312 = vpop.f32.mrf.mxu0
          %v2313 = vadd.f32 %v2248, %v2312
          %v2314 = vpop.f32.mrf.mxu0
          %v2315 = vpop.f32.mrf.mxu0
          %v2316 = vadd.f32 %v2251, %v2315
          %v2317 = vpop.f32.mrf.mxu0
          %2318 = vdwg.mxu0
          %vm2319 = vcmask 523264
          %2320 = vst.msk [vmem:[#allocation3] sm:$0xff] %vm2319, %v2289
          %2321 = vst.msk [vmem:[#allocation3 + $0x8] sm:$0xff] %vm2319, %v2292
          %2322 = vst.msk [vmem:[#allocation3 + $0x10] sm:$0xff] %vm2319, %v2297
          %2323 = vst.msk [vmem:[#allocation3 + $0x18] sm:$0xff] %vm2319, %v2300
          %2324 = vst.msk [vmem:[#allocation3 + $0x20] sm:$0xff] %vm2319, %v2305
          %2325 = vst.msk [vmem:[#allocation3 + $0x28] sm:$0xff] %vm2319, %v2308
          %2326 = vst.msk [vmem:[#allocation3 + $0x30] sm:$0xff] %vm2319, %v2313
          %2327 = vst.msk [vmem:[#allocation3 + $0x38] sm:$0xff] %vm2319, %v2316
          %2328 = vst.msk [vmem:[#allocation2] sm:$0xff] %vm2319, %v2289
          %2329 = vst.msk [vmem:[#allocation2 + $0x8] sm:$0xff] %vm2319, %v2292
          %2330 = vst.msk [vmem:[#allocation2 + $0x10] sm:$0xff] %vm2319, %v2297
          %2331 = vst.msk [vmem:[#allocation2 + $0x18] sm:$0xff] %vm2319, %v2300
          %2332 = vst.msk [vmem:[#allocation2 + $0x20] sm:$0xff] %vm2319, %v2305
          %2333 = vst.msk [vmem:[#allocation2 + $0x28] sm:$0xff] %vm2319, %v2308
          %2334 = vst.msk [vmem:[#allocation2 + $0x30] sm:$0xff] %vm2319, %v2313
          %2335 = vst.msk [vmem:[#allocation2 + $0x38] sm:$0xff] %vm2319, %v2316
        $region148: #{_lambda_.1} parent=83 // pred_fallthru
          _
        %v2336 = vld [vmem:[#allocation2] sm:$0xff]
        %v2337 = vld [vmem:[#allocation2 + $0x8] sm:$0xff]
        %v2338 = vld [vmem:[#allocation2 + $0x10] sm:$0xff]
        %v2339 = vld [vmem:[#allocation2 + $0x18] sm:$0xff]
        %v2340 = vld [vmem:[#allocation2 + $0x20] sm:$0xff]
        %v2341 = vld [vmem:[#allocation2 + $0x28] sm:$0xff]
        %v2342 = vld [vmem:[#allocation2 + $0x30] sm:$0xff]
        %v2343 = vld [vmem:[#allocation2 + $0x38] sm:$0xff]
        loop: start=0, step=1, limit=12
        $region149: #{_lambda_.1} parent=83 // loop_pre_header
          _
        $region150: #{_lambda_.1} parent=83 // loop_header
          %s2345 = sphi 0, %s2349
          %p2346 = scmp.ge.s32.totalorder %s2345, 12
          %v2350 = vphi %v2336, %v4285
          %v2351 = vphi %v2337, %v4286
          %v2352 = vphi %v2338, %v4287
          %v2353 = vphi %v2339, %v4288
          %v2354 = vphi %v2340, %v4289
          %v2355 = vphi %v2341, %v4290
          %v2356 = vphi %v2342, %v4291
          %v2357 = vphi %v2343, %v4292
        $region151: #{_lambda_.1} parent=83 // loop_header_branch
          %2348 = sbr.rel (%p2346) target = $region155
        $region152: #{_lambda_.1} parent=83 // loop_body
          %s2358 = smul.u32 %s2345, 72
          %s2359 = smul.addr %s2358, 4
          %s2360 = scalar_lea.vmem %s786, %s2359 [#allocation9]
          %v2361 = vld [vmem:[%s2360] sm:$0xf]
          %v2362 = vld [vmem:[%s2360 + $0x4] sm:$0xf]
          %v2363 = vld [vmem:[%s2360 + $0x8] sm:$0xf]
          %v2364 = vld [vmem:[%s2360 + $0xc] sm:$0xf]
          %v2365 = vld [vmem:[%s2360 + $0x10] sm:$0xf]
          %v2366 = vld [vmem:[%s2360 + $0x14] sm:$0xf]
          %v2367 = vld [vmem:[%s2360 + $0x18] sm:$0xf]
          %v2368 = vld [vmem:[%s2360 + $0x1c] sm:$0xf]
          %v2369 = vld [vmem:[%s2360 + $0x20] sm:$0xf]
          %v2370 = vld [vmem:[%s2360 + $0x24] sm:$0xf]
          %v2371 = vld [vmem:[%s2360 + $0x28] sm:$0xf]
          %v2372 = vld [vmem:[%s2360 + $0x2c] sm:$0xf]
          %v2373 = vld [vmem:[%s2360 + $0x30] sm:$0xf]
          %v2374 = vld [vmem:[%s2360 + $0x34] sm:$0xf]
          %v2375 = vld [vmem:[%s2360 + $0x38] sm:$0xf]
          %v2376 = vld [vmem:[%s2360 + $0x3c] sm:$0xf]
          %v2377 = vld [vmem:[%s2360 + $0x40] sm:$0xf]
          %v2378 = vld [vmem:[%s2360 + $0x44] sm:$0xf]
          %v2379 = vld [vmem:[%s2360 + $0x48] sm:$0xf]
          %v2380 = vld [vmem:[%s2360 + $0x4c] sm:$0xf]
          %v2381 = vld [vmem:[%s2360 + $0x50] sm:$0xf]
          %v2382 = vld [vmem:[%s2360 + $0x54] sm:$0xf]
          %v2383 = vld [vmem:[%s2360 + $0x58] sm:$0xf]
          %v2384 = vld [vmem:[%s2360 + $0x5c] sm:$0xf]
          %v2385 = vld [vmem:[%s2360 + $0x60] sm:$0xf]
          %v2386 = vld [vmem:[%s2360 + $0x64] sm:$0xf]
          %v2387 = vld [vmem:[%s2360 + $0x68] sm:$0xf]
          %v2388 = vld [vmem:[%s2360 + $0x6c] sm:$0xf]
          %v2389 = vld [vmem:[%s2360 + $0x70] sm:$0xf]
          %v2390 = vld [vmem:[%s2360 + $0x74] sm:$0xf]
          %v2391 = vld [vmem:[%s2360 + $0x78] sm:$0xf]
          %v2392 = vld [vmem:[%s2360 + $0x7c] sm:$0xf]
          %v2393 = vld [vmem:[%s2360 + $0x80] sm:$0xf]
          %v2394 = vld [vmem:[%s2360 + $0x84] sm:$0xf]
          %v2395 = vld [vmem:[%s2360 + $0x88] sm:$0xf]
          %v2396 = vld [vmem:[%s2360 + $0x8c] sm:$0xf]
          %v2397 = vld [vmem:[%s2360 + $0x90] sm:$0xf]
          %v2398 = vld [vmem:[%s2360 + $0x94] sm:$0xf]
          %v2399 = vld [vmem:[%s2360 + $0x98] sm:$0xf]
          %v2400 = vld [vmem:[%s2360 + $0x9c] sm:$0xf]
          %v2401 = vld [vmem:[%s2360 + $0xa0] sm:$0xf]
          %v2402 = vld [vmem:[%s2360 + $0xa4] sm:$0xf]
          %v2403 = vld [vmem:[%s2360 + $0xa8] sm:$0xf]
          %v2404 = vld [vmem:[%s2360 + $0xac] sm:$0xf]
          %v2405 = vld [vmem:[%s2360 + $0xb0] sm:$0xf]
          %v2406 = vld [vmem:[%s2360 + $0xb4] sm:$0xf]
          %v2407 = vld [vmem:[%s2360 + $0xb8] sm:$0xf]
          %v2408 = vld [vmem:[%s2360 + $0xbc] sm:$0xf]
          %v2409 = vld [vmem:[%s2360 + $0xc0] sm:$0xf]
          %v2410 = vld [vmem:[%s2360 + $0xc4] sm:$0xf]
          %v2411 = vld [vmem:[%s2360 + $0xc8] sm:$0xf]
          %v2412 = vld [vmem:[%s2360 + $0xcc] sm:$0xf]
          %v2413 = vld [vmem:[%s2360 + $0xd0] sm:$0xf]
          %v2414 = vld [vmem:[%s2360 + $0xd4] sm:$0xf]
          %v2415 = vld [vmem:[%s2360 + $0xd8] sm:$0xf]
          %v2416 = vld [vmem:[%s2360 + $0xdc] sm:$0xf]
          %v2417 = vld [vmem:[%s2360 + $0xe0] sm:$0xf]
          %v2418 = vld [vmem:[%s2360 + $0xe4] sm:$0xf]
          %v2419 = vld [vmem:[%s2360 + $0xe8] sm:$0xf]
          %v2420 = vld [vmem:[%s2360 + $0xec] sm:$0xf]
          %v2421 = vld [vmem:[%s2360 + $0xf0] sm:$0xf]
          %v2422 = vld [vmem:[%s2360 + $0xf4] sm:$0xf]
          %v2423 = vld [vmem:[%s2360 + $0xf8] sm:$0xf]
          %v2424 = vld [vmem:[%s2360 + $0xfc] sm:$0xf]
          %v2425 = vld [vmem:[%s2360 + $0x100] sm:$0xf]
          %v2426 = vld [vmem:[%s2360 + $0x104] sm:$0xf]
          %v2427 = vld [vmem:[%s2360 + $0x108] sm:$0xf]
          %v2428 = vld [vmem:[%s2360 + $0x10c] sm:$0xf]
          %v2429 = vld [vmem:[%s2360 + $0x110] sm:$0xf]
          %v2430 = vld [vmem:[%s2360 + $0x114] sm:$0xf]
          %v2431 = vld [vmem:[%s2360 + $0x118] sm:$0xf]
          %v2432 = vld [vmem:[%s2360 + $0x11c] sm:$0xf]
          %s2433 = scalar_lea.vmem %s795, %s2345 [#allocation11]
          %v2434 = vld [vmem:[%s2433] sm:$0x1]
          %v2435 = vrot.slane %v2350, 7
          %v2436 = vrot.slane %v2351, 7
          %v2437 = vrot.slane %v2352, 7
          %v2438 = vrot.slane %v2353, 7
          %v2439 = vrot.slane %v2354, 7
          %v2440 = vrot.slane %v2355, 7
          %v2441 = vrot.slane %v2356, 7
          %v2442 = vrot.slane %v2357, 7
          %v2443 = vlaneseq
          %v2444 = vshrl.u32 %v2443, 7
          %vm2445 = vcmp.lt.s32.totalorder %v2444, 1
          %v2446 = vsel %vm2445, %v2441, %v2442
          %v2447 = vsel %vm2445, %v2440, %v2441
          %v2448 = vsel %vm2445, %v2439, %v2440
          %v2449 = vsel %vm2445, %v2438, %v2439
          %v2450 = vsel %vm2445, %v2437, %v2438
          %v2451 = vsel %vm2445, %v2436, %v2437
          %v2452 = vsel %vm2445, %v2435, %v2436
          %v2453 = vsel %vm2445, %v2442, %v2435
          %2455 = vset.pattern.permute.xlu0 0
          %2456 = vperm.xlu0 %2455, %v983
          %v2457 = vpop.permute.xlu0 %2456
          %2460 = vset.pattern.permute.xlu0 0
          %2461 = vperm.xlu0 %2460, %v984
          %v2462 = vpop.permute.xlu0 %2461
          %2465 = vset.pattern.permute.xlu0 0
          %2466 = vperm.xlu0 %2465, %v985
          %v2467 = vpop.permute.xlu0 %2466
          %2470 = vset.pattern.permute.xlu0 0
          %2471 = vperm.xlu0 %2470, %v986
          %v2472 = vpop.permute.xlu0 %2471
          %2475 = vset.pattern.permute.xlu0 0
          %2476 = vperm.xlu0 %2475, %v987
          %v2477 = vpop.permute.xlu0 %2476
          %2480 = vset.pattern.permute.xlu0 0
          %2481 = vperm.xlu0 %2480, %v988
          %v2482 = vpop.permute.xlu0 %2481
          %2485 = vset.pattern.permute.xlu0 0
          %2486 = vperm.xlu0 %2485, %v989
          %v2487 = vpop.permute.xlu0 %2486
          %2490 = vset.pattern.permute.xlu0 0
          %2491 = vperm.xlu0 %2490, %v990
          %v2492 = vpop.permute.xlu0 %2491
          %v2494 = vmul.f32 %v2446, %v2457
          %v2495 = vmul.f32 %v2453, %v2462
          %v2496 = vmul.f32 %v2452, %v2467
          %v2497 = vmul.f32 %v2451, %v2472
          %v2498 = vmul.f32 %v2450, %v2477
          %v2499 = vmul.f32 %v2449, %v2482
          %v2500 = vmul.f32 %v2448, %v2487
          %v2501 = vmul.f32 %v2447, %v2492
          %2502 = vset.pattern.permute.xlu0 1
          %2503 = vperm.xlu0 %2502, %v983
          %v2504 = vpop.permute.xlu0 %2503
          %2506 = vset.pattern.permute.xlu0 1
          %2507 = vperm.xlu0 %2506, %v984
          %v2508 = vpop.permute.xlu0 %2507
          %2510 = vset.pattern.permute.xlu0 1
          %2511 = vperm.xlu0 %2510, %v985
          %v2512 = vpop.permute.xlu0 %2511
          %2514 = vset.pattern.permute.xlu0 1
          %2515 = vperm.xlu0 %2514, %v986
          %v2516 = vpop.permute.xlu0 %2515
          %2518 = vset.pattern.permute.xlu0 1
          %2519 = vperm.xlu0 %2518, %v987
          %v2520 = vpop.permute.xlu0 %2519
          %2522 = vset.pattern.permute.xlu0 1
          %2523 = vperm.xlu0 %2522, %v988
          %v2524 = vpop.permute.xlu0 %2523
          %2526 = vset.pattern.permute.xlu0 1
          %2527 = vperm.xlu0 %2526, %v989
          %v2528 = vpop.permute.xlu0 %2527
          %2530 = vset.pattern.permute.xlu0 1
          %2531 = vperm.xlu0 %2530, %v990
          %v2532 = vpop.permute.xlu0 %2531
          %v2534 = vmul.f32 %v2357, %v2504
          %v2535 = vmul.f32 %v2350, %v2508
          %v2536 = vmul.f32 %v2351, %v2512
          %v2537 = vmul.f32 %v2352, %v2516
          %v2538 = vmul.f32 %v2353, %v2520
          %v2539 = vmul.f32 %v2354, %v2524
          %v2540 = vmul.f32 %v2355, %v2528
          %v2541 = vmul.f32 %v2356, %v2532
          %v2542 = vrot.slane %v2350, 1
          %v2543 = vrot.slane %v2351, 1
          %v2544 = vrot.slane %v2352, 1
          %v2545 = vrot.slane %v2353, 1
          %v2546 = vrot.slane %v2354, 1
          %v2547 = vrot.slane %v2355, 1
          %v2548 = vrot.slane %v2356, 1
          %v2549 = vrot.slane %v2357, 1
          %vm2550 = vcmp.lt.s32.totalorder %v2444, 7
          %v2551 = vsel %vm2550, %v2548, %v2549
          %v2552 = vsel %vm2550, %v2547, %v2548
          %v2553 = vsel %vm2550, %v2546, %v2547
          %v2554 = vsel %vm2550, %v2545, %v2546
          %v2555 = vsel %vm2550, %v2544, %v2545
          %v2556 = vsel %vm2550, %v2543, %v2544
          %v2557 = vsel %vm2550, %v2542, %v2543
          %v2558 = vsel %vm2550, %v2549, %v2542
          %2559 = vset.pattern.permute.xlu0 2
          %2560 = vperm.xlu0 %2559, %v983
          %v2561 = vpop.permute.xlu0 %2560
          %2563 = vset.pattern.permute.xlu0 2
          %2564 = vperm.xlu0 %2563, %v984
          %v2565 = vpop.permute.xlu0 %2564
          %2567 = vset.pattern.permute.xlu0 2
          %2568 = vperm.xlu0 %2567, %v985
          %v2569 = vpop.permute.xlu0 %2568
          %2571 = vset.pattern.permute.xlu0 2
          %2572 = vperm.xlu0 %2571, %v986
          %v2573 = vpop.permute.xlu0 %2572
          %2575 = vset.pattern.permute.xlu0 2
          %2576 = vperm.xlu0 %2575, %v987
          %v2577 = vpop.permute.xlu0 %2576
          %2579 = vset.pattern.permute.xlu0 2
          %2580 = vperm.xlu0 %2579, %v988
          %v2581 = vpop.permute.xlu0 %2580
          %2583 = vset.pattern.permute.xlu0 2
          %2584 = vperm.xlu0 %2583, %v989
          %v2585 = vpop.permute.xlu0 %2584
          %2587 = vset.pattern.permute.xlu0 2
          %2588 = vperm.xlu0 %2587, %v990
          %v2589 = vpop.permute.xlu0 %2588
          %v2591 = vmul.f32 %v2558, %v2561
          %v2592 = vmul.f32 %v2557, %v2565
          %v2593 = vmul.f32 %v2556, %v2569
          %v2594 = vmul.f32 %v2555, %v2573
          %v2595 = vmul.f32 %v2554, %v2577
          %v2596 = vmul.f32 %v2553, %v2581
          %v2597 = vmul.f32 %v2552, %v2585
          %v2598 = vmul.f32 %v2551, %v2589
          %2599 = vset.pattern.permute.xlu0 3
          %2600 = vperm.xlu0 %2599, %v983
          %v2601 = vpop.permute.xlu0 %2600
          %2603 = vset.pattern.permute.xlu0 3
          %2604 = vperm.xlu0 %2603, %v984
          %v2605 = vpop.permute.xlu0 %2604
          %2607 = vset.pattern.permute.xlu0 3
          %2608 = vperm.xlu0 %2607, %v985
          %v2609 = vpop.permute.xlu0 %2608
          %2611 = vset.pattern.permute.xlu0 3
          %2612 = vperm.xlu0 %2611, %v986
          %v2613 = vpop.permute.xlu0 %2612
          %2615 = vset.pattern.permute.xlu0 3
          %2616 = vperm.xlu0 %2615, %v987
          %v2617 = vpop.permute.xlu0 %2616
          %2619 = vset.pattern.permute.xlu0 3
          %2620 = vperm.xlu0 %2619, %v988
          %v2621 = vpop.permute.xlu0 %2620
          %2623 = vset.pattern.permute.xlu0 3
          %2624 = vperm.xlu0 %2623, %v989
          %v2625 = vpop.permute.xlu0 %2624
          %2627 = vset.pattern.permute.xlu0 3
          %2628 = vperm.xlu0 %2627, %v990
          %v2629 = vpop.permute.xlu0 %2628
          %v2631 = vmul.f32 %v2453, %v2601
          %v2632 = vmul.f32 %v2452, %v2605
          %v2633 = vmul.f32 %v2451, %v2609
          %v2634 = vmul.f32 %v2450, %v2613
          %v2635 = vmul.f32 %v2449, %v2617
          %v2636 = vmul.f32 %v2448, %v2621
          %v2637 = vmul.f32 %v2447, %v2625
          %v2638 = vmul.f32 %v2446, %v2629
          %2639 = vset.pattern.permute.xlu0 5
          %2640 = vperm.xlu0 %2639, %v983
          %v2641 = vpop.permute.xlu0 %2640
          %2643 = vset.pattern.permute.xlu0 5
          %2644 = vperm.xlu0 %2643, %v984
          %v2645 = vpop.permute.xlu0 %2644
          %2647 = vset.pattern.permute.xlu0 5
          %2648 = vperm.xlu0 %2647, %v985
          %v2649 = vpop.permute.xlu0 %2648
          %2651 = vset.pattern.permute.xlu0 5
          %2652 = vperm.xlu0 %2651, %v986
          %v2653 = vpop.permute.xlu0 %2652
          %2655 = vset.pattern.permute.xlu0 5
          %2656 = vperm.xlu0 %2655, %v987
          %v2657 = vpop.permute.xlu0 %2656
          %2659 = vset.pattern.permute.xlu0 5
          %2660 = vperm.xlu0 %2659, %v988
          %v2661 = vpop.permute.xlu0 %2660
          %2663 = vset.pattern.permute.xlu0 5
          %2664 = vperm.xlu0 %2663, %v989
          %v2665 = vpop.permute.xlu0 %2664
          %2667 = vset.pattern.permute.xlu0 5
          %2668 = vperm.xlu0 %2667, %v990
          %v2669 = vpop.permute.xlu0 %2668
          %v2671 = vmul.f32 %v2557, %v2641
          %v2672 = vmul.f32 %v2556, %v2645
          %v2673 = vmul.f32 %v2555, %v2649
          %v2674 = vmul.f32 %v2554, %v2653
          %v2675 = vmul.f32 %v2553, %v2657
          %v2676 = vmul.f32 %v2552, %v2661
          %v2677 = vmul.f32 %v2551, %v2665
          %v2678 = vmul.f32 %v2558, %v2669
          %2679 = vset.pattern.permute.xlu0 6
          %2680 = vperm.xlu0 %2679, %v983
          %v2681 = vpop.permute.xlu0 %2680
          %2683 = vset.pattern.permute.xlu0 6
          %2684 = vperm.xlu0 %2683, %v984
          %v2685 = vpop.permute.xlu0 %2684
          %2687 = vset.pattern.permute.xlu0 6
          %2688 = vperm.xlu0 %2687, %v985
          %v2689 = vpop.permute.xlu0 %2688
          %2691 = vset.pattern.permute.xlu0 6
          %2692 = vperm.xlu0 %2691, %v986
          %v2693 = vpop.permute.xlu0 %2692
          %2695 = vset.pattern.permute.xlu0 6
          %2696 = vperm.xlu0 %2695, %v987
          %v2697 = vpop.permute.xlu0 %2696
          %2699 = vset.pattern.permute.xlu0 6
          %2700 = vperm.xlu0 %2699, %v988
          %v2701 = vpop.permute.xlu0 %2700
          %2703 = vset.pattern.permute.xlu0 6
          %2704 = vperm.xlu0 %2703, %v989
          %v2705 = vpop.permute.xlu0 %2704
          %2707 = vset.pattern.permute.xlu0 6
          %2708 = vperm.xlu0 %2707, %v990
          %v2709 = vpop.permute.xlu0 %2708
          %v2711 = vmul.f32 %v2452, %v2681
          %v2712 = vmul.f32 %v2451, %v2685
          %v2713 = vmul.f32 %v2450, %v2689
          %v2714 = vmul.f32 %v2449, %v2693
          %v2715 = vmul.f32 %v2448, %v2697
          %v2716 = vmul.f32 %v2447, %v2701
          %v2717 = vmul.f32 %v2446, %v2705
          %v2718 = vmul.f32 %v2453, %v2709
          %2719 = vset.pattern.permute.xlu0 7
          %2720 = vperm.xlu0 %2719, %v983
          %v2721 = vpop.permute.xlu0 %2720
          %2723 = vset.pattern.permute.xlu0 7
          %2724 = vperm.xlu0 %2723, %v984
          %v2725 = vpop.permute.xlu0 %2724
          %2727 = vset.pattern.permute.xlu0 7
          %2728 = vperm.xlu0 %2727, %v985
          %v2729 = vpop.permute.xlu0 %2728
          %2731 = vset.pattern.permute.xlu0 7
          %2732 = vperm.xlu0 %2731, %v986
          %v2733 = vpop.permute.xlu0 %2732
          %2735 = vset.pattern.permute.xlu0 7
          %2736 = vperm.xlu0 %2735, %v987
          %v2737 = vpop.permute.xlu0 %2736
          %2739 = vset.pattern.permute.xlu0 7
          %2740 = vperm.xlu0 %2739, %v988
          %v2741 = vpop.permute.xlu0 %2740
          %2743 = vset.pattern.permute.xlu0 7
          %2744 = vperm.xlu0 %2743, %v989
          %v2745 = vpop.permute.xlu0 %2744
          %2747 = vset.pattern.permute.xlu0 7
          %2748 = vperm.xlu0 %2747, %v990
          %v2749 = vpop.permute.xlu0 %2748
          %v2751 = vmul.f32 %v2351, %v2721
          %v2752 = vmul.f32 %v2352, %v2725
          %v2753 = vmul.f32 %v2353, %v2729
          %v2754 = vmul.f32 %v2354, %v2733
          %v2755 = vmul.f32 %v2355, %v2737
          %v2756 = vmul.f32 %v2356, %v2741
          %v2757 = vmul.f32 %v2357, %v2745
          %v2758 = vmul.f32 %v2350, %v2749
          %2759 = vset.pattern.permute.xlu0 8
          %2760 = vperm.xlu0 %2759, %v983
          %v2761 = vpop.permute.xlu0 %2760
          %2763 = vset.pattern.permute.xlu0 8
          %2764 = vperm.xlu0 %2763, %v984
          %v2765 = vpop.permute.xlu0 %2764
          %2767 = vset.pattern.permute.xlu0 8
          %2768 = vperm.xlu0 %2767, %v985
          %v2769 = vpop.permute.xlu0 %2768
          %2771 = vset.pattern.permute.xlu0 8
          %2772 = vperm.xlu0 %2771, %v986
          %v2773 = vpop.permute.xlu0 %2772
          %2775 = vset.pattern.permute.xlu0 8
          %2776 = vperm.xlu0 %2775, %v987
          %v2777 = vpop.permute.xlu0 %2776
          %2779 = vset.pattern.permute.xlu0 8
          %2780 = vperm.xlu0 %2779, %v988
          %v2781 = vpop.permute.xlu0 %2780
          %2783 = vset.pattern.permute.xlu0 8
          %2784 = vperm.xlu0 %2783, %v989
          %v2785 = vpop.permute.xlu0 %2784
          %2787 = vset.pattern.permute.xlu0 8
          %2788 = vperm.xlu0 %2787, %v990
          %v2789 = vpop.permute.xlu0 %2788
          %v2791 = vmul.f32 %v2556, %v2761
          %v2792 = vmul.f32 %v2555, %v2765
          %v2793 = vmul.f32 %v2554, %v2769
          %v2794 = vmul.f32 %v2553, %v2773
          %v2795 = vmul.f32 %v2552, %v2777
          %v2796 = vmul.f32 %v2551, %v2781
          %v2797 = vmul.f32 %v2558, %v2785
          %v2798 = vmul.f32 %v2557, %v2789
          %2807 = vrot.lane.b32.xlu0 %v2534, 64
          %v2808 = vpop.permute.xlu0 %2807
          %2809 = vrot.lane.b32.xlu0 %v2535, 64
          %v2810 = vpop.permute.xlu0 %2809
          %2811 = vrot.lane.b32.xlu0 %v2536, 64
          %v2812 = vpop.permute.xlu0 %2811
          %2813 = vrot.lane.b32.xlu0 %v2537, 64
          %v2814 = vpop.permute.xlu0 %2813
          %2815 = vrot.lane.b32.xlu0 %v2538, 64
          %v2816 = vpop.permute.xlu0 %2815
          %2817 = vrot.lane.b32.xlu0 %v2539, 64
          %v2818 = vpop.permute.xlu0 %2817
          %2819 = vrot.lane.b32.xlu0 %v2540, 64
          %v2820 = vpop.permute.xlu0 %2819
          %2821 = vrot.lane.b32.xlu0 %v2541, 64
          %v2822 = vpop.permute.xlu0 %2821
          %2839 = vrot.lane.b32.xlu0 %v2631, 64
          %v2840 = vpop.permute.xlu0 %2839
          %2841 = vrot.lane.b32.xlu0 %v2632, 64
          %v2842 = vpop.permute.xlu0 %2841
          %2843 = vrot.lane.b32.xlu0 %v2633, 64
          %v2844 = vpop.permute.xlu0 %2843
          %2845 = vrot.lane.b32.xlu0 %v2634, 64
          %v2846 = vpop.permute.xlu0 %2845
          %2847 = vrot.lane.b32.xlu0 %v2635, 64
          %v2848 = vpop.permute.xlu0 %2847
          %2849 = vrot.lane.b32.xlu0 %v2636, 64
          %v2850 = vpop.permute.xlu0 %2849
          %2851 = vrot.lane.b32.xlu0 %v2637, 64
          %v2852 = vpop.permute.xlu0 %2851
          %2853 = vrot.lane.b32.xlu0 %v2638, 64
          %v2854 = vpop.permute.xlu0 %2853
          %2871 = vrot.lane.b32.xlu0 %v2671, 64
          %v2872 = vpop.permute.xlu0 %2871
          %2873 = vrot.lane.b32.xlu0 %v2672, 64
          %v2874 = vpop.permute.xlu0 %2873
          %2875 = vrot.lane.b32.xlu0 %v2673, 64
          %v2876 = vpop.permute.xlu0 %2875
          %2877 = vrot.lane.b32.xlu0 %v2674, 64
          %v2878 = vpop.permute.xlu0 %2877
          %2879 = vrot.lane.b32.xlu0 %v2675, 64
          %v2880 = vpop.permute.xlu0 %2879
          %2881 = vrot.lane.b32.xlu0 %v2676, 64
          %v2882 = vpop.permute.xlu0 %2881
          %2883 = vrot.lane.b32.xlu0 %v2677, 64
          %v2884 = vpop.permute.xlu0 %2883
          %2885 = vrot.lane.b32.xlu0 %v2678, 64
          %v2886 = vpop.permute.xlu0 %2885
          %2903 = vrot.lane.b32.xlu0 %v2751, 64
          %v2904 = vpop.permute.xlu0 %2903
          %2905 = vrot.lane.b32.xlu0 %v2752, 64
          %v2906 = vpop.permute.xlu0 %2905
          %2907 = vrot.lane.b32.xlu0 %v2753, 64
          %v2908 = vpop.permute.xlu0 %2907
          %2909 = vrot.lane.b32.xlu0 %v2754, 64
          %v2910 = vpop.permute.xlu0 %2909
          %2911 = vrot.lane.b32.xlu0 %v2755, 64
          %v2912 = vpop.permute.xlu0 %2911
          %2913 = vrot.lane.b32.xlu0 %v2756, 64
          %v2914 = vpop.permute.xlu0 %2913
          %2915 = vrot.lane.b32.xlu0 %v2757, 64
          %v2916 = vpop.permute.xlu0 %2915
          %2917 = vrot.lane.b32.xlu0 %v2758, 64
          %v2918 = vpop.permute.xlu0 %2917
          %vm2927 = vcmask 523264
          %v2928 = vsel %vm2927, %v2494, %v2808
          %v2929 = vsel %vm2927, %v2495, %v2810
          %v2930 = vsel %vm2927, %v2496, %v2812
          %v2931 = vsel %vm2927, %v2497, %v2814
          %v2932 = vsel %vm2927, %v2498, %v2816
          %v2933 = vsel %vm2927, %v2499, %v2818
          %v2934 = vsel %vm2927, %v2500, %v2820
          %v2935 = vsel %vm2927, %v2501, %v2822
          %v2936 = vsel %vm2927, %v2591, %v2840
          %v2937 = vsel %vm2927, %v2592, %v2842
          %v2938 = vsel %vm2927, %v2593, %v2844
          %v2939 = vsel %vm2927, %v2594, %v2846
          %v2940 = vsel %vm2927, %v2595, %v2848
          %v2941 = vsel %vm2927, %v2596, %v2850
          %v2942 = vsel %vm2927, %v2597, %v2852
          %v2943 = vsel %vm2927, %v2598, %v2854
          %v2944 = vsel %vm2927, %v2350, %v2872
          %v2945 = vsel %vm2927, %v2351, %v2874
          %v2946 = vsel %vm2927, %v2352, %v2876
          %v2947 = vsel %vm2927, %v2353, %v2878
          %v2948 = vsel %vm2927, %v2354, %v2880
          %v2949 = vsel %vm2927, %v2355, %v2882
          %v2950 = vsel %vm2927, %v2356, %v2884
          %v2951 = vsel %vm2927, %v2357, %v2886
          %v2952 = vsel %vm2927, %v2711, %v2904
          %v2953 = vsel %vm2927, %v2712, %v2906
          %v2954 = vsel %vm2927, %v2713, %v2908
          %v2955 = vsel %vm2927, %v2714, %v2910
          %v2956 = vsel %vm2927, %v2715, %v2912
          %v2957 = vsel %vm2927, %v2716, %v2914
          %v2958 = vsel %vm2927, %v2717, %v2916
          %v2959 = vsel %vm2927, %v2718, %v2918
          %v2960 = vpack.c.bf16 %v2929, %v2928
          %v2961 = vpack.c.bf16 %v2937, %v2936
          %v2962 = vpack.c.bf16 %v2945, %v2944
          %v2963 = vpack.c.bf16 %v2953, %v2952
          %v2964 = vpack.c.bf16 %v2792, %v2791
          %v2965 = vpack.c.bf16 %v2931, %v2930
          %v2966 = vpack.c.bf16 %v2939, %v2938
          %v2967 = vpack.c.bf16 %v2947, %v2946
          %v2968 = vpack.c.bf16 %v2955, %v2954
          %v2969 = vpack.c.bf16 %v2794, %v2793
          %v2970 = vpack.c.bf16 %v2933, %v2932
          %v2971 = vpack.c.bf16 %v2941, %v2940
          %v2972 = vpack.c.bf16 %v2949, %v2948
          %v2973 = vpack.c.bf16 %v2957, %v2956
          %v2974 = vpack.c.bf16 %v2796, %v2795
          %v2975 = vpack.c.bf16 %v2935, %v2934
          %v2976 = vpack.c.bf16 %v2943, %v2942
          %v2977 = vpack.c.bf16 %v2951, %v2950
          %v2978 = vpack.c.bf16 %v2959, %v2958
          %v2979 = vpack.c.bf16 %v2798, %v2797
          %v2981 = vlaneseq
          %v2982 = vshrl.u32 %v2981, 7
          %v2983 = vsub.s32 0, %v2982
          %v2984 = vrot.slane %v2434, %v2983
          %v3058 = vunpack.c.l.b16 %v2361
          %v3059 = vunpack.c.l.b16 %v2362
          %v3060 = vunpack.c.l.b16 %v2363
          %v3061 = vunpack.c.l.b16 %v2364
          %v3062 = vunpack.c.l.b16 %v2365
          %v3063 = vunpack.c.l.b16 %v2366
          %v3064 = vunpack.c.l.b16 %v2367
          %v3065 = vunpack.c.l.b16 %v2368
          %v3066 = vunpack.c.l.b16 %v2369
          %v3067 = vunpack.c.l.b16 %v2370
          %v3068 = vunpack.c.l.b16 %v2371
          %v3069 = vunpack.c.l.b16 %v2372
          %v3070 = vunpack.c.l.b16 %v2373
          %v3071 = vunpack.c.l.b16 %v2374
          %v3072 = vunpack.c.l.b16 %v2375
          %v3073 = vunpack.c.l.b16 %v2376
          %v3074 = vunpack.c.l.b16 %v2377
          %v3075 = vunpack.c.l.b16 %v2378
          %v3076 = vunpack.c.l.b16 %v2379
          %v3077 = vunpack.c.l.b16 %v2380
          %v3078 = vunpack.c.l.b16 %v2381
          %v3079 = vunpack.c.l.b16 %v2382
          %v3080 = vunpack.c.l.b16 %v2383
          %v3081 = vunpack.c.l.b16 %v2384
          %v3082 = vunpack.c.l.b16 %v2385
          %v3083 = vunpack.c.l.b16 %v2386
          %v3084 = vunpack.c.l.b16 %v2387
          %v3085 = vunpack.c.l.b16 %v2388
          %v3086 = vunpack.c.l.b16 %v2389
          %v3087 = vunpack.c.l.b16 %v2390
          %v3088 = vunpack.c.l.b16 %v2391
          %v3089 = vunpack.c.l.b16 %v2392
          %v3090 = vunpack.c.l.b16 %v2393
          %v3091 = vunpack.c.l.b16 %v2394
          %v3092 = vunpack.c.l.b16 %v2395
          %v3093 = vunpack.c.l.b16 %v2396
          %v3094 = vunpack.c.l.b16 %v2397
          %v3095 = vunpack.c.l.b16 %v2398
          %v3096 = vunpack.c.l.b16 %v2399
          %v3097 = vunpack.c.l.b16 %v2400
          %v3098 = vunpack.c.l.b16 %v2401
          %v3099 = vunpack.c.l.b16 %v2402
          %v3100 = vunpack.c.l.b16 %v2403
          %v3101 = vunpack.c.l.b16 %v2404
          %v3102 = vunpack.c.l.b16 %v2405
          %v3103 = vunpack.c.l.b16 %v2406
          %v3104 = vunpack.c.l.b16 %v2407
          %v3105 = vunpack.c.l.b16 %v2408
          %v3106 = vunpack.c.l.b16 %v2409
          %v3107 = vunpack.c.l.b16 %v2410
          %v3108 = vunpack.c.l.b16 %v2411
          %v3109 = vunpack.c.l.b16 %v2412
          %v3110 = vunpack.c.l.b16 %v2413
          %v3111 = vunpack.c.l.b16 %v2414
          %v3112 = vunpack.c.l.b16 %v2415
          %v3113 = vunpack.c.l.b16 %v2416
          %v3114 = vunpack.c.l.b16 %v2417
          %v3115 = vunpack.c.l.b16 %v2418
          %v3116 = vunpack.c.l.b16 %v2419
          %v3117 = vunpack.c.l.b16 %v2420
          %v3118 = vunpack.c.l.b16 %v2421
          %v3119 = vunpack.c.l.b16 %v2422
          %v3120 = vunpack.c.l.b16 %v2423
          %v3121 = vunpack.c.l.b16 %v2424
          %v3122 = vunpack.c.l.b16 %v2425
          %v3123 = vunpack.c.l.b16 %v2426
          %v3124 = vunpack.c.l.b16 %v2427
          %v3125 = vunpack.c.l.b16 %v2428
          %v3126 = vunpack.c.l.b16 %v2429
          %v3127 = vunpack.c.l.b16 %v2430
          %v3128 = vunpack.c.l.b16 %v2431
          %v3129 = vunpack.c.l.b16 %v2432
          %v3130 = vpack.c.b16 %v3059, %v3058
          %v3131 = vpack.c.b16 %v3061, %v3060
          %v3132 = vpack.c.b16 %v3063, %v3062
          %v3133 = vpack.c.b16 %v3065, %v3064
          %v3134 = vpack.c.b16 %v3067, %v3066
          %v3135 = vpack.c.b16 %v3069, %v3068
          %v3136 = vpack.c.b16 %v3071, %v3070
          %v3137 = vpack.c.b16 %v3073, %v3072
          %v3138 = vpack.c.b16 %v3075, %v3074
          %v3139 = vpack.c.b16 %v3077, %v3076
          %v3140 = vpack.c.b16 %v3079, %v3078
          %v3141 = vpack.c.b16 %v3081, %v3080
          %v3142 = vpack.c.b16 %v3083, %v3082
          %v3143 = vpack.c.b16 %v3085, %v3084
          %v3144 = vpack.c.b16 %v3087, %v3086
          %v3145 = vpack.c.b16 %v3089, %v3088
          %v3146 = vpack.c.b16 %v3091, %v3090
          %v3147 = vpack.c.b16 %v3093, %v3092
          %v3148 = vpack.c.b16 %v3095, %v3094
          %v3149 = vpack.c.b16 %v3097, %v3096
          %v3150 = vpack.c.b16 %v3099, %v3098
          %v3151 = vpack.c.b16 %v3101, %v3100
          %v3152 = vpack.c.b16 %v3103, %v3102
          %v3153 = vpack.c.b16 %v3105, %v3104
          %v3154 = vpack.c.b16 %v3107, %v3106
          %v3155 = vpack.c.b16 %v3109, %v3108
          %v3156 = vpack.c.b16 %v3111, %v3110
          %v3157 = vpack.c.b16 %v3113, %v3112
          %v3158 = vpack.c.b16 %v3115, %v3114
          %v3159 = vpack.c.b16 %v3117, %v3116
          %v3160 = vpack.c.b16 %v3119, %v3118
          %v3161 = vpack.c.b16 %v3121, %v3120
          %v3162 = vpack.c.b16 %v3123, %v3122
          %v3163 = vpack.c.b16 %v3125, %v3124
          %v3164 = vpack.c.b16 %v3127, %v3126
          %v3165 = vpack.c.b16 %v3129, %v3128
          %v3203 = vsel %vm2927, %v2964, 0
          %v3206 = vsel %vm2927, %v2969, 0
          %v3209 = vsel %vm2927, %v2974, 0
          %v3212 = vsel %vm2927, %v2979, 0
          %3214 = vmatprep.subr.bf16.mxu0 0
          %3215 = vmatpush1.bf16.msra.mxu0 %v3137
          %3216 = vmatprep.subr.bf16.mxu0 0
          %3217 = vmatpush1.bf16.msra.mxu0 %v3136
          %3218 = vmatprep.subr.bf16.mxu0 0
          %3219 = vmatpush1.bf16.msra.mxu0 %v3135
          %3220 = vmatprep.subr.bf16.mxu0 0
          %3221 = vmatpush1.bf16.msra.mxu0 %v3134
          %3222 = vmatprep.subr.bf16.mxu0 0
          %3223 = vmatpush1.bf16.msra.mxu0 %v3133
          %3224 = vmatprep.subr.bf16.mxu0 0
          %3225 = vmatpush1.bf16.msra.mxu0 %v3132
          %3226 = vmatprep.subr.bf16.mxu0 0
          %3227 = vmatpush1.bf16.msra.mxu0 %v3131
          %3228 = vmatprep.subr.bf16.mxu0 0
          %3229 = vmatpush1.bf16.msra.mxu0 %v3130
          %3230 = vmatprep.subr.bf16.mxu0 0
          %3231 = vmatpush2.bf16.msra.mxu0 %v3145
          %3232 = vmatprep.subr.bf16.mxu0 0
          %3233 = vmatpush2.bf16.msra.mxu0 %v3144
          %3234 = vmatprep.subr.bf16.mxu0 0
          %3235 = vmatpush2.bf16.msra.mxu0 %v3143
          %3236 = vmatprep.subr.bf16.mxu0 0
          %3237 = vmatpush2.bf16.msra.mxu0 %v3142
          %3238 = vmatprep.subr.bf16.mxu0 0
          %3239 = vmatpush2.bf16.msra.mxu0 %v3141
          %3240 = vmatprep.subr.bf16.mxu0 0
          %3241 = vmatpush2.bf16.msra.mxu0 %v3140
          %3242 = vmatprep.subr.bf16.mxu0 0
          %3243 = vmatpush2.bf16.msra.mxu0 %v3139
          %3244 = vmatprep.subr.bf16.mxu0 0
          %3245 = vmatpush2.bf16.msra.mxu0 %v3138
          %3246 = vmatprep.mubr.bf16.mxu0 %v2961
          %3247 = vmatmul.mubr.bf16.gmra.mxu0 %v2960
          %v3248 = vpop.f32.mrf.mxu0
          %v3249 = vadd.f32 %v2984, %v3248
          %v3250 = vpop.f32.mrf.mxu0
          %v3251 = vpop.f32.mrf.mxu0
          %v3252 = vadd.f32 %v2984, %v3251
          %v3253 = vpop.f32.mrf.mxu0
          %3254 = vmatprep.mubr.bf16.mxu0 %v2966
          %3255 = vmatmul.mubr.bf16.gmra.mxu0 %v2965
          %v3256 = vpop.f32.mrf.mxu0
          %v3257 = vadd.f32 %v2984, %v3256
          %v3258 = vpop.f32.mrf.mxu0
          %v3259 = vpop.f32.mrf.mxu0
          %v3260 = vadd.f32 %v2984, %v3259
          %v3261 = vpop.f32.mrf.mxu0
          %3262 = vmatprep.mubr.bf16.mxu0 %v2971
          %3263 = vmatmul.mubr.bf16.gmra.mxu0 %v2970
          %v3264 = vpop.f32.mrf.mxu0
          %v3265 = vadd.f32 %v2984, %v3264
          %v3266 = vpop.f32.mrf.mxu0
          %v3267 = vpop.f32.mrf.mxu0
          %v3268 = vadd.f32 %v2984, %v3267
          %v3269 = vpop.f32.mrf.mxu0
          %3270 = vmatprep.mubr.bf16.mxu0 %v2976
          %3271 = vmatmul.mubr.bf16.gmra.mxu0 %v2975
          %v3272 = vpop.f32.mrf.mxu0
          %v3273 = vadd.f32 %v2984, %v3272
          %v3274 = vpop.f32.mrf.mxu0
          %v3275 = vpop.f32.mrf.mxu0
          %v3276 = vadd.f32 %v2984, %v3275
          %v3277 = vpop.f32.mrf.mxu0
          %3278 = vdwg.mxu0
          %3279 = vmatprep.subr.bf16.mxu0 0
          %3280 = vmatpush1.bf16.msra.mxu0 %v3153
          %3281 = vmatprep.subr.bf16.mxu0 0
          %3282 = vmatpush1.bf16.msra.mxu0 %v3152
          %3283 = vmatprep.subr.bf16.mxu0 0
          %3284 = vmatpush1.bf16.msra.mxu0 %v3151
          %3285 = vmatprep.subr.bf16.mxu0 0
          %3286 = vmatpush1.bf16.msra.mxu0 %v3150
          %3287 = vmatprep.subr.bf16.mxu0 0
          %3288 = vmatpush1.bf16.msra.mxu0 %v3149
          %3289 = vmatprep.subr.bf16.mxu0 0
          %3290 = vmatpush1.bf16.msra.mxu0 %v3148
          %3291 = vmatprep.subr.bf16.mxu0 0
          %3292 = vmatpush1.bf16.msra.mxu0 %v3147
          %3293 = vmatprep.subr.bf16.mxu0 0
          %3294 = vmatpush1.bf16.msra.mxu0 %v3146
          %3295 = vmatprep.subr.bf16.mxu0 0
          %3296 = vmatpush2.bf16.msra.mxu0 %v3161
          %3297 = vmatprep.subr.bf16.mxu0 0
          %3298 = vmatpush2.bf16.msra.mxu0 %v3160
          %3299 = vmatprep.subr.bf16.mxu0 0
          %3300 = vmatpush2.bf16.msra.mxu0 %v3159
          %3301 = vmatprep.subr.bf16.mxu0 0
          %3302 = vmatpush2.bf16.msra.mxu0 %v3158
          %3303 = vmatprep.subr.bf16.mxu0 0
          %3304 = vmatpush2.bf16.msra.mxu0 %v3157
          %3305 = vmatprep.subr.bf16.mxu0 0
          %3306 = vmatpush2.bf16.msra.mxu0 %v3156
          %3307 = vmatprep.subr.bf16.mxu0 0
          %3308 = vmatpush2.bf16.msra.mxu0 %v3155
          %3309 = vmatprep.subr.bf16.mxu0 0
          %3310 = vmatpush2.bf16.msra.mxu0 %v3154
          %3311 = vmatprep.mubr.bf16.mxu0 %v2963
          %3312 = vmatmul.mubr.bf16.gmra.mxu0 %v2962
          %v3313 = vpop.f32.mrf.mxu0
          %v3314 = vadd.f32 %v3249, %v3313
          %v3315 = vpop.f32.mrf.mxu0
          %v3316 = vpop.f32.mrf.mxu0
          %v3317 = vadd.f32 %v3252, %v3316
          %v3318 = vpop.f32.mrf.mxu0
          %3319 = vmatprep.mubr.bf16.mxu0 %v2968
          %3320 = vmatmul.mubr.bf16.gmra.mxu0 %v2967
          %v3321 = vpop.f32.mrf.mxu0
          %v3322 = vadd.f32 %v3257, %v3321
          %v3323 = vpop.f32.mrf.mxu0
          %v3324 = vpop.f32.mrf.mxu0
          %v3325 = vadd.f32 %v3260, %v3324
          %v3326 = vpop.f32.mrf.mxu0
          %3327 = vmatprep.mubr.bf16.mxu0 %v2973
          %3328 = vmatmul.mubr.bf16.gmra.mxu0 %v2972
          %v3329 = vpop.f32.mrf.mxu0
          %v3330 = vadd.f32 %v3265, %v3329
          %v3331 = vpop.f32.mrf.mxu0
          %v3332 = vpop.f32.mrf.mxu0
          %v3333 = vadd.f32 %v3268, %v3332
          %v3334 = vpop.f32.mrf.mxu0
          %3335 = vmatprep.mubr.bf16.mxu0 %v2978
          %3336 = vmatmul.mubr.bf16.gmra.mxu0 %v2977
          %v3337 = vpop.f32.mrf.mxu0
          %v3338 = vadd.f32 %v3273, %v3337
          %v3339 = vpop.f32.mrf.mxu0
          %v3340 = vpop.f32.mrf.mxu0
          %v3341 = vadd.f32 %v3276, %v3340
          %v3342 = vpop.f32.mrf.mxu0
          %3343 = vdwg.mxu0
          %3344 = vmatprep.subr.bf16.mxu0 0
          %3345 = vmatpush1.bf16.msra.mxu0 0
          %3346 = vmatprep.subr.bf16.mxu0 0
          %3347 = vmatpush1.bf16.msra.mxu0 0
          %3348 = vmatprep.subr.bf16.mxu0 0
          %3349 = vmatpush1.bf16.msra.mxu0 0
          %3350 = vmatprep.subr.bf16.mxu0 0
          %3351 = vmatpush1.bf16.msra.mxu0 0
          %3352 = vmatprep.subr.bf16.mxu0 0
          %3353 = vmatpush1.bf16.msra.mxu0 %v3165
          %3354 = vmatprep.subr.bf16.mxu0 0
          %3355 = vmatpush1.bf16.msra.mxu0 %v3164
          %3356 = vmatprep.subr.bf16.mxu0 0
          %3357 = vmatpush1.bf16.msra.mxu0 %v3163
          %3358 = vmatprep.subr.bf16.mxu0 0
          %3359 = vmatpush1.bf16.msra.mxu0 %v3162
          %3360 = vmatprep.subr.bf16.mxu0 0
          %3361 = vmatpush2.bf16.msra.mxu0 0
          %3362 = vmatprep.subr.bf16.mxu0 0
          %3363 = vmatpush2.bf16.msra.mxu0 0
          %3364 = vmatprep.subr.bf16.mxu0 0
          %3365 = vmatpush2.bf16.msra.mxu0 0
          %3366 = vmatprep.subr.bf16.mxu0 0
          %3367 = vmatpush2.bf16.msra.mxu0 0
          %3368 = vmatprep.subr.bf16.mxu0 0
          %3369 = vmatpush2.bf16.msra.mxu0 0
          %3370 = vmatprep.subr.bf16.mxu0 0
          %3371 = vmatpush2.bf16.msra.mxu0 0
          %3372 = vmatprep.subr.bf16.mxu0 0
          %3373 = vmatpush2.bf16.msra.mxu0 0
          %3374 = vmatprep.subr.bf16.mxu0 0
          %3375 = vmatpush2.bf16.msra.mxu0 0
          %3376 = vmatprep.mubr.bf16.mxu0 0
          %3377 = vmatmul.mubr.bf16.gmra.mxu0 %v3203
          %v3378 = vpop.f32.mrf.mxu0
          %v3379 = vadd.f32 %v3314, %v3378
          %v3380 = vpop.f32.mrf.mxu0
          %v3381 = vpop.f32.mrf.mxu0
          %v3382 = vadd.f32 %v3317, %v3381
          %v3383 = vpop.f32.mrf.mxu0
          %3384 = vmatprep.mubr.bf16.mxu0 0
          %3385 = vmatmul.mubr.bf16.gmra.mxu0 %v3206
          %v3386 = vpop.f32.mrf.mxu0
          %v3387 = vadd.f32 %v3322, %v3386
          %v3388 = vpop.f32.mrf.mxu0
          %v3389 = vpop.f32.mrf.mxu0
          %v3390 = vadd.f32 %v3325, %v3389
          %v3391 = vpop.f32.mrf.mxu0
          %3392 = vmatprep.mubr.bf16.mxu0 0
          %3393 = vmatmul.mubr.bf16.gmra.mxu0 %v3209
          %v3394 = vpop.f32.mrf.mxu0
          %v3395 = vadd.f32 %v3330, %v3394
          %v3396 = vpop.f32.mrf.mxu0
          %v3397 = vpop.f32.mrf.mxu0
          %v3398 = vadd.f32 %v3333, %v3397
          %v3399 = vpop.f32.mrf.mxu0
          %3400 = vmatprep.mubr.bf16.mxu0 0
          %3401 = vmatmul.mubr.bf16.gmra.mxu0 %v3212
          %v3402 = vpop.f32.mrf.mxu0
          %v3403 = vadd.f32 %v3338, %v3402
          %v3404 = vpop.f32.mrf.mxu0
          %v3405 = vpop.f32.mrf.mxu0
          %v3406 = vadd.f32 %v3341, %v3405
          %v3407 = vpop.f32.mrf.mxu0
          %3408 = vdwg.mxu0
          %vm3409 = vcmp.ge.f32.partialorder %v3379, 0.0
          %vm3410 = vcmp.ge.f32.partialorder %v3382, 0.0
          %vm3411 = vcmp.ge.f32.partialorder %v3387, 0.0
          %vm3412 = vcmp.ge.f32.partialorder %v3390, 0.0
          %vm3413 = vcmp.ge.f32.partialorder %v3395, 0.0
          %vm3414 = vcmp.ge.f32.partialorder %v3398, 0.0
          %vm3415 = vcmp.ge.f32.partialorder %v3403, 0.0
          %vm3416 = vcmp.ge.f32.partialorder %v3406, 0.0
          %v3417 = vmul.f32 %v3379, 0.2
          %v3418 = vmul.f32 %v3382, 0.2
          %v3419 = vmul.f32 %v3387, 0.2
          %v3420 = vmul.f32 %v3390, 0.2
          %v3421 = vmul.f32 %v3395, 0.2
          %v3422 = vmul.f32 %v3398, 0.2
          %v3423 = vmul.f32 %v3403, 0.2
          %v3424 = vmul.f32 %v3406, 0.2
          %v3425 = vsel %vm3409, %v3379, %v3417
          %v3426 = vsel %vm3410, %v3382, %v3418
          %v3427 = vsel %vm3411, %v3387, %v3419
          %v3428 = vsel %vm3412, %v3390, %v3420
          %v3429 = vsel %vm3413, %v3395, %v3421
          %v3430 = vsel %vm3414, %v3398, %v3422
          %v3431 = vsel %vm3415, %v3403, %v3423
          %v3432 = vsel %vm3416, %v3406, %v3424
          %s3433 = smul.addr %s2358, 4
          %s3434 = scalar_lea.vmem %s804, %s3433 [#allocation12]
          %v3435 = vld [vmem:[%s3434] sm:$0xf]
          %v3436 = vld [vmem:[%s3434 + $0x4] sm:$0xf]
          %v3437 = vld [vmem:[%s3434 + $0x8] sm:$0xf]
          %v3438 = vld [vmem:[%s3434 + $0xc] sm:$0xf]
          %v3439 = vld [vmem:[%s3434 + $0x10] sm:$0xf]
          %v3440 = vld [vmem:[%s3434 + $0x14] sm:$0xf]
          %v3441 = vld [vmem:[%s3434 + $0x18] sm:$0xf]
          %v3442 = vld [vmem:[%s3434 + $0x1c] sm:$0xf]
          %v3443 = vld [vmem:[%s3434 + $0x20] sm:$0xf]
          %v3444 = vld [vmem:[%s3434 + $0x24] sm:$0xf]
          %v3445 = vld [vmem:[%s3434 + $0x28] sm:$0xf]
          %v3446 = vld [vmem:[%s3434 + $0x2c] sm:$0xf]
          %v3447 = vld [vmem:[%s3434 + $0x30] sm:$0xf]
          %v3448 = vld [vmem:[%s3434 + $0x34] sm:$0xf]
          %v3449 = vld [vmem:[%s3434 + $0x38] sm:$0xf]
          %v3450 = vld [vmem:[%s3434 + $0x3c] sm:$0xf]
          %v3451 = vld [vmem:[%s3434 + $0x40] sm:$0xf]
          %v3452 = vld [vmem:[%s3434 + $0x44] sm:$0xf]
          %v3453 = vld [vmem:[%s3434 + $0x48] sm:$0xf]
          %v3454 = vld [vmem:[%s3434 + $0x4c] sm:$0xf]
          %v3455 = vld [vmem:[%s3434 + $0x50] sm:$0xf]
          %v3456 = vld [vmem:[%s3434 + $0x54] sm:$0xf]
          %v3457 = vld [vmem:[%s3434 + $0x58] sm:$0xf]
          %v3458 = vld [vmem:[%s3434 + $0x5c] sm:$0xf]
          %v3459 = vld [vmem:[%s3434 + $0x60] sm:$0xf]
          %v3460 = vld [vmem:[%s3434 + $0x64] sm:$0xf]
          %v3461 = vld [vmem:[%s3434 + $0x68] sm:$0xf]
          %v3462 = vld [vmem:[%s3434 + $0x6c] sm:$0xf]
          %v3463 = vld [vmem:[%s3434 + $0x70] sm:$0xf]
          %v3464 = vld [vmem:[%s3434 + $0x74] sm:$0xf]
          %v3465 = vld [vmem:[%s3434 + $0x78] sm:$0xf]
          %v3466 = vld [vmem:[%s3434 + $0x7c] sm:$0xf]
          %v3467 = vld [vmem:[%s3434 + $0x80] sm:$0xf]
          %v3468 = vld [vmem:[%s3434 + $0x84] sm:$0xf]
          %v3469 = vld [vmem:[%s3434 + $0x88] sm:$0xf]
          %v3470 = vld [vmem:[%s3434 + $0x8c] sm:$0xf]
          %v3471 = vld [vmem:[%s3434 + $0x90] sm:$0xf]
          %v3472 = vld [vmem:[%s3434 + $0x94] sm:$0xf]
          %v3473 = vld [vmem:[%s3434 + $0x98] sm:$0xf]
          %v3474 = vld [vmem:[%s3434 + $0x9c] sm:$0xf]
          %v3475 = vld [vmem:[%s3434 + $0xa0] sm:$0xf]
          %v3476 = vld [vmem:[%s3434 + $0xa4] sm:$0xf]
          %v3477 = vld [vmem:[%s3434 + $0xa8] sm:$0xf]
          %v3478 = vld [vmem:[%s3434 + $0xac] sm:$0xf]
          %v3479 = vld [vmem:[%s3434 + $0xb0] sm:$0xf]
          %v3480 = vld [vmem:[%s3434 + $0xb4] sm:$0xf]
          %v3481 = vld [vmem:[%s3434 + $0xb8] sm:$0xf]
          %v3482 = vld [vmem:[%s3434 + $0xbc] sm:$0xf]
          %v3483 = vld [vmem:[%s3434 + $0xc0] sm:$0xf]
          %v3484 = vld [vmem:[%s3434 + $0xc4] sm:$0xf]
          %v3485 = vld [vmem:[%s3434 + $0xc8] sm:$0xf]
          %v3486 = vld [vmem:[%s3434 + $0xcc] sm:$0xf]
          %v3487 = vld [vmem:[%s3434 + $0xd0] sm:$0xf]
          %v3488 = vld [vmem:[%s3434 + $0xd4] sm:$0xf]
          %v3489 = vld [vmem:[%s3434 + $0xd8] sm:$0xf]
          %v3490 = vld [vmem:[%s3434 + $0xdc] sm:$0xf]
          %v3491 = vld [vmem:[%s3434 + $0xe0] sm:$0xf]
          %v3492 = vld [vmem:[%s3434 + $0xe4] sm:$0xf]
          %v3493 = vld [vmem:[%s3434 + $0xe8] sm:$0xf]
          %v3494 = vld [vmem:[%s3434 + $0xec] sm:$0xf]
          %v3495 = vld [vmem:[%s3434 + $0xf0] sm:$0xf]
          %v3496 = vld [vmem:[%s3434 + $0xf4] sm:$0xf]
          %v3497 = vld [vmem:[%s3434 + $0xf8] sm:$0xf]
          %v3498 = vld [vmem:[%s3434 + $0xfc] sm:$0xf]
          %v3499 = vld [vmem:[%s3434 + $0x100] sm:$0xf]
          %v3500 = vld [vmem:[%s3434 + $0x104] sm:$0xf]
          %v3501 = vld [vmem:[%s3434 + $0x108] sm:$0xf]
          %v3502 = vld [vmem:[%s3434 + $0x10c] sm:$0xf]
          %v3503 = vld [vmem:[%s3434 + $0x110] sm:$0xf]
          %v3504 = vld [vmem:[%s3434 + $0x114] sm:$0xf]
          %v3505 = vld [vmem:[%s3434 + $0x118] sm:$0xf]
          %v3506 = vld [vmem:[%s3434 + $0x11c] sm:$0xf]
          %s3507 = scalar_lea.vmem %s813, %s2345 [#allocation14]
          %v3508 = vld [vmem:[%s3507] sm:$0x1]
          %v3509 = vrot.slane %v3425, 7
          %v3510 = vrot.slane %v3426, 7
          %v3511 = vrot.slane %v3427, 7
          %v3512 = vrot.slane %v3428, 7
          %v3513 = vrot.slane %v3429, 7
          %v3514 = vrot.slane %v3430, 7
          %v3515 = vrot.slane %v3431, 7
          %v3516 = vrot.slane %v3432, 7
          %v3517 = vsel %vm2445, %v3515, %v3516
          %v3518 = vsel %vm2445, %v3514, %v3515
          %v3519 = vsel %vm2445, %v3513, %v3514
          %v3520 = vsel %vm2445, %v3512, %v3513
          %v3521 = vsel %vm2445, %v3511, %v3512
          %v3522 = vsel %vm2445, %v3510, %v3511
          %v3523 = vsel %vm2445, %v3509, %v3510
          %v3524 = vsel %vm2445, %v3516, %v3509
          %v3525 = vmul.f32 %v3517, %v2457
          %v3526 = vmul.f32 %v3524, %v2462
          %v3527 = vmul.f32 %v3523, %v2467
          %v3528 = vmul.f32 %v3522, %v2472
          %v3529 = vmul.f32 %v3521, %v2477
          %v3530 = vmul.f32 %v3520, %v2482
          %v3531 = vmul.f32 %v3519, %v2487
          %v3532 = vmul.f32 %v3518, %v2492
          %v3533 = vmul.f32 %v3432, %v2504
          %v3534 = vmul.f32 %v3425, %v2508
          %v3535 = vmul.f32 %v3426, %v2512
          %v3536 = vmul.f32 %v3427, %v2516
          %v3537 = vmul.f32 %v3428, %v2520
          %v3538 = vmul.f32 %v3429, %v2524
          %v3539 = vmul.f32 %v3430, %v2528
          %v3540 = vmul.f32 %v3431, %v2532
          %v3541 = vrot.slane %v3425, 1
          %v3542 = vrot.slane %v3426, 1
          %v3543 = vrot.slane %v3427, 1
          %v3544 = vrot.slane %v3428, 1
          %v3545 = vrot.slane %v3429, 1
          %v3546 = vrot.slane %v3430, 1
          %v3547 = vrot.slane %v3431, 1
          %v3548 = vrot.slane %v3432, 1
          %v3549 = vsel %vm2550, %v3547, %v3548
          %v3550 = vsel %vm2550, %v3546, %v3547
          %v3551 = vsel %vm2550, %v3545, %v3546
          %v3552 = vsel %vm2550, %v3544, %v3545
          %v3553 = vsel %vm2550, %v3543, %v3544
          %v3554 = vsel %vm2550, %v3542, %v3543
          %v3555 = vsel %vm2550, %v3541, %v3542
          %v3556 = vsel %vm2550, %v3548, %v3541
          %v3557 = vmul.f32 %v3556, %v2561
          %v3558 = vmul.f32 %v3555, %v2565
          %v3559 = vmul.f32 %v3554, %v2569
          %v3560 = vmul.f32 %v3553, %v2573
          %v3561 = vmul.f32 %v3552, %v2577
          %v3562 = vmul.f32 %v3551, %v2581
          %v3563 = vmul.f32 %v3550, %v2585
          %v3564 = vmul.f32 %v3549, %v2589
          %v3565 = vmul.f32 %v3524, %v2601
          %v3566 = vmul.f32 %v3523, %v2605
          %v3567 = vmul.f32 %v3522, %v2609
          %v3568 = vmul.f32 %v3521, %v2613
          %v3569 = vmul.f32 %v3520, %v2617
          %v3570 = vmul.f32 %v3519, %v2621
          %v3571 = vmul.f32 %v3518, %v2625
          %v3572 = vmul.f32 %v3517, %v2629
          %v3573 = vmul.f32 %v3555, %v2641
          %v3574 = vmul.f32 %v3554, %v2645
          %v3575 = vmul.f32 %v3553, %v2649
          %v3576 = vmul.f32 %v3552, %v2653
          %v3577 = vmul.f32 %v3551, %v2657
          %v3578 = vmul.f32 %v3550, %v2661
          %v3579 = vmul.f32 %v3549, %v2665
          %v3580 = vmul.f32 %v3556, %v2669
          %v3581 = vmul.f32 %v3523, %v2681
          %v3582 = vmul.f32 %v3522, %v2685
          %v3583 = vmul.f32 %v3521, %v2689
          %v3584 = vmul.f32 %v3520, %v2693
          %v3585 = vmul.f32 %v3519, %v2697
          %v3586 = vmul.f32 %v3518, %v2701
          %v3587 = vmul.f32 %v3517, %v2705
          %v3588 = vmul.f32 %v3524, %v2709
          %v3589 = vmul.f32 %v3426, %v2721
          %v3590 = vmul.f32 %v3427, %v2725
          %v3591 = vmul.f32 %v3428, %v2729
          %v3592 = vmul.f32 %v3429, %v2733
          %v3593 = vmul.f32 %v3430, %v2737
          %v3594 = vmul.f32 %v3431, %v2741
          %v3595 = vmul.f32 %v3432, %v2745
          %v3596 = vmul.f32 %v3425, %v2749
          %v3597 = vmul.f32 %v3554, %v2761
          %v3598 = vmul.f32 %v3553, %v2765
          %v3599 = vmul.f32 %v3552, %v2769
          %v3600 = vmul.f32 %v3551, %v2773
          %v3601 = vmul.f32 %v3550, %v2777
          %v3602 = vmul.f32 %v3549, %v2781
          %v3603 = vmul.f32 %v3556, %v2785
          %v3604 = vmul.f32 %v3555, %v2789
          %3613 = vrot.lane.b32.xlu0 %v3533, 64
          %v3614 = vpop.permute.xlu0 %3613
          %3615 = vrot.lane.b32.xlu0 %v3534, 64
          %v3616 = vpop.permute.xlu0 %3615
          %3617 = vrot.lane.b32.xlu0 %v3535, 64
          %v3618 = vpop.permute.xlu0 %3617
          %3619 = vrot.lane.b32.xlu0 %v3536, 64
          %v3620 = vpop.permute.xlu0 %3619
          %3621 = vrot.lane.b32.xlu0 %v3537, 64
          %v3622 = vpop.permute.xlu0 %3621
          %3623 = vrot.lane.b32.xlu0 %v3538, 64
          %v3624 = vpop.permute.xlu0 %3623
          %3625 = vrot.lane.b32.xlu0 %v3539, 64
          %v3626 = vpop.permute.xlu0 %3625
          %3627 = vrot.lane.b32.xlu0 %v3540, 64
          %v3628 = vpop.permute.xlu0 %3627
          %3645 = vrot.lane.b32.xlu0 %v3565, 64
          %v3646 = vpop.permute.xlu0 %3645
          %3647 = vrot.lane.b32.xlu0 %v3566, 64
          %v3648 = vpop.permute.xlu0 %3647
          %3649 = vrot.lane.b32.xlu0 %v3567, 64
          %v3650 = vpop.permute.xlu0 %3649
          %3651 = vrot.lane.b32.xlu0 %v3568, 64
          %v3652 = vpop.permute.xlu0 %3651
          %3653 = vrot.lane.b32.xlu0 %v3569, 64
          %v3654 = vpop.permute.xlu0 %3653
          %3655 = vrot.lane.b32.xlu0 %v3570, 64
          %v3656 = vpop.permute.xlu0 %3655
          %3657 = vrot.lane.b32.xlu0 %v3571, 64
          %v3658 = vpop.permute.xlu0 %3657
          %3659 = vrot.lane.b32.xlu0 %v3572, 64
          %v3660 = vpop.permute.xlu0 %3659
          %3677 = vrot.lane.b32.xlu0 %v3573, 64
          %v3678 = vpop.permute.xlu0 %3677
          %3679 = vrot.lane.b32.xlu0 %v3574, 64
          %v3680 = vpop.permute.xlu0 %3679
          %3681 = vrot.lane.b32.xlu0 %v3575, 64
          %v3682 = vpop.permute.xlu0 %3681
          %3683 = vrot.lane.b32.xlu0 %v3576, 64
          %v3684 = vpop.permute.xlu0 %3683
          %3685 = vrot.lane.b32.xlu0 %v3577, 64
          %v3686 = vpop.permute.xlu0 %3685
          %3687 = vrot.lane.b32.xlu0 %v3578, 64
          %v3688 = vpop.permute.xlu0 %3687
          %3689 = vrot.lane.b32.xlu0 %v3579, 64
          %v3690 = vpop.permute.xlu0 %3689
          %3691 = vrot.lane.b32.xlu0 %v3580, 64
          %v3692 = vpop.permute.xlu0 %3691
          %3709 = vrot.lane.b32.xlu0 %v3589, 64
          %v3710 = vpop.permute.xlu0 %3709
          %3711 = vrot.lane.b32.xlu0 %v3590, 64
          %v3712 = vpop.permute.xlu0 %3711
          %3713 = vrot.lane.b32.xlu0 %v3591, 64
          %v3714 = vpop.permute.xlu0 %3713
          %3715 = vrot.lane.b32.xlu0 %v3592, 64
          %v3716 = vpop.permute.xlu0 %3715
          %3717 = vrot.lane.b32.xlu0 %v3593, 64
          %v3718 = vpop.permute.xlu0 %3717
          %3719 = vrot.lane.b32.xlu0 %v3594, 64
          %v3720 = vpop.permute.xlu0 %3719
          %3721 = vrot.lane.b32.xlu0 %v3595, 64
          %v3722 = vpop.permute.xlu0 %3721
          %3723 = vrot.lane.b32.xlu0 %v3596, 64
          %v3724 = vpop.permute.xlu0 %3723
          %v3733 = vsel %vm2927, %v3525, %v3614
          %v3734 = vsel %vm2927, %v3526, %v3616
          %v3735 = vsel %vm2927, %v3527, %v3618
          %v3736 = vsel %vm2927, %v3528, %v3620
          %v3737 = vsel %vm2927, %v3529, %v3622
          %v3738 = vsel %vm2927, %v3530, %v3624
          %v3739 = vsel %vm2927, %v3531, %v3626
          %v3740 = vsel %vm2927, %v3532, %v3628
          %v3741 = vsel %vm2927, %v3557, %v3646
          %v3742 = vsel %vm2927, %v3558, %v3648
          %v3743 = vsel %vm2927, %v3559, %v3650
          %v3744 = vsel %vm2927, %v3560, %v3652
          %v3745 = vsel %vm2927, %v3561, %v3654
          %v3746 = vsel %vm2927, %v3562, %v3656
          %v3747 = vsel %vm2927, %v3563, %v3658
          %v3748 = vsel %vm2927, %v3564, %v3660
          %v3749 = vsel %vm2927, %v3425, %v3678
          %v3750 = vsel %vm2927, %v3426, %v3680
          %v3751 = vsel %vm2927, %v3427, %v3682
          %v3752 = vsel %vm2927, %v3428, %v3684
          %v3753 = vsel %vm2927, %v3429, %v3686
          %v3754 = vsel %vm2927, %v3430, %v3688
          %v3755 = vsel %vm2927, %v3431, %v3690
          %v3756 = vsel %vm2927, %v3432, %v3692
          %v3757 = vsel %vm2927, %v3581, %v3710
          %v3758 = vsel %vm2927, %v3582, %v3712
          %v3759 = vsel %vm2927, %v3583, %v3714
          %v3760 = vsel %vm2927, %v3584, %v3716
          %v3761 = vsel %vm2927, %v3585, %v3718
          %v3762 = vsel %vm2927, %v3586, %v3720
          %v3763 = vsel %vm2927, %v3587, %v3722
          %v3764 = vsel %vm2927, %v3588, %v3724
          %v3765 = vpack.c.bf16 %v3734, %v3733
          %v3766 = vpack.c.bf16 %v3742, %v3741
          %v3767 = vpack.c.bf16 %v3750, %v3749
          %v3768 = vpack.c.bf16 %v3758, %v3757
          %v3769 = vpack.c.bf16 %v3598, %v3597
          %v3770 = vpack.c.bf16 %v3736, %v3735
          %v3771 = vpack.c.bf16 %v3744, %v3743
          %v3772 = vpack.c.bf16 %v3752, %v3751
          %v3773 = vpack.c.bf16 %v3760, %v3759
          %v3774 = vpack.c.bf16 %v3600, %v3599
          %v3775 = vpack.c.bf16 %v3738, %v3737
          %v3776 = vpack.c.bf16 %v3746, %v3745
          %v3777 = vpack.c.bf16 %v3754, %v3753
          %v3778 = vpack.c.bf16 %v3762, %v3761
          %v3779 = vpack.c.bf16 %v3602, %v3601
          %v3780 = vpack.c.bf16 %v3740, %v3739
          %v3781 = vpack.c.bf16 %v3748, %v3747
          %v3782 = vpack.c.bf16 %v3756, %v3755
          %v3783 = vpack.c.bf16 %v3764, %v3763
          %v3784 = vpack.c.bf16 %v3604, %v3603
          %v3786 = vlaneseq
          %v3787 = vshrl.u32 %v3786, 7
          %v3788 = vsub.s32 0, %v3787
          %v3789 = vrot.slane %v3508, %v3788
          %v3863 = vunpack.c.l.b16 %v3435
          %v3864 = vunpack.c.l.b16 %v3436
          %v3865 = vunpack.c.l.b16 %v3437
          %v3866 = vunpack.c.l.b16 %v3438
          %v3867 = vunpack.c.l.b16 %v3439
          %v3868 = vunpack.c.l.b16 %v3440
          %v3869 = vunpack.c.l.b16 %v3441
          %v3870 = vunpack.c.l.b16 %v3442
          %v3871 = vunpack.c.l.b16 %v3443
          %v3872 = vunpack.c.l.b16 %v3444
          %v3873 = vunpack.c.l.b16 %v3445
          %v3874 = vunpack.c.l.b16 %v3446
          %v3875 = vunpack.c.l.b16 %v3447
          %v3876 = vunpack.c.l.b16 %v3448
          %v3877 = vunpack.c.l.b16 %v3449
          %v3878 = vunpack.c.l.b16 %v3450
          %v3879 = vunpack.c.l.b16 %v3451
          %v3880 = vunpack.c.l.b16 %v3452
          %v3881 = vunpack.c.l.b16 %v3453
          %v3882 = vunpack.c.l.b16 %v3454
          %v3883 = vunpack.c.l.b16 %v3455
          %v3884 = vunpack.c.l.b16 %v3456
          %v3885 = vunpack.c.l.b16 %v3457
          %v3886 = vunpack.c.l.b16 %v3458
          %v3887 = vunpack.c.l.b16 %v3459
          %v3888 = vunpack.c.l.b16 %v3460
          %v3889 = vunpack.c.l.b16 %v3461
          %v3890 = vunpack.c.l.b16 %v3462
          %v3891 = vunpack.c.l.b16 %v3463
          %v3892 = vunpack.c.l.b16 %v3464
          %v3893 = vunpack.c.l.b16 %v3465
          %v3894 = vunpack.c.l.b16 %v3466
          %v3895 = vunpack.c.l.b16 %v3467
          %v3896 = vunpack.c.l.b16 %v3468
          %v3897 = vunpack.c.l.b16 %v3469
          %v3898 = vunpack.c.l.b16 %v3470
          %v3899 = vunpack.c.l.b16 %v3471
          %v3900 = vunpack.c.l.b16 %v3472
          %v3901 = vunpack.c.l.b16 %v3473
          %v3902 = vunpack.c.l.b16 %v3474
          %v3903 = vunpack.c.l.b16 %v3475
          %v3904 = vunpack.c.l.b16 %v3476
          %v3905 = vunpack.c.l.b16 %v3477
          %v3906 = vunpack.c.l.b16 %v3478
          %v3907 = vunpack.c.l.b16 %v3479
          %v3908 = vunpack.c.l.b16 %v3480
          %v3909 = vunpack.c.l.b16 %v3481
          %v3910 = vunpack.c.l.b16 %v3482
          %v3911 = vunpack.c.l.b16 %v3483
          %v3912 = vunpack.c.l.b16 %v3484
          %v3913 = vunpack.c.l.b16 %v3485
          %v3914 = vunpack.c.l.b16 %v3486
          %v3915 = vunpack.c.l.b16 %v3487
          %v3916 = vunpack.c.l.b16 %v3488
          %v3917 = vunpack.c.l.b16 %v3489
          %v3918 = vunpack.c.l.b16 %v3490
          %v3919 = vunpack.c.l.b16 %v3491
          %v3920 = vunpack.c.l.b16 %v3492
          %v3921 = vunpack.c.l.b16 %v3493
          %v3922 = vunpack.c.l.b16 %v3494
          %v3923 = vunpack.c.l.b16 %v3495
          %v3924 = vunpack.c.l.b16 %v3496
          %v3925 = vunpack.c.l.b16 %v3497
          %v3926 = vunpack.c.l.b16 %v3498
          %v3927 = vunpack.c.l.b16 %v3499
          %v3928 = vunpack.c.l.b16 %v3500
          %v3929 = vunpack.c.l.b16 %v3501
          %v3930 = vunpack.c.l.b16 %v3502
          %v3931 = vunpack.c.l.b16 %v3503
          %v3932 = vunpack.c.l.b16 %v3504
          %v3933 = vunpack.c.l.b16 %v3505
          %v3934 = vunpack.c.l.b16 %v3506
          %v3935 = vpack.c.b16 %v3864, %v3863
          %v3936 = vpack.c.b16 %v3866, %v3865
          %v3937 = vpack.c.b16 %v3868, %v3867
          %v3938 = vpack.c.b16 %v3870, %v3869
          %v3939 = vpack.c.b16 %v3872, %v3871
          %v3940 = vpack.c.b16 %v3874, %v3873
          %v3941 = vpack.c.b16 %v3876, %v3875
          %v3942 = vpack.c.b16 %v3878, %v3877
          %v3943 = vpack.c.b16 %v3880, %v3879
          %v3944 = vpack.c.b16 %v3882, %v3881
          %v3945 = vpack.c.b16 %v3884, %v3883
          %v3946 = vpack.c.b16 %v3886, %v3885
          %v3947 = vpack.c.b16 %v3888, %v3887
          %v3948 = vpack.c.b16 %v3890, %v3889
          %v3949 = vpack.c.b16 %v3892, %v3891
          %v3950 = vpack.c.b16 %v3894, %v3893
          %v3951 = vpack.c.b16 %v3896, %v3895
          %v3952 = vpack.c.b16 %v3898, %v3897
          %v3953 = vpack.c.b16 %v3900, %v3899
          %v3954 = vpack.c.b16 %v3902, %v3901
          %v3955 = vpack.c.b16 %v3904, %v3903
          %v3956 = vpack.c.b16 %v3906, %v3905
          %v3957 = vpack.c.b16 %v3908, %v3907
          %v3958 = vpack.c.b16 %v3910, %v3909
          %v3959 = vpack.c.b16 %v3912, %v3911
          %v3960 = vpack.c.b16 %v3914, %v3913
          %v3961 = vpack.c.b16 %v3916, %v3915
          %v3962 = vpack.c.b16 %v3918, %v3917
          %v3963 = vpack.c.b16 %v3920, %v3919
          %v3964 = vpack.c.b16 %v3922, %v3921
          %v3965 = vpack.c.b16 %v3924, %v3923
          %v3966 = vpack.c.b16 %v3926, %v3925
          %v3967 = vpack.c.b16 %v3928, %v3927
          %v3968 = vpack.c.b16 %v3930, %v3929
          %v3969 = vpack.c.b16 %v3932, %v3931
          %v3970 = vpack.c.b16 %v3934, %v3933
          %v4008 = vsel %vm2927, %v3769, 0
          %v4011 = vsel %vm2927, %v3774, 0
          %v4014 = vsel %vm2927, %v3779, 0
          %v4017 = vsel %vm2927, %v3784, 0
          %4019 = vmatprep.subr.bf16.mxu0 0
          %4020 = vmatpush1.bf16.msra.mxu0 %v3942
          %4021 = vmatprep.subr.bf16.mxu0 0
          %4022 = vmatpush1.bf16.msra.mxu0 %v3941
          %4023 = vmatprep.subr.bf16.mxu0 0
          %4024 = vmatpush1.bf16.msra.mxu0 %v3940
          %4025 = vmatprep.subr.bf16.mxu0 0
          %4026 = vmatpush1.bf16.msra.mxu0 %v3939
          %4027 = vmatprep.subr.bf16.mxu0 0
          %4028 = vmatpush1.bf16.msra.mxu0 %v3938
          %4029 = vmatprep.subr.bf16.mxu0 0
          %4030 = vmatpush1.bf16.msra.mxu0 %v3937
          %4031 = vmatprep.subr.bf16.mxu0 0
          %4032 = vmatpush1.bf16.msra.mxu0 %v3936
          %4033 = vmatprep.subr.bf16.mxu0 0
          %4034 = vmatpush1.bf16.msra.mxu0 %v3935
          %4035 = vmatprep.subr.bf16.mxu0 0
          %4036 = vmatpush2.bf16.msra.mxu0 %v3950
          %4037 = vmatprep.subr.bf16.mxu0 0
          %4038 = vmatpush2.bf16.msra.mxu0 %v3949
          %4039 = vmatprep.subr.bf16.mxu0 0
          %4040 = vmatpush2.bf16.msra.mxu0 %v3948
          %4041 = vmatprep.subr.bf16.mxu0 0
          %4042 = vmatpush2.bf16.msra.mxu0 %v3947
          %4043 = vmatprep.subr.bf16.mxu0 0
          %4044 = vmatpush2.bf16.msra.mxu0 %v3946
          %4045 = vmatprep.subr.bf16.mxu0 0
          %4046 = vmatpush2.bf16.msra.mxu0 %v3945
          %4047 = vmatprep.subr.bf16.mxu0 0
          %4048 = vmatpush2.bf16.msra.mxu0 %v3944
          %4049 = vmatprep.subr.bf16.mxu0 0
          %4050 = vmatpush2.bf16.msra.mxu0 %v3943
          %4051 = vmatprep.mubr.bf16.mxu0 %v3766
          %4052 = vmatmul.mubr.bf16.gmra.mxu0 %v3765
          %v4053 = vpop.f32.mrf.mxu0
          %v4054 = vadd.f32 %v3789, %v4053
          %v4055 = vpop.f32.mrf.mxu0
          %v4056 = vpop.f32.mrf.mxu0
          %v4057 = vadd.f32 %v3789, %v4056
          %v4058 = vpop.f32.mrf.mxu0
          %4059 = vmatprep.mubr.bf16.mxu0 %v3771
          %4060 = vmatmul.mubr.bf16.gmra.mxu0 %v3770
          %v4061 = vpop.f32.mrf.mxu0
          %v4062 = vadd.f32 %v3789, %v4061
          %v4063 = vpop.f32.mrf.mxu0
          %v4064 = vpop.f32.mrf.mxu0
          %v4065 = vadd.f32 %v3789, %v4064
          %v4066 = vpop.f32.mrf.mxu0
          %4067 = vmatprep.mubr.bf16.mxu0 %v3776
          %4068 = vmatmul.mubr.bf16.gmra.mxu0 %v3775
          %v4069 = vpop.f32.mrf.mxu0
          %v4070 = vadd.f32 %v3789, %v4069
          %v4071 = vpop.f32.mrf.mxu0
          %v4072 = vpop.f32.mrf.mxu0
          %v4073 = vadd.f32 %v3789, %v4072
          %v4074 = vpop.f32.mrf.mxu0
          %4075 = vmatprep.mubr.bf16.mxu0 %v3781
          %4076 = vmatmul.mubr.bf16.gmra.mxu0 %v3780
          %v4077 = vpop.f32.mrf.mxu0
          %v4078 = vadd.f32 %v3789, %v4077
          %v4079 = vpop.f32.mrf.mxu0
          %v4080 = vpop.f32.mrf.mxu0
          %v4081 = vadd.f32 %v3789, %v4080
          %v4082 = vpop.f32.mrf.mxu0
          %4083 = vdwg.mxu0
          %4084 = vmatprep.subr.bf16.mxu0 0
          %4085 = vmatpush1.bf16.msra.mxu0 %v3958
          %4086 = vmatprep.subr.bf16.mxu0 0
          %4087 = vmatpush1.bf16.msra.mxu0 %v3957
          %4088 = vmatprep.subr.bf16.mxu0 0
          %4089 = vmatpush1.bf16.msra.mxu0 %v3956
          %4090 = vmatprep.subr.bf16.mxu0 0
          %4091 = vmatpush1.bf16.msra.mxu0 %v3955
          %4092 = vmatprep.subr.bf16.mxu0 0
          %4093 = vmatpush1.bf16.msra.mxu0 %v3954
          %4094 = vmatprep.subr.bf16.mxu0 0
          %4095 = vmatpush1.bf16.msra.mxu0 %v3953
          %4096 = vmatprep.subr.bf16.mxu0 0
          %4097 = vmatpush1.bf16.msra.mxu0 %v3952
          %4098 = vmatprep.subr.bf16.mxu0 0
          %4099 = vmatpush1.bf16.msra.mxu0 %v3951
          %4100 = vmatprep.subr.bf16.mxu0 0
          %4101 = vmatpush2.bf16.msra.mxu0 %v3966
          %4102 = vmatprep.subr.bf16.mxu0 0
          %4103 = vmatpush2.bf16.msra.mxu0 %v3965
          %4104 = vmatprep.subr.bf16.mxu0 0
          %4105 = vmatpush2.bf16.msra.mxu0 %v3964
          %4106 = vmatprep.subr.bf16.mxu0 0
          %4107 = vmatpush2.bf16.msra.mxu0 %v3963
          %4108 = vmatprep.subr.bf16.mxu0 0
          %4109 = vmatpush2.bf16.msra.mxu0 %v3962
          %4110 = vmatprep.subr.bf16.mxu0 0
          %4111 = vmatpush2.bf16.msra.mxu0 %v3961
          %4112 = vmatprep.subr.bf16.mxu0 0
          %4113 = vmatpush2.bf16.msra.mxu0 %v3960
          %4114 = vmatprep.subr.bf16.mxu0 0
          %4115 = vmatpush2.bf16.msra.mxu0 %v3959
          %4116 = vmatprep.mubr.bf16.mxu0 %v3768
          %4117 = vmatmul.mubr.bf16.gmra.mxu0 %v3767
          %v4118 = vpop.f32.mrf.mxu0
          %v4119 = vadd.f32 %v4054, %v4118
          %v4120 = vpop.f32.mrf.mxu0
          %v4121 = vpop.f32.mrf.mxu0
          %v4122 = vadd.f32 %v4057, %v4121
          %v4123 = vpop.f32.mrf.mxu0
          %4124 = vmatprep.mubr.bf16.mxu0 %v3773
          %4125 = vmatmul.mubr.bf16.gmra.mxu0 %v3772
          %v4126 = vpop.f32.mrf.mxu0
          %v4127 = vadd.f32 %v4062, %v4126
          %v4128 = vpop.f32.mrf.mxu0
          %v4129 = vpop.f32.mrf.mxu0
          %v4130 = vadd.f32 %v4065, %v4129
          %v4131 = vpop.f32.mrf.mxu0
          %4132 = vmatprep.mubr.bf16.mxu0 %v3778
          %4133 = vmatmul.mubr.bf16.gmra.mxu0 %v3777
          %v4134 = vpop.f32.mrf.mxu0
          %v4135 = vadd.f32 %v4070, %v4134
          %v4136 = vpop.f32.mrf.mxu0
          %v4137 = vpop.f32.mrf.mxu0
          %v4138 = vadd.f32 %v4073, %v4137
          %v4139 = vpop.f32.mrf.mxu0
          %4140 = vmatprep.mubr.bf16.mxu0 %v3783
          %4141 = vmatmul.mubr.bf16.gmra.mxu0 %v3782
          %v4142 = vpop.f32.mrf.mxu0
          %v4143 = vadd.f32 %v4078, %v4142
          %v4144 = vpop.f32.mrf.mxu0
          %v4145 = vpop.f32.mrf.mxu0
          %v4146 = vadd.f32 %v4081, %v4145
          %v4147 = vpop.f32.mrf.mxu0
          %4148 = vdwg.mxu0
          %4149 = vmatprep.subr.bf16.mxu0 0
          %4150 = vmatpush1.bf16.msra.mxu0 0
          %4151 = vmatprep.subr.bf16.mxu0 0
          %4152 = vmatpush1.bf16.msra.mxu0 0
          %4153 = vmatprep.subr.bf16.mxu0 0
          %4154 = vmatpush1.bf16.msra.mxu0 0
          %4155 = vmatprep.subr.bf16.mxu0 0
          %4156 = vmatpush1.bf16.msra.mxu0 0
          %4157 = vmatprep.subr.bf16.mxu0 0
          %4158 = vmatpush1.bf16.msra.mxu0 %v3970
          %4159 = vmatprep.subr.bf16.mxu0 0
          %4160 = vmatpush1.bf16.msra.mxu0 %v3969
          %4161 = vmatprep.subr.bf16.mxu0 0
          %4162 = vmatpush1.bf16.msra.mxu0 %v3968
          %4163 = vmatprep.subr.bf16.mxu0 0
          %4164 = vmatpush1.bf16.msra.mxu0 %v3967
          %4165 = vmatprep.subr.bf16.mxu0 0
          %4166 = vmatpush2.bf16.msra.mxu0 0
          %4167 = vmatprep.subr.bf16.mxu0 0
          %4168 = vmatpush2.bf16.msra.mxu0 0
          %4169 = vmatprep.subr.bf16.mxu0 0
          %4170 = vmatpush2.bf16.msra.mxu0 0
          %4171 = vmatprep.subr.bf16.mxu0 0
          %4172 = vmatpush2.bf16.msra.mxu0 0
          %4173 = vmatprep.subr.bf16.mxu0 0
          %4174 = vmatpush2.bf16.msra.mxu0 0
          %4175 = vmatprep.subr.bf16.mxu0 0
          %4176 = vmatpush2.bf16.msra.mxu0 0
          %4177 = vmatprep.subr.bf16.mxu0 0
          %4178 = vmatpush2.bf16.msra.mxu0 0
          %4179 = vmatprep.subr.bf16.mxu0 0
          %4180 = vmatpush2.bf16.msra.mxu0 0
          %4181 = vmatprep.mubr.bf16.mxu0 0
          %4182 = vmatmul.mubr.bf16.gmra.mxu0 %v4008
          %v4183 = vpop.f32.mrf.mxu0
          %v4184 = vadd.f32 %v4119, %v4183
          %v4185 = vpop.f32.mrf.mxu0
          %v4186 = vpop.f32.mrf.mxu0
          %v4187 = vadd.f32 %v4122, %v4186
          %v4188 = vpop.f32.mrf.mxu0
          %4189 = vmatprep.mubr.bf16.mxu0 0
          %4190 = vmatmul.mubr.bf16.gmra.mxu0 %v4011
          %v4191 = vpop.f32.mrf.mxu0
          %v4192 = vadd.f32 %v4127, %v4191
          %v4193 = vpop.f32.mrf.mxu0
          %v4194 = vpop.f32.mrf.mxu0
          %v4195 = vadd.f32 %v4130, %v4194
          %v4196 = vpop.f32.mrf.mxu0
          %4197 = vmatprep.mubr.bf16.mxu0 0
          %4198 = vmatmul.mubr.bf16.gmra.mxu0 %v4014
          %v4199 = vpop.f32.mrf.mxu0
          %v4200 = vadd.f32 %v4135, %v4199
          %v4201 = vpop.f32.mrf.mxu0
          %v4202 = vpop.f32.mrf.mxu0
          %v4203 = vadd.f32 %v4138, %v4202
          %v4204 = vpop.f32.mrf.mxu0
          %4205 = vmatprep.mubr.bf16.mxu0 0
          %4206 = vmatmul.mubr.bf16.gmra.mxu0 %v4017
          %v4207 = vpop.f32.mrf.mxu0
          %v4208 = vadd.f32 %v4143, %v4207
          %v4209 = vpop.f32.mrf.mxu0
          %v4210 = vpop.f32.mrf.mxu0
          %v4211 = vadd.f32 %v4146, %v4210
          %v4212 = vpop.f32.mrf.mxu0
          %4213 = vdwg.mxu0
          %v4214 = vsel %vm2927, %v4184, 0.0
          %v4215 = vsel %vm2927, %v4187, 0.0
          %v4216 = vadd.f32 %v4214, %v4215
          %v4217 = vsel %vm2927, %v4192, 0.0
          %v4218 = vadd.f32 %v4216, %v4217
          %v4219 = vsel %vm2927, %v4195, 0.0
          %v4220 = vadd.f32 %v4218, %v4219
          %v4221 = vsel %vm2927, %v4200, 0.0
          %v4222 = vadd.f32 %v4220, %v4221
          %v4223 = vsel %vm2927, %v4203, 0.0
          %v4224 = vadd.f32 %v4222, %v4223
          %v4225 = vsel %vm2927, %v4208, 0.0
          %v4226 = vadd.f32 %v4224, %v4225
          %v4227 = vsel %vm2927, %v4211, 0.0
          %v4228 = vadd.f32 %v4226, %v4227
          %v4229 = vrot.slane %v4228, 4
          %v4230 = vadd.f32 %v4228, %v4229
          %v4231 = vrot.slane %v4230, 2
          %v4232 = vadd.f32 %v4230, %v4231
          %v4233 = vrot.slane %v4232, 1
          %v4234 = vadd.f32 %v4232, %v4233
          %v4235 = vrcp.pop 64.0
          %v4236 = vmul.f32 %v4234, %v4235
          %s4237 = smul.u32 %s2345, 4
          %s4238 = scalar_lea.vmem %s822, %s4237 [#allocation15]
          %v4239 = vld [vmem:[%s4238] sm:$0xf]
          %v4240 = vmul.f32 %v4239, %v4236
          %vm4241 = vcmask 519168
          %v4242 = vsel %vm4241, %v4240, 0.0
          %4243 = vadd.xlane.f32.xlu0 %v4242
          %v4244 = vpop.xlane.xlu0 %4243
          %s4245 = scalar_lea.vmem %s831, %s4237 [#allocation17]
          %v4246 = vld [vmem:[%s4245] sm:$0xf]
          %v4247 = vadd.f32 %v4244, %v4246
          %v4248 = vmax.f32 %v4247, 0.0
          %s4249 = scalar_lea.vmem %s840, %s4237 [#allocation18]
          %v4250 = vld [vmem:[%s4249] sm:$0xf]
          %4252 = vset.pattern.permute.xlu0 0
          %4253 = vperm.xlu0 %4252, %v4248
          %v4254 = vpop.permute.xlu0 %4253
          %v4256 = vmul.f32 %v4250, %v4254
          %v4257 = vsel %vm4241, %v4256, 0.0
          %v4258 = vrot.slane %v4257, 4
          %v4259 = vadd.f32 %v4257, %v4258
          %v4260 = vrot.slane %v4259, 2
          %v4261 = vadd.f32 %v4259, %v4260
          %v4262 = vrot.slane %v4261, 1
          %v4263 = vadd.f32 %v4261, %v4262
          %s4264 = scalar_lea.vmem %s849, %s2345 [#allocation20]
          %v4265 = vld [vmem:[%s4264] sm:$0x1]
          %v4266 = vadd.f32 %v4263, %v4265
          %v4267 = vxor.u32 %v4266, 2147483648
          %v4268 = vmul.f32 %v4267, 1.442695
          %v4269 = vpow.pop %v4268
          %v4270 = vadd.f32 %v4269, 1.0
          %v4271 = vrcp.pop %v4270
          %v4272 = vmul.f32 1.0, %v4271
          %v4273 = vlaneseq
          %v4274 = vshrl.u32 %v4273, 7
          %v4275 = vsub.s32 0, %v4274
          %v4276 = vrot.slane %v4272, %v4275
          %v4277 = vmul.f32 %v4184, %v4276
          %v4278 = vmul.f32 %v4187, %v4276
          %v4279 = vmul.f32 %v4192, %v4276
          %v4280 = vmul.f32 %v4195, %v4276
          %v4281 = vmul.f32 %v4200, %v4276
          %v4282 = vmul.f32 %v4203, %v4276
          %v4283 = vmul.f32 %v4208, %v4276
          %v4284 = vmul.f32 %v4211, %v4276
          %v4285 = vadd.f32 %v4277, %v2350
          %v4286 = vadd.f32 %v4278, %v2351
          %v4287 = vadd.f32 %v4279, %v2352
          %v4288 = vadd.f32 %v4280, %v2353
          %v4289 = vadd.f32 %v4281, %v2354
          %v4290 = vadd.f32 %v4282, %v2355
          %v4291 = vadd.f32 %v4283, %v2356
          %v4292 = vadd.f32 %v4284, %v2357
        $region153: #{_lambda_.1} parent=83 // loop_footer
          %s2349 = sadd.s32 1, %s2345
        $region154: #{_lambda_.1} parent=83 // loop_footer_branch
          %2344 = sbr.rel target = $region150
        $region155: #{_lambda_.1} parent=83 // loop_exit
          _
        %v4293 = vld [vmem:[%s858] sm:$0xf]
        %v4294 = vld [vmem:[%s858 + $0x4] sm:$0xf]
        %v4295 = vld [vmem:[%s858 + $0x8] sm:$0xf]
        %v4296 = vld [vmem:[%s858 + $0xc] sm:$0xf]
        %v4297 = vld [vmem:[%s858 + $0x10] sm:$0xf]
        %v4298 = vld [vmem:[%s858 + $0x14] sm:$0xf]
        %v4299 = vld [vmem:[%s858 + $0x18] sm:$0xf]
        %v4300 = vld [vmem:[%s858 + $0x1c] sm:$0xf]
        %v4301 = vld [vmem:[%s858 + $0x20] sm:$0xf]
        %v4302 = vld [vmem:[%s858 + $0x24] sm:$0xf]
        %v4303 = vld [vmem:[%s858 + $0x28] sm:$0xf]
        %v4304 = vld [vmem:[%s858 + $0x2c] sm:$0xf]
        %v4305 = vld [vmem:[%s858 + $0x30] sm:$0xf]
        %v4306 = vld [vmem:[%s858 + $0x34] sm:$0xf]
        %v4307 = vld [vmem:[%s858 + $0x38] sm:$0xf]
        %v4308 = vld [vmem:[%s858 + $0x3c] sm:$0xf]
        %v4309 = vld [vmem:[%s858 + $0x40] sm:$0xf]
        %v4310 = vld [vmem:[%s858 + $0x44] sm:$0xf]
        %v4311 = vld [vmem:[%s858 + $0x48] sm:$0xf]
        %v4312 = vld [vmem:[%s858 + $0x4c] sm:$0xf]
        %v4313 = vld [vmem:[%s858 + $0x50] sm:$0xf]
        %v4314 = vld [vmem:[%s858 + $0x54] sm:$0xf]
        %v4315 = vld [vmem:[%s858 + $0x58] sm:$0xf]
        %v4316 = vld [vmem:[%s858 + $0x5c] sm:$0xf]
        %v4317 = vld [vmem:[%s858 + $0x60] sm:$0xf]
        %v4318 = vld [vmem:[%s858 + $0x64] sm:$0xf]
        %v4319 = vld [vmem:[%s858 + $0x68] sm:$0xf]
        %v4320 = vld [vmem:[%s858 + $0x6c] sm:$0xf]
        %v4321 = vld [vmem:[%s858 + $0x70] sm:$0xf]
        %v4322 = vld [vmem:[%s858 + $0x74] sm:$0xf]
        %v4323 = vld [vmem:[%s858 + $0x78] sm:$0xf]
        %v4324 = vld [vmem:[%s858 + $0x7c] sm:$0xf]
        %v4325 = vld [vmem:[%s858 + $0x80] sm:$0xf]
        %v4326 = vld [vmem:[%s858 + $0x84] sm:$0xf]
        %v4327 = vld [vmem:[%s858 + $0x88] sm:$0xf]
        %v4328 = vld [vmem:[%s858 + $0x8c] sm:$0xf]
        %v4329 = vld [vmem:[%s858 + $0x90] sm:$0xf]
        %v4330 = vld [vmem:[%s858 + $0x94] sm:$0xf]
        %v4331 = vld [vmem:[%s858 + $0x98] sm:$0xf]
        %v4332 = vld [vmem:[%s858 + $0x9c] sm:$0xf]
        %v4333 = vld [vmem:[%s858 + $0xa0] sm:$0xf]
        %v4334 = vld [vmem:[%s858 + $0xa4] sm:$0xf]
        %v4335 = vld [vmem:[%s858 + $0xa8] sm:$0xf]
        %v4336 = vld [vmem:[%s858 + $0xac] sm:$0xf]
        %v4337 = vld [vmem:[%s858 + $0xb0] sm:$0xf]
        %v4338 = vld [vmem:[%s858 + $0xb4] sm:$0xf]
        %v4339 = vld [vmem:[%s858 + $0xb8] sm:$0xf]
        %v4340 = vld [vmem:[%s858 + $0xbc] sm:$0xf]
        %v4341 = vld [vmem:[%s858 + $0xc0] sm:$0xf]
        %v4342 = vld [vmem:[%s858 + $0xc4] sm:$0xf]
        %v4343 = vld [vmem:[%s858 + $0xc8] sm:$0xf]
        %v4344 = vld [vmem:[%s858 + $0xcc] sm:$0xf]
        %v4345 = vld [vmem:[%s858 + $0xd0] sm:$0xf]
        %v4346 = vld [vmem:[%s858 + $0xd4] sm:$0xf]
        %v4347 = vld [vmem:[%s858 + $0xd8] sm:$0xf]
        %v4348 = vld [vmem:[%s858 + $0xdc] sm:$0xf]
        %v4349 = vld [vmem:[%s858 + $0xe0] sm:$0xf]
        %v4350 = vld [vmem:[%s858 + $0xe4] sm:$0xf]
        %v4351 = vld [vmem:[%s858 + $0xe8] sm:$0xf]
        %v4352 = vld [vmem:[%s858 + $0xec] sm:$0xf]
        %v4353 = vld [vmem:[%s858 + $0xf0] sm:$0xf]
        %v4354 = vld [vmem:[%s858 + $0xf4] sm:$0xf]
        %v4355 = vld [vmem:[%s858 + $0xf8] sm:$0xf]
        %v4356 = vld [vmem:[%s858 + $0xfc] sm:$0xf]
        %v4357 = vld [vmem:[%s858 + $0x100] sm:$0xf]
        %v4358 = vld [vmem:[%s858 + $0x104] sm:$0xf]
        %v4359 = vld [vmem:[%s858 + $0x108] sm:$0xf]
        %v4360 = vld [vmem:[%s858 + $0x10c] sm:$0xf]
        %v4361 = vld [vmem:[%s858 + $0x110] sm:$0xf]
        %v4362 = vld [vmem:[%s858 + $0x114] sm:$0xf]
        %v4363 = vld [vmem:[%s858 + $0x118] sm:$0xf]
        %v4364 = vld [vmem:[%s858 + $0x11c] sm:$0xf]
        %v4365 = vld [vmem:[%s866] sm:$0x1]
        %v4366 = vrot.slane %v2350, 7
        %v4367 = vrot.slane %v2351, 7
        %v4368 = vrot.slane %v2352, 7
        %v4369 = vrot.slane %v2353, 7
        %v4370 = vrot.slane %v2354, 7
        %v4371 = vrot.slane %v2355, 7
        %v4372 = vrot.slane %v2356, 7
        %v4373 = vrot.slane %v2357, 7
        %v4374 = vlaneseq
        %v4375 = vshrl.u32 %v4374, 7
        %vm4376 = vcmp.lt.s32.totalorder %v4375, 1
        %v4377 = vsel %vm4376, %v4372, %v4373
        %v4378 = vsel %vm4376, %v4371, %v4372
        %v4379 = vsel %vm4376, %v4370, %v4371
        %v4380 = vsel %vm4376, %v4369, %v4370
        %v4381 = vsel %vm4376, %v4368, %v4369
        %v4382 = vsel %vm4376, %v4367, %v4368
        %v4383 = vsel %vm4376, %v4366, %v4367
        %v4384 = vsel %vm4376, %v4373, %v4366
        %4386 = vset.pattern.permute.xlu0 0
        %4387 = vperm.xlu0 %4386, %v983
        %v4388 = vpop.permute.xlu0 %4387
        %4391 = vset.pattern.permute.xlu0 0
        %4392 = vperm.xlu0 %4391, %v984
        %v4393 = vpop.permute.xlu0 %4392
        %4396 = vset.pattern.permute.xlu0 0
        %4397 = vperm.xlu0 %4396, %v985
        %v4398 = vpop.permute.xlu0 %4397
        %4401 = vset.pattern.permute.xlu0 0
        %4402 = vperm.xlu0 %4401, %v986
        %v4403 = vpop.permute.xlu0 %4402
        %4406 = vset.pattern.permute.xlu0 0
        %4407 = vperm.xlu0 %4406, %v987
        %v4408 = vpop.permute.xlu0 %4407
        %4411 = vset.pattern.permute.xlu0 0
        %4412 = vperm.xlu0 %4411, %v988
        %v4413 = vpop.permute.xlu0 %4412
        %4416 = vset.pattern.permute.xlu0 0
        %4417 = vperm.xlu0 %4416, %v989
        %v4418 = vpop.permute.xlu0 %4417
        %4421 = vset.pattern.permute.xlu0 0
        %4422 = vperm.xlu0 %4421, %v990
        %v4423 = vpop.permute.xlu0 %4422
        %v4425 = vmul.f32 %v4377, %v4388
        %v4426 = vmul.f32 %v4384, %v4393
        %v4427 = vmul.f32 %v4383, %v4398
        %v4428 = vmul.f32 %v4382, %v4403
        %v4429 = vmul.f32 %v4381, %v4408
        %v4430 = vmul.f32 %v4380, %v4413
        %v4431 = vmul.f32 %v4379, %v4418
        %v4432 = vmul.f32 %v4378, %v4423
        %4433 = vset.pattern.permute.xlu0 1
        %4434 = vperm.xlu0 %4433, %v983
        %v4435 = vpop.permute.xlu0 %4434
        %4437 = vset.pattern.permute.xlu0 1
        %4438 = vperm.xlu0 %4437, %v984
        %v4439 = vpop.permute.xlu0 %4438
        %4441 = vset.pattern.permute.xlu0 1
        %4442 = vperm.xlu0 %4441, %v985
        %v4443 = vpop.permute.xlu0 %4442
        %4445 = vset.pattern.permute.xlu0 1
        %4446 = vperm.xlu0 %4445, %v986
        %v4447 = vpop.permute.xlu0 %4446
        %4449 = vset.pattern.permute.xlu0 1
        %4450 = vperm.xlu0 %4449, %v987
        %v4451 = vpop.permute.xlu0 %4450
        %4453 = vset.pattern.permute.xlu0 1
        %4454 = vperm.xlu0 %4453, %v988
        %v4455 = vpop.permute.xlu0 %4454
        %4457 = vset.pattern.permute.xlu0 1
        %4458 = vperm.xlu0 %4457, %v989
        %v4459 = vpop.permute.xlu0 %4458
        %4461 = vset.pattern.permute.xlu0 1
        %4462 = vperm.xlu0 %4461, %v990
        %v4463 = vpop.permute.xlu0 %4462
        %v4465 = vmul.f32 %v2357, %v4435
        %v4466 = vmul.f32 %v2350, %v4439
        %v4467 = vmul.f32 %v2351, %v4443
        %v4468 = vmul.f32 %v2352, %v4447
        %v4469 = vmul.f32 %v2353, %v4451
        %v4470 = vmul.f32 %v2354, %v4455
        %v4471 = vmul.f32 %v2355, %v4459
        %v4472 = vmul.f32 %v2356, %v4463
        %v4473 = vrot.slane %v2350, 1
        %v4474 = vrot.slane %v2351, 1
        %v4475 = vrot.slane %v2352, 1
        %v4476 = vrot.slane %v2353, 1
        %v4477 = vrot.slane %v2354, 1
        %v4478 = vrot.slane %v2355, 1
        %v4479 = vrot.slane %v2356, 1
        %v4480 = vrot.slane %v2357, 1
        %vm4481 = vcmp.lt.s32.totalorder %v4375, 7
        %v4482 = vsel %vm4481, %v4479, %v4480
        %v4483 = vsel %vm4481, %v4478, %v4479
        %v4484 = vsel %vm4481, %v4477, %v4478
        %v4485 = vsel %vm4481, %v4476, %v4477
        %v4486 = vsel %vm4481, %v4475, %v4476
        %v4487 = vsel %vm4481, %v4474, %v4475
        %v4488 = vsel %vm4481, %v4473, %v4474
        %v4489 = vsel %vm4481, %v4480, %v4473
        %4490 = vset.pattern.permute.xlu0 2
        %4491 = vperm.xlu0 %4490, %v983
        %v4492 = vpop.permute.xlu0 %4491
        %4494 = vset.pattern.permute.xlu0 2
        %4495 = vperm.xlu0 %4494, %v984
        %v4496 = vpop.permute.xlu0 %4495
        %4498 = vset.pattern.permute.xlu0 2
        %4499 = vperm.xlu0 %4498, %v985
        %v4500 = vpop.permute.xlu0 %4499
        %4502 = vset.pattern.permute.xlu0 2
        %4503 = vperm.xlu0 %4502, %v986
        %v4504 = vpop.permute.xlu0 %4503
        %4506 = vset.pattern.permute.xlu0 2
        %4507 = vperm.xlu0 %4506, %v987
        %v4508 = vpop.permute.xlu0 %4507
        %4510 = vset.pattern.permute.xlu0 2
        %4511 = vperm.xlu0 %4510, %v988
        %v4512 = vpop.permute.xlu0 %4511
        %4514 = vset.pattern.permute.xlu0 2
        %4515 = vperm.xlu0 %4514, %v989
        %v4516 = vpop.permute.xlu0 %4515
        %4518 = vset.pattern.permute.xlu0 2
        %4519 = vperm.xlu0 %4518, %v990
        %v4520 = vpop.permute.xlu0 %4519
        %v4522 = vmul.f32 %v4489, %v4492
        %v4523 = vmul.f32 %v4488, %v4496
        %v4524 = vmul.f32 %v4487, %v4500
        %v4525 = vmul.f32 %v4486, %v4504
        %v4526 = vmul.f32 %v4485, %v4508
        %v4527 = vmul.f32 %v4484, %v4512
        %v4528 = vmul.f32 %v4483, %v4516
        %v4529 = vmul.f32 %v4482, %v4520
        %4530 = vset.pattern.permute.xlu0 3
        %4531 = vperm.xlu0 %4530, %v983
        %v4532 = vpop.permute.xlu0 %4531
        %4534 = vset.pattern.permute.xlu0 3
        %4535 = vperm.xlu0 %4534, %v984
        %v4536 = vpop.permute.xlu0 %4535
        %4538 = vset.pattern.permute.xlu0 3
        %4539 = vperm.xlu0 %4538, %v985
        %v4540 = vpop.permute.xlu0 %4539
        %4542 = vset.pattern.permute.xlu0 3
        %4543 = vperm.xlu0 %4542, %v986
        %v4544 = vpop.permute.xlu0 %4543
        %4546 = vset.pattern.permute.xlu0 3
        %4547 = vperm.xlu0 %4546, %v987
        %v4548 = vpop.permute.xlu0 %4547
        %4550 = vset.pattern.permute.xlu0 3
        %4551 = vperm.xlu0 %4550, %v988
        %v4552 = vpop.permute.xlu0 %4551
        %4554 = vset.pattern.permute.xlu0 3
        %4555 = vperm.xlu0 %4554, %v989
        %v4556 = vpop.permute.xlu0 %4555
        %4558 = vset.pattern.permute.xlu0 3
        %4559 = vperm.xlu0 %4558, %v990
        %v4560 = vpop.permute.xlu0 %4559
        %v4562 = vmul.f32 %v4384, %v4532
        %v4563 = vmul.f32 %v4383, %v4536
        %v4564 = vmul.f32 %v4382, %v4540
        %v4565 = vmul.f32 %v4381, %v4544
        %v4566 = vmul.f32 %v4380, %v4548
        %v4567 = vmul.f32 %v4379, %v4552
        %v4568 = vmul.f32 %v4378, %v4556
        %v4569 = vmul.f32 %v4377, %v4560
        %4570 = vset.pattern.permute.xlu0 5
        %4571 = vperm.xlu0 %4570, %v983
        %v4572 = vpop.permute.xlu0 %4571
        %4574 = vset.pattern.permute.xlu0 5
        %4575 = vperm.xlu0 %4574, %v984
        %v4576 = vpop.permute.xlu0 %4575
        %4578 = vset.pattern.permute.xlu0 5
        %4579 = vperm.xlu0 %4578, %v985
        %v4580 = vpop.permute.xlu0 %4579
        %4582 = vset.pattern.permute.xlu0 5
        %4583 = vperm.xlu0 %4582, %v986
        %v4584 = vpop.permute.xlu0 %4583
        %4586 = vset.pattern.permute.xlu0 5
        %4587 = vperm.xlu0 %4586, %v987
        %v4588 = vpop.permute.xlu0 %4587
        %4590 = vset.pattern.permute.xlu0 5
        %4591 = vperm.xlu0 %4590, %v988
        %v4592 = vpop.permute.xlu0 %4591
        %4594 = vset.pattern.permute.xlu0 5
        %4595 = vperm.xlu0 %4594, %v989
        %v4596 = vpop.permute.xlu0 %4595
        %4598 = vset.pattern.permute.xlu0 5
        %4599 = vperm.xlu0 %4598, %v990
        %v4600 = vpop.permute.xlu0 %4599
        %v4602 = vmul.f32 %v4488, %v4572
        %v4603 = vmul.f32 %v4487, %v4576
        %v4604 = vmul.f32 %v4486, %v4580
        %v4605 = vmul.f32 %v4485, %v4584
        %v4606 = vmul.f32 %v4484, %v4588
        %v4607 = vmul.f32 %v4483, %v4592
        %v4608 = vmul.f32 %v4482, %v4596
        %v4609 = vmul.f32 %v4489, %v4600
        %4610 = vset.pattern.permute.xlu0 6
        %4611 = vperm.xlu0 %4610, %v983
        %v4612 = vpop.permute.xlu0 %4611
        %4614 = vset.pattern.permute.xlu0 6
        %4615 = vperm.xlu0 %4614, %v984
        %v4616 = vpop.permute.xlu0 %4615
        %4618 = vset.pattern.permute.xlu0 6
        %4619 = vperm.xlu0 %4618, %v985
        %v4620 = vpop.permute.xlu0 %4619
        %4622 = vset.pattern.permute.xlu0 6
        %4623 = vperm.xlu0 %4622, %v986
        %v4624 = vpop.permute.xlu0 %4623
        %4626 = vset.pattern.permute.xlu0 6
        %4627 = vperm.xlu0 %4626, %v987
        %v4628 = vpop.permute.xlu0 %4627
        %4630 = vset.pattern.permute.xlu0 6
        %4631 = vperm.xlu0 %4630, %v988
        %v4632 = vpop.permute.xlu0 %4631
        %4634 = vset.pattern.permute.xlu0 6
        %4635 = vperm.xlu0 %4634, %v989
        %v4636 = vpop.permute.xlu0 %4635
        %4638 = vset.pattern.permute.xlu0 6
        %4639 = vperm.xlu0 %4638, %v990
        %v4640 = vpop.permute.xlu0 %4639
        %v4642 = vmul.f32 %v4383, %v4612
        %v4643 = vmul.f32 %v4382, %v4616
        %v4644 = vmul.f32 %v4381, %v4620
        %v4645 = vmul.f32 %v4380, %v4624
        %v4646 = vmul.f32 %v4379, %v4628
        %v4647 = vmul.f32 %v4378, %v4632
        %v4648 = vmul.f32 %v4377, %v4636
        %v4649 = vmul.f32 %v4384, %v4640
        %4650 = vset.pattern.permute.xlu0 7
        %4651 = vperm.xlu0 %4650, %v983
        %v4652 = vpop.permute.xlu0 %4651
        %4654 = vset.pattern.permute.xlu0 7
        %4655 = vperm.xlu0 %4654, %v984
        %v4656 = vpop.permute.xlu0 %4655
        %4658 = vset.pattern.permute.xlu0 7
        %4659 = vperm.xlu0 %4658, %v985
        %v4660 = vpop.permute.xlu0 %4659
        %4662 = vset.pattern.permute.xlu0 7
        %4663 = vperm.xlu0 %4662, %v986
        %v4664 = vpop.permute.xlu0 %4663
        %4666 = vset.pattern.permute.xlu0 7
        %4667 = vperm.xlu0 %4666, %v987
        %v4668 = vpop.permute.xlu0 %4667
        %4670 = vset.pattern.permute.xlu0 7
        %4671 = vperm.xlu0 %4670, %v988
        %v4672 = vpop.permute.xlu0 %4671
        %4674 = vset.pattern.permute.xlu0 7
        %4675 = vperm.xlu0 %4674, %v989
        %v4676 = vpop.permute.xlu0 %4675
        %4678 = vset.pattern.permute.xlu0 7
        %4679 = vperm.xlu0 %4678, %v990
        %v4680 = vpop.permute.xlu0 %4679
        %v4682 = vmul.f32 %v2351, %v4652
        %v4683 = vmul.f32 %v2352, %v4656
        %v4684 = vmul.f32 %v2353, %v4660
        %v4685 = vmul.f32 %v2354, %v4664
        %v4686 = vmul.f32 %v2355, %v4668
        %v4687 = vmul.f32 %v2356, %v4672
        %v4688 = vmul.f32 %v2357, %v4676
        %v4689 = vmul.f32 %v2350, %v4680
        %4690 = vset.pattern.permute.xlu0 8
        %4691 = vperm.xlu0 %4690, %v983
        %v4692 = vpop.permute.xlu0 %4691
        %4694 = vset.pattern.permute.xlu0 8
        %4695 = vperm.xlu0 %4694, %v984
        %v4696 = vpop.permute.xlu0 %4695
        %4698 = vset.pattern.permute.xlu0 8
        %4699 = vperm.xlu0 %4698, %v985
        %v4700 = vpop.permute.xlu0 %4699
        %4702 = vset.pattern.permute.xlu0 8
        %4703 = vperm.xlu0 %4702, %v986
        %v4704 = vpop.permute.xlu0 %4703
        %4706 = vset.pattern.permute.xlu0 8
        %4707 = vperm.xlu0 %4706, %v987
        %v4708 = vpop.permute.xlu0 %4707
        %4710 = vset.pattern.permute.xlu0 8
        %4711 = vperm.xlu0 %4710, %v988
        %v4712 = vpop.permute.xlu0 %4711
        %4714 = vset.pattern.permute.xlu0 8
        %4715 = vperm.xlu0 %4714, %v989
        %v4716 = vpop.permute.xlu0 %4715
        %4718 = vset.pattern.permute.xlu0 8
        %4719 = vperm.xlu0 %4718, %v990
        %v4720 = vpop.permute.xlu0 %4719
        %v4722 = vmul.f32 %v4487, %v4692
        %v4723 = vmul.f32 %v4486, %v4696
        %v4724 = vmul.f32 %v4485, %v4700
        %v4725 = vmul.f32 %v4484, %v4704
        %v4726 = vmul.f32 %v4483, %v4708
        %v4727 = vmul.f32 %v4482, %v4712
        %v4728 = vmul.f32 %v4489, %v4716
        %v4729 = vmul.f32 %v4488, %v4720
        %4738 = vrot.lane.b32.xlu0 %v4465, 64
        %v4739 = vpop.permute.xlu0 %4738
        %4740 = vrot.lane.b32.xlu0 %v4466, 64
        %v4741 = vpop.permute.xlu0 %4740
        %4742 = vrot.lane.b32.xlu0 %v4467, 64
        %v4743 = vpop.permute.xlu0 %4742
        %4744 = vrot.lane.b32.xlu0 %v4468, 64
        %v4745 = vpop.permute.xlu0 %4744
        %4746 = vrot.lane.b32.xlu0 %v4469, 64
        %v4747 = vpop.permute.xlu0 %4746
        %4748 = vrot.lane.b32.xlu0 %v4470, 64
        %v4749 = vpop.permute.xlu0 %4748
        %4750 = vrot.lane.b32.xlu0 %v4471, 64
        %v4751 = vpop.permute.xlu0 %4750
        %4752 = vrot.lane.b32.xlu0 %v4472, 64
        %v4753 = vpop.permute.xlu0 %4752
        %4770 = vrot.lane.b32.xlu0 %v4562, 64
        %v4771 = vpop.permute.xlu0 %4770
        %4772 = vrot.lane.b32.xlu0 %v4563, 64
        %v4773 = vpop.permute.xlu0 %4772
        %4774 = vrot.lane.b32.xlu0 %v4564, 64
        %v4775 = vpop.permute.xlu0 %4774
        %4776 = vrot.lane.b32.xlu0 %v4565, 64
        %v4777 = vpop.permute.xlu0 %4776
        %4778 = vrot.lane.b32.xlu0 %v4566, 64
        %v4779 = vpop.permute.xlu0 %4778
        %4780 = vrot.lane.b32.xlu0 %v4567, 64
        %v4781 = vpop.permute.xlu0 %4780
        %4782 = vrot.lane.b32.xlu0 %v4568, 64
        %v4783 = vpop.permute.xlu0 %4782
        %4784 = vrot.lane.b32.xlu0 %v4569, 64
        %v4785 = vpop.permute.xlu0 %4784
        %4802 = vrot.lane.b32.xlu0 %v4602, 64
        %v4803 = vpop.permute.xlu0 %4802
        %4804 = vrot.lane.b32.xlu0 %v4603, 64
        %v4805 = vpop.permute.xlu0 %4804
        %4806 = vrot.lane.b32.xlu0 %v4604, 64
        %v4807 = vpop.permute.xlu0 %4806
        %4808 = vrot.lane.b32.xlu0 %v4605, 64
        %v4809 = vpop.permute.xlu0 %4808
        %4810 = vrot.lane.b32.xlu0 %v4606, 64
        %v4811 = vpop.permute.xlu0 %4810
        %4812 = vrot.lane.b32.xlu0 %v4607, 64
        %v4813 = vpop.permute.xlu0 %4812
        %4814 = vrot.lane.b32.xlu0 %v4608, 64
        %v4815 = vpop.permute.xlu0 %4814
        %4816 = vrot.lane.b32.xlu0 %v4609, 64
        %v4817 = vpop.permute.xlu0 %4816
        %4834 = vrot.lane.b32.xlu0 %v4682, 64
        %v4835 = vpop.permute.xlu0 %4834
        %4836 = vrot.lane.b32.xlu0 %v4683, 64
        %v4837 = vpop.permute.xlu0 %4836
        %4838 = vrot.lane.b32.xlu0 %v4684, 64
        %v4839 = vpop.permute.xlu0 %4838
        %4840 = vrot.lane.b32.xlu0 %v4685, 64
        %v4841 = vpop.permute.xlu0 %4840
        %4842 = vrot.lane.b32.xlu0 %v4686, 64
        %v4843 = vpop.permute.xlu0 %4842
        %4844 = vrot.lane.b32.xlu0 %v4687, 64
        %v4845 = vpop.permute.xlu0 %4844
        %4846 = vrot.lane.b32.xlu0 %v4688, 64
        %v4847 = vpop.permute.xlu0 %4846
        %4848 = vrot.lane.b32.xlu0 %v4689, 64
        %v4849 = vpop.permute.xlu0 %4848
        %vm4858 = vcmask 523264
        %v4859 = vsel %vm4858, %v4425, %v4739
        %v4860 = vsel %vm4858, %v4426, %v4741
        %v4861 = vsel %vm4858, %v4427, %v4743
        %v4862 = vsel %vm4858, %v4428, %v4745
        %v4863 = vsel %vm4858, %v4429, %v4747
        %v4864 = vsel %vm4858, %v4430, %v4749
        %v4865 = vsel %vm4858, %v4431, %v4751
        %v4866 = vsel %vm4858, %v4432, %v4753
        %v4867 = vsel %vm4858, %v4522, %v4771
        %v4868 = vsel %vm4858, %v4523, %v4773
        %v4869 = vsel %vm4858, %v4524, %v4775
        %v4870 = vsel %vm4858, %v4525, %v4777
        %v4871 = vsel %vm4858, %v4526, %v4779
        %v4872 = vsel %vm4858, %v4527, %v4781
        %v4873 = vsel %vm4858, %v4528, %v4783
        %v4874 = vsel %vm4858, %v4529, %v4785
        %v4875 = vsel %vm4858, %v2350, %v4803
        %v4876 = vsel %vm4858, %v2351, %v4805
        %v4877 = vsel %vm4858, %v2352, %v4807
        %v4878 = vsel %vm4858, %v2353, %v4809
        %v4879 = vsel %vm4858, %v2354, %v4811
        %v4880 = vsel %vm4858, %v2355, %v4813
        %v4881 = vsel %vm4858, %v2356, %v4815
        %v4882 = vsel %vm4858, %v2357, %v4817
        %v4883 = vsel %vm4858, %v4642, %v4835
        %v4884 = vsel %vm4858, %v4643, %v4837
        %v4885 = vsel %vm4858, %v4644, %v4839
        %v4886 = vsel %vm4858, %v4645, %v4841
        %v4887 = vsel %vm4858, %v4646, %v4843
        %v4888 = vsel %vm4858, %v4647, %v4845
        %v4889 = vsel %vm4858, %v4648, %v4847
        %v4890 = vsel %vm4858, %v4649, %v4849
        %v4891 = vpack.c.bf16 %v4860, %v4859
        %v4892 = vpack.c.bf16 %v4868, %v4867
        %v4893 = vpack.c.bf16 %v4876, %v4875
        %v4894 = vpack.c.bf16 %v4884, %v4883
        %v4895 = vpack.c.bf16 %v4723, %v4722
        %v4896 = vpack.c.bf16 %v4862, %v4861
        %v4897 = vpack.c.bf16 %v4870, %v4869
        %v4898 = vpack.c.bf16 %v4878, %v4877
        %v4899 = vpack.c.bf16 %v4886, %v4885
        %v4900 = vpack.c.bf16 %v4725, %v4724
        %v4901 = vpack.c.bf16 %v4864, %v4863
        %v4902 = vpack.c.bf16 %v4872, %v4871
        %v4903 = vpack.c.bf16 %v4880, %v4879
        %v4904 = vpack.c.bf16 %v4888, %v4887
        %v4905 = vpack.c.bf16 %v4727, %v4726
        %v4906 = vpack.c.bf16 %v4866, %v4865
        %v4907 = vpack.c.bf16 %v4874, %v4873
        %v4908 = vpack.c.bf16 %v4882, %v4881
        %v4909 = vpack.c.bf16 %v4890, %v4889
        %v4910 = vpack.c.bf16 %v4729, %v4728
        %v4912 = vlaneseq
        %v4913 = vshrl.u32 %v4912, 7
        %v4914 = vsub.s32 0, %v4913
        %v4915 = vrot.slane %v4365, %v4914
        %v4989 = vunpack.c.l.b16 %v4293
        %v4990 = vunpack.c.l.b16 %v4294
        %v4991 = vunpack.c.l.b16 %v4295
        %v4992 = vunpack.c.l.b16 %v4296
        %v4993 = vunpack.c.l.b16 %v4297
        %v4994 = vunpack.c.l.b16 %v4298
        %v4995 = vunpack.c.l.b16 %v4299
        %v4996 = vunpack.c.l.b16 %v4300
        %v4997 = vunpack.c.l.b16 %v4301
        %v4998 = vunpack.c.l.b16 %v4302
        %v4999 = vunpack.c.l.b16 %v4303
        %v5000 = vunpack.c.l.b16 %v4304
        %v5001 = vunpack.c.l.b16 %v4305
        %v5002 = vunpack.c.l.b16 %v4306
        %v5003 = vunpack.c.l.b16 %v4307
        %v5004 = vunpack.c.l.b16 %v4308
        %v5005 = vunpack.c.l.b16 %v4309
        %v5006 = vunpack.c.l.b16 %v4310
        %v5007 = vunpack.c.l.b16 %v4311
        %v5008 = vunpack.c.l.b16 %v4312
        %v5009 = vunpack.c.l.b16 %v4313
        %v5010 = vunpack.c.l.b16 %v4314
        %v5011 = vunpack.c.l.b16 %v4315
        %v5012 = vunpack.c.l.b16 %v4316
        %v5013 = vunpack.c.l.b16 %v4317
        %v5014 = vunpack.c.l.b16 %v4318
        %v5015 = vunpack.c.l.b16 %v4319
        %v5016 = vunpack.c.l.b16 %v4320
        %v5017 = vunpack.c.l.b16 %v4321
        %v5018 = vunpack.c.l.b16 %v4322
        %v5019 = vunpack.c.l.b16 %v4323
        %v5020 = vunpack.c.l.b16 %v4324
        %v5021 = vunpack.c.l.b16 %v4325
        %v5022 = vunpack.c.l.b16 %v4326
        %v5023 = vunpack.c.l.b16 %v4327
        %v5024 = vunpack.c.l.b16 %v4328
        %v5025 = vunpack.c.l.b16 %v4329
        %v5026 = vunpack.c.l.b16 %v4330
        %v5027 = vunpack.c.l.b16 %v4331
        %v5028 = vunpack.c.l.b16 %v4332
        %v5029 = vunpack.c.l.b16 %v4333
        %v5030 = vunpack.c.l.b16 %v4334
        %v5031 = vunpack.c.l.b16 %v4335
        %v5032 = vunpack.c.l.b16 %v4336
        %v5033 = vunpack.c.l.b16 %v4337
        %v5034 = vunpack.c.l.b16 %v4338
        %v5035 = vunpack.c.l.b16 %v4339
        %v5036 = vunpack.c.l.b16 %v4340
        %v5037 = vunpack.c.l.b16 %v4341
        %v5038 = vunpack.c.l.b16 %v4342
        %v5039 = vunpack.c.l.b16 %v4343
        %v5040 = vunpack.c.l.b16 %v4344
        %v5041 = vunpack.c.l.b16 %v4345
        %v5042 = vunpack.c.l.b16 %v4346
        %v5043 = vunpack.c.l.b16 %v4347
        %v5044 = vunpack.c.l.b16 %v4348
        %v5045 = vunpack.c.l.b16 %v4349
        %v5046 = vunpack.c.l.b16 %v4350
        %v5047 = vunpack.c.l.b16 %v4351
        %v5048 = vunpack.c.l.b16 %v4352
        %v5049 = vunpack.c.l.b16 %v4353
        %v5050 = vunpack.c.l.b16 %v4354
        %v5051 = vunpack.c.l.b16 %v4355
        %v5052 = vunpack.c.l.b16 %v4356
        %v5053 = vunpack.c.l.b16 %v4357
        %v5054 = vunpack.c.l.b16 %v4358
        %v5055 = vunpack.c.l.b16 %v4359
        %v5056 = vunpack.c.l.b16 %v4360
        %v5057 = vunpack.c.l.b16 %v4361
        %v5058 = vunpack.c.l.b16 %v4362
        %v5059 = vunpack.c.l.b16 %v4363
        %v5060 = vunpack.c.l.b16 %v4364
        %v5061 = vpack.c.b16 %v4990, %v4989
        %v5062 = vpack.c.b16 %v4992, %v4991
        %v5063 = vpack.c.b16 %v4994, %v4993
        %v5064 = vpack.c.b16 %v4996, %v4995
        %v5065 = vpack.c.b16 %v4998, %v4997
        %v5066 = vpack.c.b16 %v5000, %v4999
        %v5067 = vpack.c.b16 %v5002, %v5001
        %v5068 = vpack.c.b16 %v5004, %v5003
        %v5069 = vpack.c.b16 %v5006, %v5005
        %v5070 = vpack.c.b16 %v5008, %v5007
        %v5071 = vpack.c.b16 %v5010, %v5009
        %v5072 = vpack.c.b16 %v5012, %v5011
        %v5073 = vpack.c.b16 %v5014, %v5013
        %v5074 = vpack.c.b16 %v5016, %v5015
        %v5075 = vpack.c.b16 %v5018, %v5017
        %v5076 = vpack.c.b16 %v5020, %v5019
        %v5077 = vpack.c.b16 %v5022, %v5021
        %v5078 = vpack.c.b16 %v5024, %v5023
        %v5079 = vpack.c.b16 %v5026, %v5025
        %v5080 = vpack.c.b16 %v5028, %v5027
        %v5081 = vpack.c.b16 %v5030, %v5029
        %v5082 = vpack.c.b16 %v5032, %v5031
        %v5083 = vpack.c.b16 %v5034, %v5033
        %v5084 = vpack.c.b16 %v5036, %v5035
        %v5085 = vpack.c.b16 %v5038, %v5037
        %v5086 = vpack.c.b16 %v5040, %v5039
        %v5087 = vpack.c.b16 %v5042, %v5041
        %v5088 = vpack.c.b16 %v5044, %v5043
        %v5089 = vpack.c.b16 %v5046, %v5045
        %v5090 = vpack.c.b16 %v5048, %v5047
        %v5091 = vpack.c.b16 %v5050, %v5049
        %v5092 = vpack.c.b16 %v5052, %v5051
        %v5093 = vpack.c.b16 %v5054, %v5053
        %v5094 = vpack.c.b16 %v5056, %v5055
        %v5095 = vpack.c.b16 %v5058, %v5057
        %v5096 = vpack.c.b16 %v5060, %v5059
        %v5134 = vsel %vm4858, %v4895, 0
        %v5137 = vsel %vm4858, %v4900, 0
        %v5140 = vsel %vm4858, %v4905, 0
        %v5143 = vsel %vm4858, %v4910, 0
        %5145 = vmatprep.subr.bf16.mxu0 0
        %5146 = vmatpush1.bf16.msra.mxu0 %v5068
        %5147 = vmatprep.subr.bf16.mxu0 0
        %5148 = vmatpush1.bf16.msra.mxu0 %v5067
        %5149 = vmatprep.subr.bf16.mxu0 0
        %5150 = vmatpush1.bf16.msra.mxu0 %v5066
        %5151 = vmatprep.subr.bf16.mxu0 0
        %5152 = vmatpush1.bf16.msra.mxu0 %v5065
        %5153 = vmatprep.subr.bf16.mxu0 0
        %5154 = vmatpush1.bf16.msra.mxu0 %v5064
        %5155 = vmatprep.subr.bf16.mxu0 0
        %5156 = vmatpush1.bf16.msra.mxu0 %v5063
        %5157 = vmatprep.subr.bf16.mxu0 0
        %5158 = vmatpush1.bf16.msra.mxu0 %v5062
        %5159 = vmatprep.subr.bf16.mxu0 0
        %5160 = vmatpush1.bf16.msra.mxu0 %v5061
        %5161 = vmatprep.subr.bf16.mxu0 0
        %5162 = vmatpush2.bf16.msra.mxu0 %v5076
        %5163 = vmatprep.subr.bf16.mxu0 0
        %5164 = vmatpush2.bf16.msra.mxu0 %v5075
        %5165 = vmatprep.subr.bf16.mxu0 0
        %5166 = vmatpush2.bf16.msra.mxu0 %v5074
        %5167 = vmatprep.subr.bf16.mxu0 0
        %5168 = vmatpush2.bf16.msra.mxu0 %v5073
        %5169 = vmatprep.subr.bf16.mxu0 0
        %5170 = vmatpush2.bf16.msra.mxu0 %v5072
        %5171 = vmatprep.subr.bf16.mxu0 0
        %5172 = vmatpush2.bf16.msra.mxu0 %v5071
        %5173 = vmatprep.subr.bf16.mxu0 0
        %5174 = vmatpush2.bf16.msra.mxu0 %v5070
        %5175 = vmatprep.subr.bf16.mxu0 0
        %5176 = vmatpush2.bf16.msra.mxu0 %v5069
        %5177 = vmatprep.mubr.bf16.mxu0 %v4892
        %5178 = vmatmul.mubr.bf16.gmra.mxu0 %v4891
        %v5179 = vpop.f32.mrf.mxu0
        %v5180 = vadd.f32 %v4915, %v5179
        %v5181 = vpop.f32.mrf.mxu0
        %v5182 = vpop.f32.mrf.mxu0
        %v5183 = vadd.f32 %v4915, %v5182
        %v5184 = vpop.f32.mrf.mxu0
        %5185 = vmatprep.mubr.bf16.mxu0 %v4897
        %5186 = vmatmul.mubr.bf16.gmra.mxu0 %v4896
        %v5187 = vpop.f32.mrf.mxu0
        %v5188 = vadd.f32 %v4915, %v5187
        %v5189 = vpop.f32.mrf.mxu0
        %v5190 = vpop.f32.mrf.mxu0
        %v5191 = vadd.f32 %v4915, %v5190
        %v5192 = vpop.f32.mrf.mxu0
        %5193 = vmatprep.mubr.bf16.mxu0 %v4902
        %5194 = vmatmul.mubr.bf16.gmra.mxu0 %v4901
        %v5195 = vpop.f32.mrf.mxu0
        %v5196 = vadd.f32 %v4915, %v5195
        %v5197 = vpop.f32.mrf.mxu0
        %v5198 = vpop.f32.mrf.mxu0
        %v5199 = vadd.f32 %v4915, %v5198
        %v5200 = vpop.f32.mrf.mxu0
        %5201 = vmatprep.mubr.bf16.mxu0 %v4907
        %5202 = vmatmul.mubr.bf16.gmra.mxu0 %v4906
        %v5203 = vpop.f32.mrf.mxu0
        %v5204 = vadd.f32 %v4915, %v5203
        %v5205 = vpop.f32.mrf.mxu0
        %v5206 = vpop.f32.mrf.mxu0
        %v5207 = vadd.f32 %v4915, %v5206
        %v5208 = vpop.f32.mrf.mxu0
        %5209 = vdwg.mxu0
        %5210 = vmatprep.subr.bf16.mxu0 0
        %5211 = vmatpush1.bf16.msra.mxu0 %v5084
        %5212 = vmatprep.subr.bf16.mxu0 0
        %5213 = vmatpush1.bf16.msra.mxu0 %v5083
        %5214 = vmatprep.subr.bf16.mxu0 0
        %5215 = vmatpush1.bf16.msra.mxu0 %v5082
        %5216 = vmatprep.subr.bf16.mxu0 0
        %5217 = vmatpush1.bf16.msra.mxu0 %v5081
        %5218 = vmatprep.subr.bf16.mxu0 0
        %5219 = vmatpush1.bf16.msra.mxu0 %v5080
        %5220 = vmatprep.subr.bf16.mxu0 0
        %5221 = vmatpush1.bf16.msra.mxu0 %v5079
        %5222 = vmatprep.subr.bf16.mxu0 0
        %5223 = vmatpush1.bf16.msra.mxu0 %v5078
        %5224 = vmatprep.subr.bf16.mxu0 0
        %5225 = vmatpush1.bf16.msra.mxu0 %v5077
        %5226 = vmatprep.subr.bf16.mxu0 0
        %5227 = vmatpush2.bf16.msra.mxu0 %v5092
        %5228 = vmatprep.subr.bf16.mxu0 0
        %5229 = vmatpush2.bf16.msra.mxu0 %v5091
        %5230 = vmatprep.subr.bf16.mxu0 0
        %5231 = vmatpush2.bf16.msra.mxu0 %v5090
        %5232 = vmatprep.subr.bf16.mxu0 0
        %5233 = vmatpush2.bf16.msra.mxu0 %v5089
        %5234 = vmatprep.subr.bf16.mxu0 0
        %5235 = vmatpush2.bf16.msra.mxu0 %v5088
        %5236 = vmatprep.subr.bf16.mxu0 0
        %5237 = vmatpush2.bf16.msra.mxu0 %v5087
        %5238 = vmatprep.subr.bf16.mxu0 0
        %5239 = vmatpush2.bf16.msra.mxu0 %v5086
        %5240 = vmatprep.subr.bf16.mxu0 0
        %5241 = vmatpush2.bf16.msra.mxu0 %v5085
        %5242 = vmatprep.mubr.bf16.mxu0 %v4894
        %5243 = vmatmul.mubr.bf16.gmra.mxu0 %v4893
        %v5244 = vpop.f32.mrf.mxu0
        %v5245 = vadd.f32 %v5180, %v5244
        %v5246 = vpop.f32.mrf.mxu0
        %v5247 = vpop.f32.mrf.mxu0
        %v5248 = vadd.f32 %v5183, %v5247
        %v5249 = vpop.f32.mrf.mxu0
        %5250 = vmatprep.mubr.bf16.mxu0 %v4899
        %5251 = vmatmul.mubr.bf16.gmra.mxu0 %v4898
        %v5252 = vpop.f32.mrf.mxu0
        %v5253 = vadd.f32 %v5188, %v5252
        %v5254 = vpop.f32.mrf.mxu0
        %v5255 = vpop.f32.mrf.mxu0
        %v5256 = vadd.f32 %v5191, %v5255
        %v5257 = vpop.f32.mrf.mxu0
        %5258 = vmatprep.mubr.bf16.mxu0 %v4904
        %5259 = vmatmul.mubr.bf16.gmra.mxu0 %v4903
        %v5260 = vpop.f32.mrf.mxu0
        %v5261 = vadd.f32 %v5196, %v5260
        %v5262 = vpop.f32.mrf.mxu0
        %v5263 = vpop.f32.mrf.mxu0
        %v5264 = vadd.f32 %v5199, %v5263
        %v5265 = vpop.f32.mrf.mxu0
        %5266 = vmatprep.mubr.bf16.mxu0 %v4909
        %5267 = vmatmul.mubr.bf16.gmra.mxu0 %v4908
        %v5268 = vpop.f32.mrf.mxu0
        %v5269 = vadd.f32 %v5204, %v5268
        %v5270 = vpop.f32.mrf.mxu0
        %v5271 = vpop.f32.mrf.mxu0
        %v5272 = vadd.f32 %v5207, %v5271
        %v5273 = vpop.f32.mrf.mxu0
        %5274 = vdwg.mxu0
        %5275 = vmatprep.subr.bf16.mxu0 0
        %5276 = vmatpush1.bf16.msra.mxu0 0
        %5277 = vmatprep.subr.bf16.mxu0 0
        %5278 = vmatpush1.bf16.msra.mxu0 0
        %5279 = vmatprep.subr.bf16.mxu0 0
        %5280 = vmatpush1.bf16.msra.mxu0 0
        %5281 = vmatprep.subr.bf16.mxu0 0
        %5282 = vmatpush1.bf16.msra.mxu0 0
        %5283 = vmatprep.subr.bf16.mxu0 0
        %5284 = vmatpush1.bf16.msra.mxu0 %v5096
        %5285 = vmatprep.subr.bf16.mxu0 0
        %5286 = vmatpush1.bf16.msra.mxu0 %v5095
        %5287 = vmatprep.subr.bf16.mxu0 0
        %5288 = vmatpush1.bf16.msra.mxu0 %v5094
        %5289 = vmatprep.subr.bf16.mxu0 0
        %5290 = vmatpush1.bf16.msra.mxu0 %v5093
        %5291 = vmatprep.subr.bf16.mxu0 0
        %5292 = vmatpush2.bf16.msra.mxu0 0
        %5293 = vmatprep.subr.bf16.mxu0 0
        %5294 = vmatpush2.bf16.msra.mxu0 0
        %5295 = vmatprep.subr.bf16.mxu0 0
        %5296 = vmatpush2.bf16.msra.mxu0 0
        %5297 = vmatprep.subr.bf16.mxu0 0
        %5298 = vmatpush2.bf16.msra.mxu0 0
        %5299 = vmatprep.subr.bf16.mxu0 0
        %5300 = vmatpush2.bf16.msra.mxu0 0
        %5301 = vmatprep.subr.bf16.mxu0 0
        %5302 = vmatpush2.bf16.msra.mxu0 0
        %5303 = vmatprep.subr.bf16.mxu0 0
        %5304 = vmatpush2.bf16.msra.mxu0 0
        %5305 = vmatprep.subr.bf16.mxu0 0
        %5306 = vmatpush2.bf16.msra.mxu0 0
        %5307 = vmatprep.mubr.bf16.mxu0 0
        %5308 = vmatmul.mubr.bf16.gmra.mxu0 %v5134
        %v5309 = vpop.f32.mrf.mxu0
        %v5310 = vadd.f32 %v5245, %v5309
        %v5311 = vpop.f32.mrf.mxu0
        %v5312 = vpop.f32.mrf.mxu0
        %v5313 = vadd.f32 %v5248, %v5312
        %v5314 = vpop.f32.mrf.mxu0
        %5315 = vmatprep.mubr.bf16.mxu0 0
        %5316 = vmatmul.mubr.bf16.gmra.mxu0 %v5137
        %v5317 = vpop.f32.mrf.mxu0
        %v5318 = vadd.f32 %v5253, %v5317
        %v5319 = vpop.f32.mrf.mxu0
        %v5320 = vpop.f32.mrf.mxu0
        %v5321 = vadd.f32 %v5256, %v5320
        %v5322 = vpop.f32.mrf.mxu0
        %5323 = vmatprep.mubr.bf16.mxu0 0
        %5324 = vmatmul.mubr.bf16.gmra.mxu0 %v5140
        %v5325 = vpop.f32.mrf.mxu0
        %v5326 = vadd.f32 %v5261, %v5325
        %v5327 = vpop.f32.mrf.mxu0
        %v5328 = vpop.f32.mrf.mxu0
        %v5329 = vadd.f32 %v5264, %v5328
        %v5330 = vpop.f32.mrf.mxu0
        %5331 = vmatprep.mubr.bf16.mxu0 0
        %5332 = vmatmul.mubr.bf16.gmra.mxu0 %v5143
        %v5333 = vpop.f32.mrf.mxu0
        %v5334 = vadd.f32 %v5269, %v5333
        %v5335 = vpop.f32.mrf.mxu0
        %v5336 = vpop.f32.mrf.mxu0
        %v5337 = vadd.f32 %v5272, %v5336
        %v5338 = vpop.f32.mrf.mxu0
        %5339 = vdwg.mxu0
        %v5340 = vadd.f32 %v5310, %v2336
        %v5341 = vadd.f32 %v5313, %v2337
        %v5342 = vadd.f32 %v5318, %v2338
        %v5343 = vadd.f32 %v5321, %v2339
        %v5344 = vadd.f32 %v5326, %v2340
        %v5345 = vadd.f32 %v5329, %v2341
        %v5346 = vadd.f32 %v5334, %v2342
        %v5347 = vadd.f32 %v5337, %v2343
        %5348 = vst.msk [vmem:[#allocation2] sm:$0xff] %vm4858, %v5340
        %5349 = vst.msk [vmem:[#allocation2 + $0x8] sm:$0xff] %vm4858, %v5341
        %5350 = vst.msk [vmem:[#allocation2 + $0x10] sm:$0xff] %vm4858, %v5342
        %5351 = vst.msk [vmem:[#allocation2 + $0x18] sm:$0xff] %vm4858, %v5343
        %5352 = vst.msk [vmem:[#allocation2 + $0x20] sm:$0xff] %vm4858, %v5344
        %5353 = vst.msk [vmem:[#allocation2 + $0x28] sm:$0xff] %vm4858, %v5345
        %5354 = vst.msk [vmem:[#allocation2 + $0x30] sm:$0xff] %vm4858, %v5346
        %5355 = vst.msk [vmem:[#allocation2 + $0x38] sm:$0xff] %vm4858, %v5347
        %p5356 = scmp.eq.s32.totalorder %s50, 4
        // Predicated region
        $region156: #{_lambda_.1} parent=83 // pred_check
          %p5357 = pneg %p5356
        $region157: #{_lambda_.1} parent=83 // pred_check_branch
          %5359 = sbr.rel (%p5357) target = $region159
        $region158: #{_lambda_.1} parent=83 // pred_region
          %v5360 = vld [vmem:[#allocation3] sm:$0xff]
          %v5361 = vld [vmem:[#allocation3 + $0x8] sm:$0xff]
          %v5362 = vld [vmem:[#allocation3 + $0x10] sm:$0xff]
          %v5363 = vld [vmem:[#allocation3 + $0x18] sm:$0xff]
          %v5364 = vld [vmem:[#allocation3 + $0x20] sm:$0xff]
          %v5365 = vld [vmem:[#allocation3 + $0x28] sm:$0xff]
          %v5366 = vld [vmem:[#allocation3 + $0x30] sm:$0xff]
          %v5367 = vld [vmem:[#allocation3 + $0x38] sm:$0xff]
          %v5368 = vadd.f32 %v5340, %v5360
          %v5369 = vadd.f32 %v5341, %v5361
          %v5370 = vadd.f32 %v5342, %v5362
          %v5371 = vadd.f32 %v5343, %v5363
          %v5372 = vadd.f32 %v5344, %v5364
          %v5373 = vadd.f32 %v5345, %v5365
          %v5374 = vadd.f32 %v5346, %v5366
          %v5375 = vadd.f32 %v5347, %v5367
          %v5376 = vld [vmem:[#allocation24] sm:$0xf]
          %v5377 = vld [vmem:[#allocation24 + $0x4] sm:$0xf]
          %v5378 = vld [vmem:[#allocation24 + $0x8] sm:$0xf]
          %v5379 = vld [vmem:[#allocation24 + $0xc] sm:$0xf]
          %v5380 = vld [vmem:[#allocation24 + $0x10] sm:$0xf]
          %v5381 = vld [vmem:[#allocation24 + $0x14] sm:$0xf]
          %v5382 = vld [vmem:[#allocation24 + $0x18] sm:$0xf]
          %v5383 = vld [vmem:[#allocation24 + $0x1c] sm:$0xf]
          %v5384 = vld [vmem:[#allocation24 + $0x20] sm:$0xf]
          %v5385 = vld [vmem:[#allocation24 + $0x24] sm:$0xf]
          %v5386 = vld [vmem:[#allocation24 + $0x28] sm:$0xf]
          %v5387 = vld [vmem:[#allocation24 + $0x2c] sm:$0xf]
          %v5388 = vld [vmem:[#allocation24 + $0x30] sm:$0xf]
          %v5389 = vld [vmem:[#allocation24 + $0x34] sm:$0xf]
          %v5390 = vld [vmem:[#allocation24 + $0x38] sm:$0xf]
          %v5391 = vld [vmem:[#allocation24 + $0x3c] sm:$0xf]
          %v5392 = vld [vmem:[#allocation24 + $0x40] sm:$0xf]
          %v5393 = vld [vmem:[#allocation24 + $0x44] sm:$0xf]
          %v5394 = vld [vmem:[#allocation24 + $0x48] sm:$0xf]
          %v5395 = vld [vmem:[#allocation24 + $0x4c] sm:$0xf]
          %v5396 = vld [vmem:[#allocation24 + $0x50] sm:$0xf]
          %v5397 = vld [vmem:[#allocation24 + $0x54] sm:$0xf]
          %v5398 = vld [vmem:[#allocation24 + $0x58] sm:$0xf]
          %v5399 = vld [vmem:[#allocation24 + $0x5c] sm:$0xf]
          %v5400 = vld [vmem:[#allocation24 + $0x60] sm:$0xf]
          %v5401 = vld [vmem:[#allocation24 + $0x64] sm:$0xf]
          %v5402 = vld [vmem:[#allocation24 + $0x68] sm:$0xf]
          %v5403 = vld [vmem:[#allocation24 + $0x6c] sm:$0xf]
          %v5404 = vld [vmem:[#allocation24 + $0x70] sm:$0xf]
          %v5405 = vld [vmem:[#allocation24 + $0x74] sm:$0xf]
          %v5406 = vld [vmem:[#allocation24 + $0x78] sm:$0xf]
          %v5407 = vld [vmem:[#allocation24 + $0x7c] sm:$0xf]
          %v5408 = vld [vmem:[#allocation24 + $0x80] sm:$0xf]
          %v5409 = vld [vmem:[#allocation24 + $0x84] sm:$0xf]
          %v5410 = vld [vmem:[#allocation24 + $0x88] sm:$0xf]
          %v5411 = vld [vmem:[#allocation24 + $0x8c] sm:$0xf]
          %v5412 = vld [vmem:[#allocation24 + $0x90] sm:$0xf]
          %v5413 = vld [vmem:[#allocation24 + $0x94] sm:$0xf]
          %v5414 = vld [vmem:[#allocation24 + $0x98] sm:$0xf]
          %v5415 = vld [vmem:[#allocation24 + $0x9c] sm:$0xf]
          %v5416 = vld [vmem:[#allocation24 + $0xa0] sm:$0xf]
          %v5417 = vld [vmem:[#allocation24 + $0xa4] sm:$0xf]
          %v5418 = vld [vmem:[#allocation24 + $0xa8] sm:$0xf]
          %v5419 = vld [vmem:[#allocation24 + $0xac] sm:$0xf]
          %v5420 = vld [vmem:[#allocation24 + $0xb0] sm:$0xf]
          %v5421 = vld [vmem:[#allocation24 + $0xb4] sm:$0xf]
          %v5422 = vld [vmem:[#allocation24 + $0xb8] sm:$0xf]
          %v5423 = vld [vmem:[#allocation24 + $0xbc] sm:$0xf]
          %v5424 = vld [vmem:[#allocation24 + $0xc0] sm:$0xf]
          %v5425 = vld [vmem:[#allocation24 + $0xc4] sm:$0xf]
          %v5426 = vld [vmem:[#allocation24 + $0xc8] sm:$0xf]
          %v5427 = vld [vmem:[#allocation24 + $0xcc] sm:$0xf]
          %v5428 = vld [vmem:[#allocation24 + $0xd0] sm:$0xf]
          %v5429 = vld [vmem:[#allocation24 + $0xd4] sm:$0xf]
          %v5430 = vld [vmem:[#allocation24 + $0xd8] sm:$0xf]
          %v5431 = vld [vmem:[#allocation24 + $0xdc] sm:$0xf]
          %v5432 = vld [vmem:[#allocation24 + $0xe0] sm:$0xf]
          %v5433 = vld [vmem:[#allocation24 + $0xe4] sm:$0xf]
          %v5434 = vld [vmem:[#allocation24 + $0xe8] sm:$0xf]
          %v5435 = vld [vmem:[#allocation24 + $0xec] sm:$0xf]
          %v5436 = vld [vmem:[#allocation24 + $0xf0] sm:$0xf]
          %v5437 = vld [vmem:[#allocation24 + $0xf4] sm:$0xf]
          %v5438 = vld [vmem:[#allocation24 + $0xf8] sm:$0xf]
          %v5439 = vld [vmem:[#allocation24 + $0xfc] sm:$0xf]
          %v5440 = vld [vmem:[#allocation24 + $0x100] sm:$0xf]
          %v5441 = vld [vmem:[#allocation24 + $0x104] sm:$0xf]
          %v5442 = vld [vmem:[#allocation24 + $0x108] sm:$0xf]
          %v5443 = vld [vmem:[#allocation24 + $0x10c] sm:$0xf]
          %v5444 = vld [vmem:[#allocation24 + $0x110] sm:$0xf]
          %v5445 = vld [vmem:[#allocation24 + $0x114] sm:$0xf]
          %v5446 = vld [vmem:[#allocation24 + $0x118] sm:$0xf]
          %v5447 = vld [vmem:[#allocation24 + $0x11c] sm:$0xf]
          %v5448 = vld [vmem:[#allocation26] sm:$0x1]
          %v5449 = vrot.slane %v5368, 7
          %v5450 = vrot.slane %v5369, 7
          %v5451 = vrot.slane %v5370, 7
          %v5452 = vrot.slane %v5371, 7
          %v5453 = vrot.slane %v5372, 7
          %v5454 = vrot.slane %v5373, 7
          %v5455 = vrot.slane %v5374, 7
          %v5456 = vrot.slane %v5375, 7
          %v5457 = vsel %vm4376, %v5455, %v5456
          %v5458 = vsel %vm4376, %v5454, %v5455
          %v5459 = vsel %vm4376, %v5453, %v5454
          %v5460 = vsel %vm4376, %v5452, %v5453
          %v5461 = vsel %vm4376, %v5451, %v5452
          %v5462 = vsel %vm4376, %v5450, %v5451
          %v5463 = vsel %vm4376, %v5449, %v5450
          %v5464 = vsel %vm4376, %v5456, %v5449
          %v5465 = vmul.f32 %v5457, %v4388
          %v5466 = vmul.f32 %v5464, %v4393
          %v5467 = vmul.f32 %v5463, %v4398
          %v5468 = vmul.f32 %v5462, %v4403
          %v5469 = vmul.f32 %v5461, %v4408
          %v5470 = vmul.f32 %v5460, %v4413
          %v5471 = vmul.f32 %v5459, %v4418
          %v5472 = vmul.f32 %v5458, %v4423
          %v5473 = vmul.f32 %v5375, %v4435
          %v5474 = vmul.f32 %v5368, %v4439
          %v5475 = vmul.f32 %v5369, %v4443
          %v5476 = vmul.f32 %v5370, %v4447
          %v5477 = vmul.f32 %v5371, %v4451
          %v5478 = vmul.f32 %v5372, %v4455
          %v5479 = vmul.f32 %v5373, %v4459
          %v5480 = vmul.f32 %v5374, %v4463
          %v5481 = vrot.slane %v5368, 1
          %v5482 = vrot.slane %v5369, 1
          %v5483 = vrot.slane %v5370, 1
          %v5484 = vrot.slane %v5371, 1
          %v5485 = vrot.slane %v5372, 1
          %v5486 = vrot.slane %v5373, 1
          %v5487 = vrot.slane %v5374, 1
          %v5488 = vrot.slane %v5375, 1
          %v5489 = vsel %vm4481, %v5487, %v5488
          %v5490 = vsel %vm4481, %v5486, %v5487
          %v5491 = vsel %vm4481, %v5485, %v5486
          %v5492 = vsel %vm4481, %v5484, %v5485
          %v5493 = vsel %vm4481, %v5483, %v5484
          %v5494 = vsel %vm4481, %v5482, %v5483
          %v5495 = vsel %vm4481, %v5481, %v5482
          %v5496 = vsel %vm4481, %v5488, %v5481
          %v5497 = vmul.f32 %v5496, %v4492
          %v5498 = vmul.f32 %v5495, %v4496
          %v5499 = vmul.f32 %v5494, %v4500
          %v5500 = vmul.f32 %v5493, %v4504
          %v5501 = vmul.f32 %v5492, %v4508
          %v5502 = vmul.f32 %v5491, %v4512
          %v5503 = vmul.f32 %v5490, %v4516
          %v5504 = vmul.f32 %v5489, %v4520
          %v5505 = vmul.f32 %v5464, %v4532
          %v5506 = vmul.f32 %v5463, %v4536
          %v5507 = vmul.f32 %v5462, %v4540
          %v5508 = vmul.f32 %v5461, %v4544
          %v5509 = vmul.f32 %v5460, %v4548
          %v5510 = vmul.f32 %v5459, %v4552
          %v5511 = vmul.f32 %v5458, %v4556
          %v5512 = vmul.f32 %v5457, %v4560
          %v5513 = vmul.f32 %v5495, %v4572
          %v5514 = vmul.f32 %v5494, %v4576
          %v5515 = vmul.f32 %v5493, %v4580
          %v5516 = vmul.f32 %v5492, %v4584
          %v5517 = vmul.f32 %v5491, %v4588
          %v5518 = vmul.f32 %v5490, %v4592
          %v5519 = vmul.f32 %v5489, %v4596
          %v5520 = vmul.f32 %v5496, %v4600
          %v5521 = vmul.f32 %v5463, %v4612
          %v5522 = vmul.f32 %v5462, %v4616
          %v5523 = vmul.f32 %v5461, %v4620
          %v5524 = vmul.f32 %v5460, %v4624
          %v5525 = vmul.f32 %v5459, %v4628
          %v5526 = vmul.f32 %v5458, %v4632
          %v5527 = vmul.f32 %v5457, %v4636
          %v5528 = vmul.f32 %v5464, %v4640
          %v5529 = vmul.f32 %v5369, %v4652
          %v5530 = vmul.f32 %v5370, %v4656
          %v5531 = vmul.f32 %v5371, %v4660
          %v5532 = vmul.f32 %v5372, %v4664
          %v5533 = vmul.f32 %v5373, %v4668
          %v5534 = vmul.f32 %v5374, %v4672
          %v5535 = vmul.f32 %v5375, %v4676
          %v5536 = vmul.f32 %v5368, %v4680
          %v5537 = vmul.f32 %v5494, %v4692
          %v5538 = vmul.f32 %v5493, %v4696
          %v5539 = vmul.f32 %v5492, %v4700
          %v5540 = vmul.f32 %v5491, %v4704
          %v5541 = vmul.f32 %v5490, %v4708
          %v5542 = vmul.f32 %v5489, %v4712
          %v5543 = vmul.f32 %v5496, %v4716
          %v5544 = vmul.f32 %v5495, %v4720
          %5553 = vrot.lane.b32.xlu0 %v5473, 64
          %v5554 = vpop.permute.xlu0 %5553
          %5555 = vrot.lane.b32.xlu0 %v5474, 64
          %v5556 = vpop.permute.xlu0 %5555
          %5557 = vrot.lane.b32.xlu0 %v5475, 64
          %v5558 = vpop.permute.xlu0 %5557
          %5559 = vrot.lane.b32.xlu0 %v5476, 64
          %v5560 = vpop.permute.xlu0 %5559
          %5561 = vrot.lane.b32.xlu0 %v5477, 64
          %v5562 = vpop.permute.xlu0 %5561
          %5563 = vrot.lane.b32.xlu0 %v5478, 64
          %v5564 = vpop.permute.xlu0 %5563
          %5565 = vrot.lane.b32.xlu0 %v5479, 64
          %v5566 = vpop.permute.xlu0 %5565
          %5567 = vrot.lane.b32.xlu0 %v5480, 64
          %v5568 = vpop.permute.xlu0 %5567
          %5585 = vrot.lane.b32.xlu0 %v5505, 64
          %v5586 = vpop.permute.xlu0 %5585
          %5587 = vrot.lane.b32.xlu0 %v5506, 64
          %v5588 = vpop.permute.xlu0 %5587
          %5589 = vrot.lane.b32.xlu0 %v5507, 64
          %v5590 = vpop.permute.xlu0 %5589
          %5591 = vrot.lane.b32.xlu0 %v5508, 64
          %v5592 = vpop.permute.xlu0 %5591
          %5593 = vrot.lane.b32.xlu0 %v5509, 64
          %v5594 = vpop.permute.xlu0 %5593
          %5595 = vrot.lane.b32.xlu0 %v5510, 64
          %v5596 = vpop.permute.xlu0 %5595
          %5597 = vrot.lane.b32.xlu0 %v5511, 64
          %v5598 = vpop.permute.xlu0 %5597
          %5599 = vrot.lane.b32.xlu0 %v5512, 64
          %v5600 = vpop.permute.xlu0 %5599
          %5617 = vrot.lane.b32.xlu0 %v5513, 64
          %v5618 = vpop.permute.xlu0 %5617
          %5619 = vrot.lane.b32.xlu0 %v5514, 64
          %v5620 = vpop.permute.xlu0 %5619
          %5621 = vrot.lane.b32.xlu0 %v5515, 64
          %v5622 = vpop.permute.xlu0 %5621
          %5623 = vrot.lane.b32.xlu0 %v5516, 64
          %v5624 = vpop.permute.xlu0 %5623
          %5625 = vrot.lane.b32.xlu0 %v5517, 64
          %v5626 = vpop.permute.xlu0 %5625
          %5627 = vrot.lane.b32.xlu0 %v5518, 64
          %v5628 = vpop.permute.xlu0 %5627
          %5629 = vrot.lane.b32.xlu0 %v5519, 64
          %v5630 = vpop.permute.xlu0 %5629
          %5631 = vrot.lane.b32.xlu0 %v5520, 64
          %v5632 = vpop.permute.xlu0 %5631
          %5649 = vrot.lane.b32.xlu0 %v5529, 64
          %v5650 = vpop.permute.xlu0 %5649
          %5651 = vrot.lane.b32.xlu0 %v5530, 64
          %v5652 = vpop.permute.xlu0 %5651
          %5653 = vrot.lane.b32.xlu0 %v5531, 64
          %v5654 = vpop.permute.xlu0 %5653
          %5655 = vrot.lane.b32.xlu0 %v5532, 64
          %v5656 = vpop.permute.xlu0 %5655
          %5657 = vrot.lane.b32.xlu0 %v5533, 64
          %v5658 = vpop.permute.xlu0 %5657
          %5659 = vrot.lane.b32.xlu0 %v5534, 64
          %v5660 = vpop.permute.xlu0 %5659
          %5661 = vrot.lane.b32.xlu0 %v5535, 64
          %v5662 = vpop.permute.xlu0 %5661
          %5663 = vrot.lane.b32.xlu0 %v5536, 64
          %v5664 = vpop.permute.xlu0 %5663
          %v5673 = vsel %vm4858, %v5465, %v5554
          %v5674 = vsel %vm4858, %v5466, %v5556
          %v5675 = vsel %vm4858, %v5467, %v5558
          %v5676 = vsel %vm4858, %v5468, %v5560
          %v5677 = vsel %vm4858, %v5469, %v5562
          %v5678 = vsel %vm4858, %v5470, %v5564
          %v5679 = vsel %vm4858, %v5471, %v5566
          %v5680 = vsel %vm4858, %v5472, %v5568
          %v5681 = vsel %vm4858, %v5497, %v5586
          %v5682 = vsel %vm4858, %v5498, %v5588
          %v5683 = vsel %vm4858, %v5499, %v5590
          %v5684 = vsel %vm4858, %v5500, %v5592
          %v5685 = vsel %vm4858, %v5501, %v5594
          %v5686 = vsel %vm4858, %v5502, %v5596
          %v5687 = vsel %vm4858, %v5503, %v5598
          %v5688 = vsel %vm4858, %v5504, %v5600
          %v5689 = vsel %vm4858, %v5368, %v5618
          %v5690 = vsel %vm4858, %v5369, %v5620
          %v5691 = vsel %vm4858, %v5370, %v5622
          %v5692 = vsel %vm4858, %v5371, %v5624
          %v5693 = vsel %vm4858, %v5372, %v5626
          %v5694 = vsel %vm4858, %v5373, %v5628
          %v5695 = vsel %vm4858, %v5374, %v5630
          %v5696 = vsel %vm4858, %v5375, %v5632
          %v5697 = vsel %vm4858, %v5521, %v5650
          %v5698 = vsel %vm4858, %v5522, %v5652
          %v5699 = vsel %vm4858, %v5523, %v5654
          %v5700 = vsel %vm4858, %v5524, %v5656
          %v5701 = vsel %vm4858, %v5525, %v5658
          %v5702 = vsel %vm4858, %v5526, %v5660
          %v5703 = vsel %vm4858, %v5527, %v5662
          %v5704 = vsel %vm4858, %v5528, %v5664
          %v5705 = vpack.c.bf16 %v5674, %v5673
          %v5706 = vpack.c.bf16 %v5682, %v5681
          %v5707 = vpack.c.bf16 %v5690, %v5689
          %v5708 = vpack.c.bf16 %v5698, %v5697
          %v5709 = vpack.c.bf16 %v5538, %v5537
          %v5710 = vpack.c.bf16 %v5676, %v5675
          %v5711 = vpack.c.bf16 %v5684, %v5683
          %v5712 = vpack.c.bf16 %v5692, %v5691
          %v5713 = vpack.c.bf16 %v5700, %v5699
          %v5714 = vpack.c.bf16 %v5540, %v5539
          %v5715 = vpack.c.bf16 %v5678, %v5677
          %v5716 = vpack.c.bf16 %v5686, %v5685
          %v5717 = vpack.c.bf16 %v5694, %v5693
          %v5718 = vpack.c.bf16 %v5702, %v5701
          %v5719 = vpack.c.bf16 %v5542, %v5541
          %v5720 = vpack.c.bf16 %v5680, %v5679
          %v5721 = vpack.c.bf16 %v5688, %v5687
          %v5722 = vpack.c.bf16 %v5696, %v5695
          %v5723 = vpack.c.bf16 %v5704, %v5703
          %v5724 = vpack.c.bf16 %v5544, %v5543
          %v5726 = vlaneseq
          %v5727 = vshrl.u32 %v5726, 7
          %v5728 = vsub.s32 0, %v5727
          %v5729 = vrot.slane %v5448, %v5728
          %v5803 = vunpack.c.l.b16 %v5376
          %v5804 = vunpack.c.l.b16 %v5377
          %v5805 = vunpack.c.l.b16 %v5378
          %v5806 = vunpack.c.l.b16 %v5379
          %v5807 = vunpack.c.l.b16 %v5380
          %v5808 = vunpack.c.l.b16 %v5381
          %v5809 = vunpack.c.l.b16 %v5382
          %v5810 = vunpack.c.l.b16 %v5383
          %v5811 = vunpack.c.l.b16 %v5384
          %v5812 = vunpack.c.l.b16 %v5385
          %v5813 = vunpack.c.l.b16 %v5386
          %v5814 = vunpack.c.l.b16 %v5387
          %v5815 = vunpack.c.l.b16 %v5388
          %v5816 = vunpack.c.l.b16 %v5389
          %v5817 = vunpack.c.l.b16 %v5390
          %v5818 = vunpack.c.l.b16 %v5391
          %v5819 = vunpack.c.l.b16 %v5392
          %v5820 = vunpack.c.l.b16 %v5393
          %v5821 = vunpack.c.l.b16 %v5394
          %v5822 = vunpack.c.l.b16 %v5395
          %v5823 = vunpack.c.l.b16 %v5396
          %v5824 = vunpack.c.l.b16 %v5397
          %v5825 = vunpack.c.l.b16 %v5398
          %v5826 = vunpack.c.l.b16 %v5399
          %v5827 = vunpack.c.l.b16 %v5400
          %v5828 = vunpack.c.l.b16 %v5401
          %v5829 = vunpack.c.l.b16 %v5402
          %v5830 = vunpack.c.l.b16 %v5403
          %v5831 = vunpack.c.l.b16 %v5404
          %v5832 = vunpack.c.l.b16 %v5405
          %v5833 = vunpack.c.l.b16 %v5406
          %v5834 = vunpack.c.l.b16 %v5407
          %v5835 = vunpack.c.l.b16 %v5408
          %v5836 = vunpack.c.l.b16 %v5409
          %v5837 = vunpack.c.l.b16 %v5410
          %v5838 = vunpack.c.l.b16 %v5411
          %v5839 = vunpack.c.l.b16 %v5412
          %v5840 = vunpack.c.l.b16 %v5413
          %v5841 = vunpack.c.l.b16 %v5414
          %v5842 = vunpack.c.l.b16 %v5415
          %v5843 = vunpack.c.l.b16 %v5416
          %v5844 = vunpack.c.l.b16 %v5417
          %v5845 = vunpack.c.l.b16 %v5418
          %v5846 = vunpack.c.l.b16 %v5419
          %v5847 = vunpack.c.l.b16 %v5420
          %v5848 = vunpack.c.l.b16 %v5421
          %v5849 = vunpack.c.l.b16 %v5422
          %v5850 = vunpack.c.l.b16 %v5423
          %v5851 = vunpack.c.l.b16 %v5424
          %v5852 = vunpack.c.l.b16 %v5425
          %v5853 = vunpack.c.l.b16 %v5426
          %v5854 = vunpack.c.l.b16 %v5427
          %v5855 = vunpack.c.l.b16 %v5428
          %v5856 = vunpack.c.l.b16 %v5429
          %v5857 = vunpack.c.l.b16 %v5430
          %v5858 = vunpack.c.l.b16 %v5431
          %v5859 = vunpack.c.l.b16 %v5432
          %v5860 = vunpack.c.l.b16 %v5433
          %v5861 = vunpack.c.l.b16 %v5434
          %v5862 = vunpack.c.l.b16 %v5435
          %v5863 = vunpack.c.l.b16 %v5436
          %v5864 = vunpack.c.l.b16 %v5437
          %v5865 = vunpack.c.l.b16 %v5438
          %v5866 = vunpack.c.l.b16 %v5439
          %v5867 = vunpack.c.l.b16 %v5440
          %v5868 = vunpack.c.l.b16 %v5441
          %v5869 = vunpack.c.l.b16 %v5442
          %v5870 = vunpack.c.l.b16 %v5443
          %v5871 = vunpack.c.l.b16 %v5444
          %v5872 = vunpack.c.l.b16 %v5445
          %v5873 = vunpack.c.l.b16 %v5446
          %v5874 = vunpack.c.l.b16 %v5447
          %v5875 = vpack.c.b16 %v5804, %v5803
          %v5876 = vpack.c.b16 %v5806, %v5805
          %v5877 = vpack.c.b16 %v5808, %v5807
          %v5878 = vpack.c.b16 %v5810, %v5809
          %v5879 = vpack.c.b16 %v5812, %v5811
          %v5880 = vpack.c.b16 %v5814, %v5813
          %v5881 = vpack.c.b16 %v5816, %v5815
          %v5882 = vpack.c.b16 %v5818, %v5817
          %v5883 = vpack.c.b16 %v5820, %v5819
          %v5884 = vpack.c.b16 %v5822, %v5821
          %v5885 = vpack.c.b16 %v5824, %v5823
          %v5886 = vpack.c.b16 %v5826, %v5825
          %v5887 = vpack.c.b16 %v5828, %v5827
          %v5888 = vpack.c.b16 %v5830, %v5829
          %v5889 = vpack.c.b16 %v5832, %v5831
          %v5890 = vpack.c.b16 %v5834, %v5833
          %v5891 = vpack.c.b16 %v5836, %v5835
          %v5892 = vpack.c.b16 %v5838, %v5837
          %v5893 = vpack.c.b16 %v5840, %v5839
          %v5894 = vpack.c.b16 %v5842, %v5841
          %v5895 = vpack.c.b16 %v5844, %v5843
          %v5896 = vpack.c.b16 %v5846, %v5845
          %v5897 = vpack.c.b16 %v5848, %v5847
          %v5898 = vpack.c.b16 %v5850, %v5849
          %v5899 = vpack.c.b16 %v5852, %v5851
          %v5900 = vpack.c.b16 %v5854, %v5853
          %v5901 = vpack.c.b16 %v5856, %v5855
          %v5902 = vpack.c.b16 %v5858, %v5857
          %v5903 = vpack.c.b16 %v5860, %v5859
          %v5904 = vpack.c.b16 %v5862, %v5861
          %v5905 = vpack.c.b16 %v5864, %v5863
          %v5906 = vpack.c.b16 %v5866, %v5865
          %v5907 = vpack.c.b16 %v5868, %v5867
          %v5908 = vpack.c.b16 %v5870, %v5869
          %v5909 = vpack.c.b16 %v5872, %v5871
          %v5910 = vpack.c.b16 %v5874, %v5873
          %v5948 = vsel %vm4858, %v5709, 0
          %v5951 = vsel %vm4858, %v5714, 0
          %v5954 = vsel %vm4858, %v5719, 0
          %v5957 = vsel %vm4858, %v5724, 0
          %5959 = vmatprep.subr.bf16.mxu0 0
          %5960 = vmatpush1.bf16.msra.mxu0 %v5882
          %5961 = vmatprep.subr.bf16.mxu0 0
          %5962 = vmatpush1.bf16.msra.mxu0 %v5881
          %5963 = vmatprep.subr.bf16.mxu0 0
          %5964 = vmatpush1.bf16.msra.mxu0 %v5880
          %5965 = vmatprep.subr.bf16.mxu0 0
          %5966 = vmatpush1.bf16.msra.mxu0 %v5879
          %5967 = vmatprep.subr.bf16.mxu0 0
          %5968 = vmatpush1.bf16.msra.mxu0 %v5878
          %5969 = vmatprep.subr.bf16.mxu0 0
          %5970 = vmatpush1.bf16.msra.mxu0 %v5877
          %5971 = vmatprep.subr.bf16.mxu0 0
          %5972 = vmatpush1.bf16.msra.mxu0 %v5876
          %5973 = vmatprep.subr.bf16.mxu0 0
          %5974 = vmatpush1.bf16.msra.mxu0 %v5875
          %5975 = vmatprep.subr.bf16.mxu0 0
          %5976 = vmatpush2.bf16.msra.mxu0 %v5890
          %5977 = vmatprep.subr.bf16.mxu0 0
          %5978 = vmatpush2.bf16.msra.mxu0 %v5889
          %5979 = vmatprep.subr.bf16.mxu0 0
          %5980 = vmatpush2.bf16.msra.mxu0 %v5888
          %5981 = vmatprep.subr.bf16.mxu0 0
          %5982 = vmatpush2.bf16.msra.mxu0 %v5887
          %5983 = vmatprep.subr.bf16.mxu0 0
          %5984 = vmatpush2.bf16.msra.mxu0 %v5886
          %5985 = vmatprep.subr.bf16.mxu0 0
          %5986 = vmatpush2.bf16.msra.mxu0 %v5885
          %5987 = vmatprep.subr.bf16.mxu0 0
          %5988 = vmatpush2.bf16.msra.mxu0 %v5884
          %5989 = vmatprep.subr.bf16.mxu0 0
          %5990 = vmatpush2.bf16.msra.mxu0 %v5883
          %5991 = vmatprep.mubr.bf16.mxu0 %v5706
          %5992 = vmatmul.mubr.bf16.gmra.mxu0 %v5705
          %v5993 = vpop.f32.mrf.mxu0
          %v5994 = vadd.f32 %v5729, %v5993
          %v5995 = vpop.f32.mrf.mxu0
          %v5996 = vpop.f32.mrf.mxu0
          %v5997 = vadd.f32 %v5729, %v5996
          %v5998 = vpop.f32.mrf.mxu0
          %5999 = vmatprep.mubr.bf16.mxu0 %v5711
          %6000 = vmatmul.mubr.bf16.gmra.mxu0 %v5710
          %v6001 = vpop.f32.mrf.mxu0
          %v6002 = vadd.f32 %v5729, %v6001
          %v6003 = vpop.f32.mrf.mxu0
          %v6004 = vpop.f32.mrf.mxu0
          %v6005 = vadd.f32 %v5729, %v6004
          %v6006 = vpop.f32.mrf.mxu0
          %6007 = vmatprep.mubr.bf16.mxu0 %v5716
          %6008 = vmatmul.mubr.bf16.gmra.mxu0 %v5715
          %v6009 = vpop.f32.mrf.mxu0
          %v6010 = vadd.f32 %v5729, %v6009
          %v6011 = vpop.f32.mrf.mxu0
          %v6012 = vpop.f32.mrf.mxu0
          %v6013 = vadd.f32 %v5729, %v6012
          %v6014 = vpop.f32.mrf.mxu0
          %6015 = vmatprep.mubr.bf16.mxu0 %v5721
          %6016 = vmatmul.mubr.bf16.gmra.mxu0 %v5720
          %v6017 = vpop.f32.mrf.mxu0
          %v6018 = vadd.f32 %v5729, %v6017
          %v6019 = vpop.f32.mrf.mxu0
          %v6020 = vpop.f32.mrf.mxu0
          %v6021 = vadd.f32 %v5729, %v6020
          %v6022 = vpop.f32.mrf.mxu0
          %6023 = vdwg.mxu0
          %6024 = vmatprep.subr.bf16.mxu0 0
          %6025 = vmatpush1.bf16.msra.mxu0 %v5898
          %6026 = vmatprep.subr.bf16.mxu0 0
          %6027 = vmatpush1.bf16.msra.mxu0 %v5897
          %6028 = vmatprep.subr.bf16.mxu0 0
          %6029 = vmatpush1.bf16.msra.mxu0 %v5896
          %6030 = vmatprep.subr.bf16.mxu0 0
          %6031 = vmatpush1.bf16.msra.mxu0 %v5895
          %6032 = vmatprep.subr.bf16.mxu0 0
          %6033 = vmatpush1.bf16.msra.mxu0 %v5894
          %6034 = vmatprep.subr.bf16.mxu0 0
          %6035 = vmatpush1.bf16.msra.mxu0 %v5893
          %6036 = vmatprep.subr.bf16.mxu0 0
          %6037 = vmatpush1.bf16.msra.mxu0 %v5892
          %6038 = vmatprep.subr.bf16.mxu0 0
          %6039 = vmatpush1.bf16.msra.mxu0 %v5891
          %6040 = vmatprep.subr.bf16.mxu0 0
          %6041 = vmatpush2.bf16.msra.mxu0 %v5906
          %6042 = vmatprep.subr.bf16.mxu0 0
          %6043 = vmatpush2.bf16.msra.mxu0 %v5905
          %6044 = vmatprep.subr.bf16.mxu0 0
          %6045 = vmatpush2.bf16.msra.mxu0 %v5904
          %6046 = vmatprep.subr.bf16.mxu0 0
          %6047 = vmatpush2.bf16.msra.mxu0 %v5903
          %6048 = vmatprep.subr.bf16.mxu0 0
          %6049 = vmatpush2.bf16.msra.mxu0 %v5902
          %6050 = vmatprep.subr.bf16.mxu0 0
          %6051 = vmatpush2.bf16.msra.mxu0 %v5901
          %6052 = vmatprep.subr.bf16.mxu0 0
          %6053 = vmatpush2.bf16.msra.mxu0 %v5900
          %6054 = vmatprep.subr.bf16.mxu0 0
          %6055 = vmatpush2.bf16.msra.mxu0 %v5899
          %6056 = vmatprep.mubr.bf16.mxu0 %v5708
          %6057 = vmatmul.mubr.bf16.gmra.mxu0 %v5707
          %v6058 = vpop.f32.mrf.mxu0
          %v6059 = vadd.f32 %v5994, %v6058
          %v6060 = vpop.f32.mrf.mxu0
          %v6061 = vpop.f32.mrf.mxu0
          %v6062 = vadd.f32 %v5997, %v6061
          %v6063 = vpop.f32.mrf.mxu0
          %6064 = vmatprep.mubr.bf16.mxu0 %v5713
          %6065 = vmatmul.mubr.bf16.gmra.mxu0 %v5712
          %v6066 = vpop.f32.mrf.mxu0
          %v6067 = vadd.f32 %v6002, %v6066
          %v6068 = vpop.f32.mrf.mxu0
          %v6069 = vpop.f32.mrf.mxu0
          %v6070 = vadd.f32 %v6005, %v6069
          %v6071 = vpop.f32.mrf.mxu0
          %6072 = vmatprep.mubr.bf16.mxu0 %v5718
          %6073 = vmatmul.mubr.bf16.gmra.mxu0 %v5717
          %v6074 = vpop.f32.mrf.mxu0
          %v6075 = vadd.f32 %v6010, %v6074
          %v6076 = vpop.f32.mrf.mxu0
          %v6077 = vpop.f32.mrf.mxu0
          %v6078 = vadd.f32 %v6013, %v6077
          %v6079 = vpop.f32.mrf.mxu0
          %6080 = vmatprep.mubr.bf16.mxu0 %v5723
          %6081 = vmatmul.mubr.bf16.gmra.mxu0 %v5722
          %v6082 = vpop.f32.mrf.mxu0
          %v6083 = vadd.f32 %v6018, %v6082
          %v6084 = vpop.f32.mrf.mxu0
          %v6085 = vpop.f32.mrf.mxu0
          %v6086 = vadd.f32 %v6021, %v6085
          %v6087 = vpop.f32.mrf.mxu0
          %6088 = vdwg.mxu0
          %6089 = vmatprep.subr.bf16.mxu0 0
          %6090 = vmatpush1.bf16.msra.mxu0 0
          %6091 = vmatprep.subr.bf16.mxu0 0
          %6092 = vmatpush1.bf16.msra.mxu0 0
          %6093 = vmatprep.subr.bf16.mxu0 0
          %6094 = vmatpush1.bf16.msra.mxu0 0
          %6095 = vmatprep.subr.bf16.mxu0 0
          %6096 = vmatpush1.bf16.msra.mxu0 0
          %6097 = vmatprep.subr.bf16.mxu0 0
          %6098 = vmatpush1.bf16.msra.mxu0 %v5910
          %6099 = vmatprep.subr.bf16.mxu0 0
          %6100 = vmatpush1.bf16.msra.mxu0 %v5909
          %6101 = vmatprep.subr.bf16.mxu0 0
          %6102 = vmatpush1.bf16.msra.mxu0 %v5908
          %6103 = vmatprep.subr.bf16.mxu0 0
          %6104 = vmatpush1.bf16.msra.mxu0 %v5907
          %6105 = vmatprep.subr.bf16.mxu0 0
          %6106 = vmatpush2.bf16.msra.mxu0 0
          %6107 = vmatprep.subr.bf16.mxu0 0
          %6108 = vmatpush2.bf16.msra.mxu0 0
          %6109 = vmatprep.subr.bf16.mxu0 0
          %6110 = vmatpush2.bf16.msra.mxu0 0
          %6111 = vmatprep.subr.bf16.mxu0 0
          %6112 = vmatpush2.bf16.msra.mxu0 0
          %6113 = vmatprep.subr.bf16.mxu0 0
          %6114 = vmatpush2.bf16.msra.mxu0 0
          %6115 = vmatprep.subr.bf16.mxu0 0
          %6116 = vmatpush2.bf16.msra.mxu0 0
          %6117 = vmatprep.subr.bf16.mxu0 0
          %6118 = vmatpush2.bf16.msra.mxu0 0
          %6119 = vmatprep.subr.bf16.mxu0 0
          %6120 = vmatpush2.bf16.msra.mxu0 0
          %6121 = vmatprep.mubr.bf16.mxu0 0
          %6122 = vmatmul.mubr.bf16.gmra.mxu0 %v5948
          %v6123 = vpop.f32.mrf.mxu0
          %v6124 = vadd.f32 %v6059, %v6123
          %v6125 = vpop.f32.mrf.mxu0
          %v6126 = vpop.f32.mrf.mxu0
          %v6127 = vadd.f32 %v6062, %v6126
          %v6128 = vpop.f32.mrf.mxu0
          %6129 = vmatprep.mubr.bf16.mxu0 0
          %6130 = vmatmul.mubr.bf16.gmra.mxu0 %v5951
          %v6131 = vpop.f32.mrf.mxu0
          %v6132 = vadd.f32 %v6067, %v6131
          %v6133 = vpop.f32.mrf.mxu0
          %v6134 = vpop.f32.mrf.mxu0
          %v6135 = vadd.f32 %v6070, %v6134
          %v6136 = vpop.f32.mrf.mxu0
          %6137 = vmatprep.mubr.bf16.mxu0 0
          %6138 = vmatmul.mubr.bf16.gmra.mxu0 %v5954
          %v6139 = vpop.f32.mrf.mxu0
          %v6140 = vadd.f32 %v6075, %v6139
          %v6141 = vpop.f32.mrf.mxu0
          %v6142 = vpop.f32.mrf.mxu0
          %v6143 = vadd.f32 %v6078, %v6142
          %v6144 = vpop.f32.mrf.mxu0
          %6145 = vmatprep.mubr.bf16.mxu0 0
          %6146 = vmatmul.mubr.bf16.gmra.mxu0 %v5957
          %v6147 = vpop.f32.mrf.mxu0
          %v6148 = vadd.f32 %v6083, %v6147
          %v6149 = vpop.f32.mrf.mxu0
          %v6150 = vpop.f32.mrf.mxu0
          %v6151 = vadd.f32 %v6086, %v6150
          %v6152 = vpop.f32.mrf.mxu0
          %6153 = vdwg.mxu0
          %6154 = vst.msk [vmem:[%s981] sm:$0xff] %vm4858, %v6124
          %6155 = vst.msk [vmem:[%s981 + $0x8] sm:$0xff] %vm4858, %v6127
          %6156 = vst.msk [vmem:[%s981 + $0x10] sm:$0xff] %vm4858, %v6132
          %6157 = vst.msk [vmem:[%s981 + $0x18] sm:$0xff] %vm4858, %v6135
          %6158 = vst.msk [vmem:[%s981 + $0x20] sm:$0xff] %vm4858, %v6140
          %6159 = vst.msk [vmem:[%s981 + $0x28] sm:$0xff] %vm4858, %v6143
          %6160 = vst.msk [vmem:[%s981 + $0x30] sm:$0xff] %vm4858, %v6148
          %6161 = vst.msk [vmem:[%s981 + $0x38] sm:$0xff] %vm4858, %v6151
        $region159: #{_lambda_.1} parent=83 // pred_fallthru
          _
        %p6162 = scmp.lt.s32.totalorder %s49, 1
        %s6163 = scalar_select %p6162, %s49, 1
        %s6164 = smul.addr %s6163, 8
        %s6165 = smul.addr %s6164, 8
        %s6166 = scalar_lea.vmem %s16, %s6165
        // Predicated region
        $region160: #{_lambda_.1} parent=83 // pred_check
          %p6167 = pneg %p466
        $region161: #{_lambda_.1} parent=83 // pred_check_branch
          %6169 = sbr.rel (%p6167) target = $region163
        $region162: #{_lambda_.1} parent=83 // pred_region
          _
        $region163: #{_lambda_.1} parent=83 // pred_fallthru
          _
      $region84: #{_lambda_.1} parent=5 // pred_fallthru
        _
      %p6170 = scmp.le.s32.totalorder 2, %s40
      // Predicated region
      $region164: #{_lambda_.1} parent=5 // pred_check
        %p6171 = pneg %p6170
      $region165: #{_lambda_.1} parent=5 // pred_check_branch
        %6173 = sbr.rel (%p6171) target = $region167
      $region166: #{_lambda_.1} parent=5 // pred_region
        %s6174 = ssub.s32 %s40, 2
        // Predicated region
        $region168: #{_lambda_.1} parent=166 // pred_check
          %p6175 = pneg %p472
        $region169: #{_lambda_.1} parent=166 // pred_check_branch
          %6177 = sbr.rel (%p6175) target = $region171
        $region170: #{_lambda_.1} parent=166 // pred_region
          %p6178 = scmp.lt.s32.totalorder %s51, 1
          %s6179 = scalar_select %p6178, %s51, 1
          %s6180 = smul.addr %s6179, 8
          %s6181 = smul.addr %s6180, 8
          %s6182 = scalar_lea.vmem %s16, %s6181
        $region171: #{_lambda_.1} parent=166 // pred_fallthru
          _
      $region167: #{_lambda_.1} parent=5 // pred_fallthru
        _
    $region6: #{_lambda_.1} parent=1 // loop_footer
      %s44 = sadd.s32 1, %s40
    $region7: #{_lambda_.1} parent=1 // loop_footer_branch
      %39 = sbr.rel target = $region3
    $region8: #{_lambda_.1} parent=1 // loop_exit
      _
    %6183 = vsyncpa [#allocation5], 1
    %s6184 = scalar_lea.sflag [#allocation5], 1
    %6185 = vsyncpa %s6184, 1
    %6186 = vsyncpa [#allocation7], 1
    %6187 = vsyncpa [#allocation10], 1
    %s6188 = scalar_lea.sflag [#allocation10], 1
    %6189 = vsyncpa %s6188, 1
    %6190 = vsyncpa [#allocation13], 1
    %s6191 = scalar_lea.sflag [#allocation13], 1
    %6192 = vsyncpa %s6191, 1
    %6193 = vsyncpa [#allocation16], 1
    %s6194 = scalar_lea.sflag [#allocation16], 1
    %6195 = vsyncpa %s6194, 1
    %6196 = vsyncpa [#allocation19], 1
    %s6197 = scalar_lea.sflag [#allocation19], 1
    %6198 = vsyncpa %s6197, 1
    %6199 = vsyncpa [#allocation22], 1
    %s6200 = scalar_lea.sflag [#allocation22], 1
    %6201 = vsyncpa %s6200, 1
    %6202 = vsyncpa [#allocation25], 1

</llo_original>
